<compile_context>
chip_gen: v7x
topology: tpu7x:2x2x1
jax: 0.10.0
libtpu: 0.0.40
codegen_flags: <defaults>
</compile_context>

<pallas_src>
import functools

import jax
import jax.numpy as jnp
from jax.experimental import pallas as pl
from jax.experimental.pallas import tpu as pltpu


# ----------------------------- kernel ----------------------------------------


def lstm_block_kernel(
    x_ref,       # (T*B, D)   raw input, time-major flattened (row = t*B + b)
    w_in_ref,    # (D, 8H)    pre-folded input->gates weight  [fwd 4H | bwd 4H]
    b_in_ref,    # (1, 8H)    pre-folded combined bias        [fwd 4H | bwd 4H]
    whh_f_ref,   # (H, 4H)    forward  hidden->gates
    whh_b_ref,   # (H, 4H)    backward hidden->gates
    h_out_ref,   # (B, 2H)    [h_fwd_final | h_bwd_final]
    *,
    batch,
    seq_len,
):
    B, T = batch, seq_len
    H = whh_f_ref.shape[0]
    G = 4 * H

    # (1) time-batched input projection for both directions: one MXU matmul,
    #     hoisted out of the recurrence.  Kept as a value (~16 vregs here).
    xproj = (
        jnp.dot(x_ref[...], w_in_ref[...], preferred_element_type=jnp.float32)
        + b_in_ref[...]
    )  # (T*B, 8H)

    whh_f = whh_f_ref[...]
    whh_b = whh_b_ref[...]

    def lstm_update(gates, c):
        # gate slices are lane-aligned because H % 128 == 0
        i = jax.nn.sigmoid(gates[:, 0 * H : 1 * H])
        f = jax.nn.sigmoid(gates[:, 1 * H : 2 * H])
        g = jnp.tanh(gates[:, 2 * H : 3 * H])
        o = jax.nn.sigmoid(gates[:, 3 * H : 4 * H])
        c_new = f * c + i * g
        h_new = o * jnp.tanh(c_new)
        return h_new, c_new

    h_f = jnp.zeros((B, H), jnp.float32)
    c_f = jnp.zeros((B, H), jnp.float32)
    h_b = jnp.zeros((B, H), jnp.float32)
    c_b = jnp.zeros((B, H), jnp.float32)

    # (2) interleaved fwd/bwd recurrence, fully unrolled with STATIC slice
    #     indices (T, B are Python ints at trace time).  Forward consumes
    #     timestep t, backward consumes timestep T-1-t; the chains are
    #     independent so their matmul/EUP latencies overlap.
    for t in range(T):
        xg_f = xproj[t * B : (t + 1) * B, :G]
        xg_b = xproj[(T - 1 - t) * B : (T - t) * B, G:]
        g_f = xg_f + jnp.dot(h_f, whh_f, preferred_element_type=jnp.float32)
        g_b = xg_b + jnp.dot(h_b, whh_b, preferred_element_type=jnp.float32)
        h_f, c_f = lstm_update(g_f, c_f)
        h_b, c_b = lstm_update(g_b, c_b)

    # (3) single lane-dense store of the concatenated final hidden states
    h_out_ref[...] = jnp.concatenate([h_f, h_b], axis=-1)


# ----------------------------- wrapper ----------------------------------------


def fold_params(params):
    """Input-independent parameter prep (run ONCE, not per forward call).

    Folds the dim-reduction Linear into the LSTM input projections:
        (x @ Wr + br) @ Wih + b  ==  x @ (Wr @ Wih) + (br @ Wih + b)
    Both directions are stacked along the output axis so the kernel does a
    single time-batched input-projection matmul.
    """
    wih = jnp.concatenate([params["wih_f"], params["wih_b"]], axis=1)  # (H, 8H)
    bias = jnp.concatenate([params["b_f"], params["b_b"]], axis=1)     # (1, 8H)
    return {
        "w_in": params["w_red"] @ wih,                                 # (D, 8H)
        "b_in": bias + params["b_red"] @ wih,                          # (1, 8H)
        "whh_f": params["whh_f"],                                      # (H, 4H)
        "whh_b": params["whh_b"],                                      # (H, 4H)
    }


@jax.jit
def lstm_block_forward(x, folded):
    """x: (B, T, D) float32.  Returns (B, 2*H) float32 (final hidden states)."""
    B, T, D = x.shape
    H = folded["whh_f"].shape[0]
    assert H % 128 == 0, "gate slices require H to be a multiple of 128"

    # rearrange 'b t d -> (t b) d' once in the wrapper (tiny array) so each
    # timestep occupies a contiguous block of rows (row = t*B + b).
    x_tm = jnp.transpose(x, (1, 0, 2)).reshape(T * B, D)

    vmem = pl.BlockSpec(memory_space=pltpu.MemorySpace.VMEM)
    kernel = functools.partial(lstm_block_kernel, batch=B, seq_len=T)

    # Total VMEM footprint (inputs + weights + output) is ~1 MiB at these
    # sizes -> grid-free call; everything lives in VMEM for the whole kernel.
    return pl.pallas_call(
        kernel,
        out_shape=jax.ShapeDtypeStruct((B, 2 * H), jnp.float32),
        in_specs=[vmem] * 5,
        out_specs=vmem,
    )(x_tm, folded["w_in"], folded["b_in"], folded["whh_f"], folded["whh_b"])


# ----------------------------- reference --------------------------------------


def ref_forward(x, params):
    """Pure-JAX reference mirroring the PyTorch module (no fold)."""
    B, T, D = x.shape
    H = params["w_red"].shape[1]
    y = x.reshape(B * T, D) @ params["w_red"] + params["b_red"]
    xs = y.reshape(B, T, H).transpose(1, 0, 2)  # (T, B, H)

    def run(time_indices, wih, whh, bias):
        h = jnp.zeros((B, H), jnp.float32)
        c = jnp.zeros((B, H), jnp.float32)
        for t in time_indices:
            gates = xs[t] @ wih + h @ whh + bias
            i = jax.nn.sigmoid(gates[:, 0 * H : 1 * H])
            f = jax.nn.sigmoid(gates[:, 1 * H : 2 * H])
            g = jnp.tanh(gates[:, 2 * H : 3 * H])
            o = jax.nn.sigmoid(gates[:, 3 * H : 4 * H])
            c = f * c + i * g
            h = o * jnp.tanh(c)
        return h

    h_f = run(range(T), params["wih_f"], params["whh_f"], params["b_f"])
    h_b = run(range(T - 1, -1, -1), params["wih_b"], params["whh_b"], params["b_b"])
    return jnp.concatenate([h_f, h_b], axis=-1)


# ----------------------------- main --------------------------------------------


def init_params(key, input_size, hidden_size):
    ks = jax.random.split(key, 8)
    s_lin = 1.0 / jnp.sqrt(jnp.float32(input_size))
    s_lstm = 1.0 / jnp.sqrt(jnp.float32(hidden_size))
    u = lambda k, shape, s: jax.random.uniform(k, shape, jnp.float32, -s, s)
    H = hidden_size
    return {
        # Linear: stored transposed as (D, H); bias (1, H)
        "w_red": u(ks[0], (input_size, H), s_lin),
        "b_red": u(ks[1], (1, H), s_lin),
        # LSTM weights stored transposed as (H, 4H); combined bias (1, 4H)
        "wih_f": u(ks[2], (H, 4 * H), s_lstm),
        "whh_f": u(ks[3], (H, 4 * H), s_lstm),
        "b_f": u(ks[4], (1, 4 * H), s_lstm),
        "wih_b": u(ks[5], (H, 4 * H), s_lstm),
        "whh_b": u(ks[6], (H, 4 * H), s_lstm),
        "b_b": u(ks[7], (1, 4 * H), s_lstm),
    }


if __name__ == "__main__":
    B, T, D, H = 2, 8, 64, 128  # batch, seq, input_size, hidden_size

    key = jax.random.PRNGKey(0)
    k_x, k_p = jax.random.split(key)
    x = jax.random.normal(k_x, (B, T, D), jnp.float32)
    params = init_params(k_p, D, H)

    folded = jax.tree.map(jax.block_until_ready, fold_params(params))  # one-time prep

    out = jax.block_until_ready(lstm_block_forward(x, folded))
    ref = jax.block_until_ready(ref_forward(x, params))

    assert out.shape == (B, 2 * H), out.shape
    # Folding (x@(Wr@Wih)) changes rounding vs the reference's two-step math;
    # slightly relaxed tolerance guards against flakiness at larger shapes.
    assert jnp.allclose(out, ref, atol=2e-4, rtol=2e-4), float(
        jnp.max(jnp.abs(out - ref))
    )
    print("KERNEL_OK")
</pallas_src>

<mosaic_0001>
module attributes {stable_mosaic.version = 11 : i64} {
  func.func @lstm_block_kernel(%arg0: memref<16x64xf32, #tpu.memory_space<vmem>>, %arg1: memref<64x1024xf32, #tpu.memory_space<vmem>>, %arg2: memref<1x1024xf32, #tpu.memory_space<vmem>>, %arg3: memref<128x512xf32, #tpu.memory_space<vmem>>, %arg4: memref<128x512xf32, #tpu.memory_space<vmem>>, %arg5: memref<2x256xf32, #tpu.memory_space<vmem>>) attributes {dimension_semantics = [], scalar_prefetch = 0 : i64, scratch_operands = 0 : i64, tpu.core_type = #tpu.core_type<tc>} {
    %c0 = arith.constant 0 : index
    %c0_0 = arith.constant 0 : index
    %0 = vector.load %arg0[%c0, %c0_0] : memref<16x64xf32, #tpu.memory_space<vmem>>, vector<16x64xf32>
    %c0_1 = arith.constant 0 : index
    %c0_2 = arith.constant 0 : index
    %1 = vector.load %arg1[%c0_1, %c0_2] : memref<64x1024xf32, #tpu.memory_space<vmem>>, vector<64x1024xf32>
    %cst = arith.constant dense<0.000000e+00> : vector<16x1024xf32>
    %2 = tpu.matmul %0, %1, %cst {dimension_numbers = #tpu.dot_dimension_numbers<[1], [0], [0], [1], [0, 0, 1, 1], [], []>} : vector<16x64xf32>, vector<64x1024xf32>, vector<16x1024xf32> -> vector<16x1024xf32>
    %c0_3 = arith.constant 0 : index
    %c0_4 = arith.constant 0 : index
    %3 = vector.load %arg2[%c0_3, %c0_4] : memref<1x1024xf32, #tpu.memory_space<vmem>>, vector<1x1024xf32>
    %4 = vector.broadcast %3 : vector<1x1024xf32> to vector<16x1024xf32>
    %5 = arith.addf %2, %4 : vector<16x1024xf32>
    %c0_5 = arith.constant 0 : index
    %c0_6 = arith.constant 0 : index
    %6 = vector.load %arg3[%c0_5, %c0_6] : memref<128x512xf32, #tpu.memory_space<vmem>>, vector<128x512xf32>
    %c0_7 = arith.constant 0 : index
    %c0_8 = arith.constant 0 : index
    %7 = vector.load %arg4[%c0_7, %c0_8] : memref<128x512xf32, #tpu.memory_space<vmem>>, vector<128x512xf32>
    %cst_9 = arith.constant 0.000000e+00 : f32
    %8 = vector.broadcast %cst_9 : f32 to vector<2x128xf32>
    %cst_10 = arith.constant 0.000000e+00 : f32
    %9 = vector.broadcast %cst_10 : f32 to vector<2x128xf32>
    %cst_11 = arith.constant 0.000000e+00 : f32
    %10 = vector.broadcast %cst_11 : f32 to vector<2x128xf32>
    %cst_12 = arith.constant 0.000000e+00 : f32
    %11 = vector.broadcast %cst_12 : f32 to vector<2x128xf32>
    %12 = vector.extract_strided_slice %5 {offsets = [0, 0], sizes = [2, 512], strides = [1, 1]} : vector<16x1024xf32> to vector<2x512xf32>
    %13 = vector.extract_strided_slice %5 {offsets = [14, 512], sizes = [2, 512], strides = [1, 1]} : vector<16x1024xf32> to vector<2x512xf32>
    %cst_13 = arith.constant dense<0.000000e+00> : vector<2x512xf32>
    %14 = tpu.matmul %8, %6, %cst_13 {dimension_numbers = #tpu.dot_dimension_numbers<[1], [0], [0], [1], [0, 0, 1, 1], [], []>} : vector<2x128xf32>, vector<128x512xf32>, vector<2x512xf32> -> vector<2x512xf32>
    %15 = arith.addf %12, %14 : vector<2x512xf32>
    %cst_14 = arith.constant dense<0.000000e+00> : vector<2x512xf32>
    %16 = tpu.matmul %10, %7, %cst_14 {dimension_numbers = #tpu.dot_dimension_numbers<[1], [0], [0], [1], [0, 0, 1, 1], [], []>} : vector<2x128xf32>, vector<128x512xf32>, vector<2x512xf32> -> vector<2x512xf32>
    %17 = arith.addf %13, %16 : vector<2x512xf32>
    %18 = vector.extract_strided_slice %15 {offsets = [0, 0], sizes = [2, 128], strides = [1, 1]} : vector<2x512xf32> to vector<2x128xf32>
    %19 = arith.negf %18 : vector<2x128xf32>
    %20 = math.exp %19 : vector<2x128xf32>
    %cst_15 = arith.constant 1.000000e+00 : f32
    %21 = vector.broadcast %cst_15 : f32 to vector<2x128xf32>
    %22 = arith.addf %21, %20 : vector<2x128xf32>
    %23 = arith.divf %21, %22 : vector<2x128xf32>
    %24 = vector.extract_strided_slice %15 {offsets = [0, 128], sizes = [2, 128], strides = [1, 1]} : vector<2x512xf32> to vector<2x128xf32>
    %25 = arith.negf %24 : vector<2x128xf32>
    %26 = math.exp %25 : vector<2x128xf32>
    %cst_16 = arith.constant 1.000000e+00 : f32
    %27 = vector.broadcast %cst_16 : f32 to vector<2x128xf32>
    %28 = arith.addf %27, %26 : vector<2x128xf32>
    %29 = arith.divf %27, %28 : vector<2x128xf32>
    %30 = vector.extract_strided_slice %15 {offsets = [0, 256], sizes = [2, 128], strides = [1, 1]} : vector<2x512xf32> to vector<2x128xf32>
    %31 = math.tanh %30 : vector<2x128xf32>
    %32 = vector.extract_strided_slice %15 {offsets = [0, 384], sizes = [2, 128], strides = [1, 1]} : vector<2x512xf32> to vector<2x128xf32>
    %33 = arith.negf %32 : vector<2x128xf32>
    %34 = math.exp %33 : vector<2x128xf32>
    %cst_17 = arith.constant 1.000000e+00 : f32
    %35 = vector.broadcast %cst_17 : f32 to vector<2x128xf32>
    %36 = arith.addf %35, %34 : vector<2x128xf32>
    %37 = arith.divf %35, %36 : vector<2x128xf32>
    %38 = arith.mulf %29, %9 : vector<2x128xf32>
    %39 = arith.mulf %23, %31 : vector<2x128xf32>
    %40 = arith.addf %38, %39 : vector<2x128xf32>
    %41 = math.tanh %40 : vector<2x128xf32>
    %42 = arith.mulf %37, %41 : vector<2x128xf32>
    %43 = vector.extract_strided_slice %17 {offsets = [0, 0], sizes = [2, 128], strides = [1, 1]} : vector<2x512xf32> to vector<2x128xf32>
    %44 = arith.negf %43 : vector<2x128xf32>
    %45 = math.exp %44 : vector<2x128xf32>
    %cst_18 = arith.constant 1.000000e+00 : f32
    %46 = vector.broadcast %cst_18 : f32 to vector<2x128xf32>
    %47 = arith.addf %46, %45 : vector<2x128xf32>
    %48 = arith.divf %46, %47 : vector<2x128xf32>
    %49 = vector.extract_strided_slice %17 {offsets = [0, 128], sizes = [2, 128], strides = [1, 1]} : vector<2x512xf32> to vector<2x128xf32>
    %50 = arith.negf %49 : vector<2x128xf32>
    %51 = math.exp %50 : vector<2x128xf32>
    %cst_19 = arith.constant 1.000000e+00 : f32
    %52 = vector.broadcast %cst_19 : f32 to vector<2x128xf32>
    %53 = arith.addf %52, %51 : vector<2x128xf32>
    %54 = arith.divf %52, %53 : vector<2x128xf32>
    %55 = vector.extract_strided_slice %17 {offsets = [0, 256], sizes = [2, 128], strides = [1, 1]} : vector<2x512xf32> to vector<2x128xf32>
    %56 = math.tanh %55 : vector<2x128xf32>
    %57 = vector.extract_strided_slice %17 {offsets = [0, 384], sizes = [2, 128], strides = [1, 1]} : vector<2x512xf32> to vector<2x128xf32>
    %58 = arith.negf %57 : vector<2x128xf32>
    %59 = math.exp %58 : vector<2x128xf32>
    %cst_20 = arith.constant 1.000000e+00 : f32
    %60 = vector.broadcast %cst_20 : f32 to vector<2x128xf32>
    %61 = arith.addf %60, %59 : vector<2x128xf32>
    %62 = arith.divf %60, %61 : vector<2x128xf32>
    %63 = arith.mulf %54, %11 : vector<2x128xf32>
    %64 = arith.mulf %48, %56 : vector<2x128xf32>
    %65 = arith.addf %63, %64 : vector<2x128xf32>
    %66 = math.tanh %65 : vector<2x128xf32>
    %67 = arith.mulf %62, %66 : vector<2x128xf32>
    %68 = vector.extract_strided_slice %5 {offsets = [2, 0], sizes = [2, 512], strides = [1, 1]} : vector<16x1024xf32> to vector<2x512xf32>
    %69 = vector.extract_strided_slice %5 {offsets = [12, 512], sizes = [2, 512], strides = [1, 1]} : vector<16x1024xf32> to vector<2x512xf32>
    %cst_21 = arith.constant dense<0.000000e+00> : vector<2x512xf32>
    %70 = tpu.matmul %42, %6, %cst_21 {dimension_numbers = #tpu.dot_dimension_numbers<[1], [0], [0], [1], [0, 0, 1, 1], [], []>} : vector<2x128xf32>, vector<128x512xf32>, vector<2x512xf32> -> vector<2x512xf32>
    %71 = arith.addf %68, %70 : vector<2x512xf32>
    %cst_22 = arith.constant dense<0.000000e+00> : vector<2x512xf32>
    %72 = tpu.matmul %67, %7, %cst_22 {dimension_numbers = #tpu.dot_dimension_numbers<[1], [0], [0], [1], [0, 0, 1, 1], [], []>} : vector<2x128xf32>, vector<128x512xf32>, vector<2x512xf32> -> vector<2x512xf32>
    %73 = arith.addf %69, %72 : vector<2x512xf32>
    %74 = vector.extract_strided_slice %71 {offsets = [0, 0], sizes = [2, 128], strides = [1, 1]} : vector<2x512xf32> to vector<2x128xf32>
    %75 = arith.negf %74 : vector<2x128xf32>
    %76 = math.exp %75 : vector<2x128xf32>
    %cst_23 = arith.constant 1.000000e+00 : f32
    %77 = vector.broadcast %cst_23 : f32 to vector<2x128xf32>
    %78 = arith.addf %77, %76 : vector<2x128xf32>
    %79 = arith.divf %77, %78 : vector<2x128xf32>
    %80 = vector.extract_strided_slice %71 {offsets = [0, 128], sizes = [2, 128], strides = [1, 1]} : vector<2x512xf32> to vector<2x128xf32>
    %81 = arith.negf %80 : vector<2x128xf32>
    %82 = math.exp %81 : vector<2x128xf32>
    %cst_24 = arith.constant 1.000000e+00 : f32
    %83 = vector.broadcast %cst_24 : f32 to vector<2x128xf32>
    %84 = arith.addf %83, %82 : vector<2x128xf32>
    %85 = arith.divf %83, %84 : vector<2x128xf32>
    %86 = vector.extract_strided_slice %71 {offsets = [0, 256], sizes = [2, 128], strides = [1, 1]} : vector<2x512xf32> to vector<2x128xf32>
    %87 = math.tanh %86 : vector<2x128xf32>
    %88 = vector.extract_strided_slice %71 {offsets = [0, 384], sizes = [2, 128], strides = [1, 1]} : vector<2x512xf32> to vector<2x128xf32>
    %89 = arith.negf %88 : vector<2x128xf32>
    %90 = math.exp %89 : vector<2x128xf32>
    %cst_25 = arith.constant 1.000000e+00 : f32
    %91 = vector.broadcast %cst_25 : f32 to vector<2x128xf32>
    %92 = arith.addf %91, %90 : vector<2x128xf32>
    %93 = arith.divf %91, %92 : vector<2x128xf32>
    %94 = arith.mulf %85, %40 : vector<2x128xf32>
    %95 = arith.mulf %79, %87 : vector<2x128xf32>
    %96 = arith.addf %94, %95 : vector<2x128xf32>
    %97 = math.tanh %96 : vector<2x128xf32>
    %98 = arith.mulf %93, %97 : vector<2x128xf32>
    %99 = vector.extract_strided_slice %73 {offsets = [0, 0], sizes = [2, 128], strides = [1, 1]} : vector<2x512xf32> to vector<2x128xf32>
    %100 = arith.negf %99 : vector<2x128xf32>
    %101 = math.exp %100 : vector<2x128xf32>
    %cst_26 = arith.constant 1.000000e+00 : f32
    %102 = vector.broadcast %cst_26 : f32 to vector<2x128xf32>
    %103 = arith.addf %102, %101 : vector<2x128xf32>
    %104 = arith.divf %102, %103 : vector<2x128xf32>
    %105 = vector.extract_strided_slice %73 {offsets = [0, 128], sizes = [2, 128], strides = [1, 1]} : vector<2x512xf32> to vector<2x128xf32>
    %106 = arith.negf %105 : vector<2x128xf32>
    %107 = math.exp %106 : vector<2x128xf32>
    %cst_27 = arith.constant 1.000000e+00 : f32
    %108 = vector.broadcast %cst_27 : f32 to vector<2x128xf32>
    %109 = arith.addf %108, %107 : vector<2x128xf32>
    %110 = arith.divf %108, %109 : vector<2x128xf32>
    %111 = vector.extract_strided_slice %73 {offsets = [0, 256], sizes = [2, 128], strides = [1, 1]} : vector<2x512xf32> to vector<2x128xf32>
    %112 = math.tanh %111 : vector<2x128xf32>
    %113 = vector.extract_strided_slice %73 {offsets = [0, 384], sizes = [2, 128], strides = [1, 1]} : vector<2x512xf32> to vector<2x128xf32>
    %114 = arith.negf %113 : vector<2x128xf32>
    %115 = math.exp %114 : vector<2x128xf32>
    %cst_28 = arith.constant 1.000000e+00 : f32
    %116 = vector.broadcast %cst_28 : f32 to vector<2x128xf32>
    %117 = arith.addf %116, %115 : vector<2x128xf32>
    %118 = arith.divf %116, %117 : vector<2x128xf32>
    %119 = arith.mulf %110, %65 : vector<2x128xf32>
    %120 = arith.mulf %104, %112 : vector<2x128xf32>
    %121 = arith.addf %119, %120 : vector<2x128xf32>
    %122 = math.tanh %121 : vector<2x128xf32>
    %123 = arith.mulf %118, %122 : vector<2x128xf32>
    %124 = vector.extract_strided_slice %5 {offsets = [4, 0], sizes = [2, 512], strides = [1, 1]} : vector<16x1024xf32> to vector<2x512xf32>
    %125 = vector.extract_strided_slice %5 {offsets = [10, 512], sizes = [2, 512], strides = [1, 1]} : vector<16x1024xf32> to vector<2x512xf32>
    %cst_29 = arith.constant dense<0.000000e+00> : vector<2x512xf32>
    %126 = tpu.matmul %98, %6, %cst_29 {dimension_numbers = #tpu.dot_dimension_numbers<[1], [0], [0], [1], [0, 0, 1, 1], [], []>} : vector<2x128xf32>, vector<128x512xf32>, vector<2x512xf32> -> vector<2x512xf32>
    %127 = arith.addf %124, %126 : vector<2x512xf32>
    %cst_30 = arith.constant dense<0.000000e+00> : vector<2x512xf32>
    %128 = tpu.matmul %123, %7, %cst_30 {dimension_numbers = #tpu.dot_dimension_numbers<[1], [0], [0], [1], [0, 0, 1, 1], [], []>} : vector<2x128xf32>, vector<128x512xf32>, vector<2x512xf32> -> vector<2x512xf32>
    %129 = arith.addf %125, %128 : vector<2x512xf32>
    %130 = vector.extract_strided_slice %127 {offsets = [0, 0], sizes = [2, 128], strides = [1, 1]} : vector<2x512xf32> to vector<2x128xf32>
    %131 = arith.negf %130 : vector<2x128xf32>
    %132 = math.exp %131 : vector<2x128xf32>
    %cst_31 = arith.constant 1.000000e+00 : f32
    %133 = vector.broadcast %cst_31 : f32 to vector<2x128xf32>
    %134 = arith.addf %133, %132 : vector<2x128xf32>
    %135 = arith.divf %133, %134 : vector<2x128xf32>
    %136 = vector.extract_strided_slice %127 {offsets = [0, 128], sizes = [2, 128], strides = [1, 1]} : vector<2x512xf32> to vector<2x128xf32>
    %137 = arith.negf %136 : vector<2x128xf32>
    %138 = math.exp %137 : vector<2x128xf32>
    %cst_32 = arith.constant 1.000000e+00 : f32
    %139 = vector.broadcast %cst_32 : f32 to vector<2x128xf32>
    %140 = arith.addf %139, %138 : vector<2x128xf32>
    %141 = arith.divf %139, %140 : vector<2x128xf32>
    %142 = vector.extract_strided_slice %127 {offsets = [0, 256], sizes = [2, 128], strides = [1, 1]} : vector<2x512xf32> to vector<2x128xf32>
    %143 = math.tanh %142 : vector<2x128xf32>
    %144 = vector.extract_strided_slice %127 {offsets = [0, 384], sizes = [2, 128], strides = [1, 1]} : vector<2x512xf32> to vector<2x128xf32>
    %145 = arith.negf %144 : vector<2x128xf32>
    %146 = math.exp %145 : vector<2x128xf32>
    %cst_33 = arith.constant 1.000000e+00 : f32
    %147 = vector.broadcast %cst_33 : f32 to vector<2x128xf32>
    %148 = arith.addf %147, %146 : vector<2x128xf32>
    %149 = arith.divf %147, %148 : vector<2x128xf32>
    %150 = arith.mulf %141, %96 : vector<2x128xf32>
    %151 = arith.mulf %135, %143 : vector<2x128xf32>
    %152 = arith.addf %150, %151 : vector<2x128xf32>
    %153 = math.tanh %152 : vector<2x128xf32>
    %154 = arith.mulf %149, %153 : vector<2x128xf32>
    %155 = vector.extract_strided_slice %129 {offsets = [0, 0], sizes = [2, 128], strides = [1, 1]} : vector<2x512xf32> to vector<2x128xf32>
    %156 = arith.negf %155 : vector<2x128xf32>
    %157 = math.exp %156 : vector<2x128xf32>
    %cst_34 = arith.constant 1.000000e+00 : f32
    %158 = vector.broadcast %cst_34 : f32 to vector<2x128xf32>
    %159 = arith.addf %158, %157 : vector<2x128xf32>
    %160 = arith.divf %158, %159 : vector<2x128xf32>
    %161 = vector.extract_strided_slice %129 {offsets = [0, 128], sizes = [2, 128], strides = [1, 1]} : vector<2x512xf32> to vector<2x128xf32>
    %162 = arith.negf %161 : vector<2x128xf32>
    %163 = math.exp %162 : vector<2x128xf32>
    %cst_35 = arith.constant 1.000000e+00 : f32
    %164 = vector.broadcast %cst_35 : f32 to vector<2x128xf32>
    %165 = arith.addf %164, %163 : vector<2x128xf32>
    %166 = arith.divf %164, %165 : vector<2x128xf32>
    %167 = vector.extract_strided_slice %129 {offsets = [0, 256], sizes = [2, 128], strides = [1, 1]} : vector<2x512xf32> to vector<2x128xf32>
    %168 = math.tanh %167 : vector<2x128xf32>
    %169 = vector.extract_strided_slice %129 {offsets = [0, 384], sizes = [2, 128], strides = [1, 1]} : vector<2x512xf32> to vector<2x128xf32>
    %170 = arith.negf %169 : vector<2x128xf32>
    %171 = math.exp %170 : vector<2x128xf32>
    %cst_36 = arith.constant 1.000000e+00 : f32
    %172 = vector.broadcast %cst_36 : f32 to vector<2x128xf32>
    %173 = arith.addf %172, %171 : vector<2x128xf32>
    %174 = arith.divf %172, %173 : vector<2x128xf32>
    %175 = arith.mulf %166, %121 : vector<2x128xf32>
    %176 = arith.mulf %160, %168 : vector<2x128xf32>
    %177 = arith.addf %175, %176 : vector<2x128xf32>
    %178 = math.tanh %177 : vector<2x128xf32>
    %179 = arith.mulf %174, %178 : vector<2x128xf32>
    %180 = vector.extract_strided_slice %5 {offsets = [6, 0], sizes = [2, 512], strides = [1, 1]} : vector<16x1024xf32> to vector<2x512xf32>
    %181 = vector.extract_strided_slice %5 {offsets = [8, 512], sizes = [2, 512], strides = [1, 1]} : vector<16x1024xf32> to vector<2x512xf32>
    %cst_37 = arith.constant dense<0.000000e+00> : vector<2x512xf32>
    %182 = tpu.matmul %154, %6, %cst_37 {dimension_numbers = #tpu.dot_dimension_numbers<[1], [0], [0], [1], [0, 0, 1, 1], [], []>} : vector<2x128xf32>, vector<128x512xf32>, vector<2x512xf32> -> vector<2x512xf32>
    %183 = arith.addf %180, %182 : vector<2x512xf32>
    %cst_38 = arith.constant dense<0.000000e+00> : vector<2x512xf32>
    %184 = tpu.matmul %179, %7, %cst_38 {dimension_numbers = #tpu.dot_dimension_numbers<[1], [0], [0], [1], [0, 0, 1, 1], [], []>} : vector<2x128xf32>, vector<128x512xf32>, vector<2x512xf32> -> vector<2x512xf32>
    %185 = arith.addf %181, %184 : vector<2x512xf32>
    %186 = vector.extract_strided_slice %183 {offsets = [0, 0], sizes = [2, 128], strides = [1, 1]} : vector<2x512xf32> to vector<2x128xf32>
    %187 = arith.negf %186 : vector<2x128xf32>
    %188 = math.exp %187 : vector<2x128xf32>
    %cst_39 = arith.constant 1.000000e+00 : f32
    %189 = vector.broadcast %cst_39 : f32 to vector<2x128xf32>
    %190 = arith.addf %189, %188 : vector<2x128xf32>
    %191 = arith.divf %189, %190 : vector<2x128xf32>
    %192 = vector.extract_strided_slice %183 {offsets = [0, 128], sizes = [2, 128], strides = [1, 1]} : vector<2x512xf32> to vector<2x128xf32>
    %193 = arith.negf %192 : vector<2x128xf32>
    %194 = math.exp %193 : vector<2x128xf32>
    %cst_40 = arith.constant 1.000000e+00 : f32
    %195 = vector.broadcast %cst_40 : f32 to vector<2x128xf32>
    %196 = arith.addf %195, %194 : vector<2x128xf32>
    %197 = arith.divf %195, %196 : vector<2x128xf32>
    %198 = vector.extract_strided_slice %183 {offsets = [0, 256], sizes = [2, 128], strides = [1, 1]} : vector<2x512xf32> to vector<2x128xf32>
    %199 = math.tanh %198 : vector<2x128xf32>
    %200 = vector.extract_strided_slice %183 {offsets = [0, 384], sizes = [2, 128], strides = [1, 1]} : vector<2x512xf32> to vector<2x128xf32>
    %201 = arith.negf %200 : vector<2x128xf32>
    %202 = math.exp %201 : vector<2x128xf32>
    %cst_41 = arith.constant 1.000000e+00 : f32
    %203 = vector.broadcast %cst_41 : f32 to vector<2x128xf32>
    %204 = arith.addf %203, %202 : vector<2x128xf32>
    %205 = arith.divf %203, %204 : vector<2x128xf32>
    %206 = arith.mulf %197, %152 : vector<2x128xf32>
    %207 = arith.mulf %191, %199 : vector<2x128xf32>
    %208 = arith.addf %206, %207 : vector<2x128xf32>
    %209 = math.tanh %208 : vector<2x128xf32>
    %210 = arith.mulf %205, %209 : vector<2x128xf32>
    %211 = vector.extract_strided_slice %185 {offsets = [0, 0], sizes = [2, 128], strides = [1, 1]} : vector<2x512xf32> to vector<2x128xf32>
    %212 = arith.negf %211 : vector<2x128xf32>
    %213 = math.exp %212 : vector<2x128xf32>
    %cst_42 = arith.constant 1.000000e+00 : f32
    %214 = vector.broadcast %cst_42 : f32 to vector<2x128xf32>
    %215 = arith.addf %214, %213 : vector<2x128xf32>
    %216 = arith.divf %214, %215 : vector<2x128xf32>
    %217 = vector.extract_strided_slice %185 {offsets = [0, 128], sizes = [2, 128], strides = [1, 1]} : vector<2x512xf32> to vector<2x128xf32>
    %218 = arith.negf %217 : vector<2x128xf32>
    %219 = math.exp %218 : vector<2x128xf32>
    %cst_43 = arith.constant 1.000000e+00 : f32
    %220 = vector.broadcast %cst_43 : f32 to vector<2x128xf32>
    %221 = arith.addf %220, %219 : vector<2x128xf32>
    %222 = arith.divf %220, %221 : vector<2x128xf32>
    %223 = vector.extract_strided_slice %185 {offsets = [0, 256], sizes = [2, 128], strides = [1, 1]} : vector<2x512xf32> to vector<2x128xf32>
    %224 = math.tanh %223 : vector<2x128xf32>
    %225 = vector.extract_strided_slice %185 {offsets = [0, 384], sizes = [2, 128], strides = [1, 1]} : vector<2x512xf32> to vector<2x128xf32>
    %226 = arith.negf %225 : vector<2x128xf32>
    %227 = math.exp %226 : vector<2x128xf32>
    %cst_44 = arith.constant 1.000000e+00 : f32
    %228 = vector.broadcast %cst_44 : f32 to vector<2x128xf32>
    %229 = arith.addf %228, %227 : vector<2x128xf32>
    %230 = arith.divf %228, %229 : vector<2x128xf32>
    %231 = arith.mulf %222, %177 : vector<2x128xf32>
    %232 = arith.mulf %216, %224 : vector<2x128xf32>
    %233 = arith.addf %231, %232 : vector<2x128xf32>
    %234 = math.tanh %233 : vector<2x128xf32>
    %235 = arith.mulf %230, %234 : vector<2x128xf32>
    %236 = vector.extract_strided_slice %5 {offsets = [8, 0], sizes = [2, 512], strides = [1, 1]} : vector<16x1024xf32> to vector<2x512xf32>
    %237 = vector.extract_strided_slice %5 {offsets = [6, 512], sizes = [2, 512], strides = [1, 1]} : vector<16x1024xf32> to vector<2x512xf32>
    %cst_45 = arith.constant dense<0.000000e+00> : vector<2x512xf32>
    %238 = tpu.matmul %210, %6, %cst_45 {dimension_numbers = #tpu.dot_dimension_numbers<[1], [0], [0], [1], [0, 0, 1, 1], [], []>} : vector<2x128xf32>, vector<128x512xf32>, vector<2x512xf32> -> vector<2x512xf32>
    %239 = arith.addf %236, %238 : vector<2x512xf32>
    %cst_46 = arith.constant dense<0.000000e+00> : vector<2x512xf32>
    %240 = tpu.matmul %235, %7, %cst_46 {dimension_numbers = #tpu.dot_dimension_numbers<[1], [0], [0], [1], [0, 0, 1, 1], [], []>} : vector<2x128xf32>, vector<128x512xf32>, vector<2x512xf32> -> vector<2x512xf32>
    %241 = arith.addf %237, %240 : vector<2x512xf32>
    %242 = vector.extract_strided_slice %239 {offsets = [0, 0], sizes = [2, 128], strides = [1, 1]} : vector<2x512xf32> to vector<2x128xf32>
    %243 = arith.negf %242 : vector<2x128xf32>
    %244 = math.exp %243 : vector<2x128xf32>
    %cst_47 = arith.constant 1.000000e+00 : f32
    %245 = vector.broadcast %cst_47 : f32 to vector<2x128xf32>
    %246 = arith.addf %245, %244 : vector<2x128xf32>
    %247 = arith.divf %245, %246 : vector<2x128xf32>
    %248 = vector.extract_strided_slice %239 {offsets = [0, 128], sizes = [2, 128], strides = [1, 1]} : vector<2x512xf32> to vector<2x128xf32>
    %249 = arith.negf %248 : vector<2x128xf32>
    %250 = math.exp %249 : vector<2x128xf32>
    %cst_48 = arith.constant 1.000000e+00 : f32
    %251 = vector.broadcast %cst_48 : f32 to vector<2x128xf32>
    %252 = arith.addf %251, %250 : vector<2x128xf32>
    %253 = arith.divf %251, %252 : vector<2x128xf32>
    %254 = vector.extract_strided_slice %239 {offsets = [0, 256], sizes = [2, 128], strides = [1, 1]} : vector<2x512xf32> to vector<2x128xf32>
    %255 = math.tanh %254 : vector<2x128xf32>
    %256 = vector.extract_strided_slice %239 {offsets = [0, 384], sizes = [2, 128], strides = [1, 1]} : vector<2x512xf32> to vector<2x128xf32>
    %257 = arith.negf %256 : vector<2x128xf32>
    %258 = math.exp %257 : vector<2x128xf32>
    %cst_49 = arith.constant 1.000000e+00 : f32
    %259 = vector.broadcast %cst_49 : f32 to vector<2x128xf32>
    %260 = arith.addf %259, %258 : vector<2x128xf32>
    %261 = arith.divf %259, %260 : vector<2x128xf32>
    %262 = arith.mulf %253, %208 : vector<2x128xf32>
    %263 = arith.mulf %247, %255 : vector<2x128xf32>
    %264 = arith.addf %262, %263 : vector<2x128xf32>
    %265 = math.tanh %264 : vector<2x128xf32>
    %266 = arith.mulf %261, %265 : vector<2x128xf32>
    %267 = vector.extract_strided_slice %241 {offsets = [0, 0], sizes = [2, 128], strides = [1, 1]} : vector<2x512xf32> to vector<2x128xf32>
    %268 = arith.negf %267 : vector<2x128xf32>
    %269 = math.exp %268 : vector<2x128xf32>
    %cst_50 = arith.constant 1.000000e+00 : f32
    %270 = vector.broadcast %cst_50 : f32 to vector<2x128xf32>
    %271 = arith.addf %270, %269 : vector<2x128xf32>
    %272 = arith.divf %270, %271 : vector<2x128xf32>
    %273 = vector.extract_strided_slice %241 {offsets = [0, 128], sizes = [2, 128], strides = [1, 1]} : vector<2x512xf32> to vector<2x128xf32>
    %274 = arith.negf %273 : vector<2x128xf32>
    %275 = math.exp %274 : vector<2x128xf32>
    %cst_51 = arith.constant 1.000000e+00 : f32
    %276 = vector.broadcast %cst_51 : f32 to vector<2x128xf32>
    %277 = arith.addf %276, %275 : vector<2x128xf32>
    %278 = arith.divf %276, %277 : vector<2x128xf32>
    %279 = vector.extract_strided_slice %241 {offsets = [0, 256], sizes = [2, 128], strides = [1, 1]} : vector<2x512xf32> to vector<2x128xf32>
    %280 = math.tanh %279 : vector<2x128xf32>
    %281 = vector.extract_strided_slice %241 {offsets = [0, 384], sizes = [2, 128], strides = [1, 1]} : vector<2x512xf32> to vector<2x128xf32>
    %282 = arith.negf %281 : vector<2x128xf32>
    %283 = math.exp %282 : vector<2x128xf32>
    %cst_52 = arith.constant 1.000000e+00 : f32
    %284 = vector.broadcast %cst_52 : f32 to vector<2x128xf32>
    %285 = arith.addf %284, %283 : vector<2x128xf32>
    %286 = arith.divf %284, %285 : vector<2x128xf32>
    %287 = arith.mulf %278, %233 : vector<2x128xf32>
    %288 = arith.mulf %272, %280 : vector<2x128xf32>
    %289 = arith.addf %287, %288 : vector<2x128xf32>
    %290 = math.tanh %289 : vector<2x128xf32>
    %291 = arith.mulf %286, %290 : vector<2x128xf32>
    %292 = vector.extract_strided_slice %5 {offsets = [10, 0], sizes = [2, 512], strides = [1, 1]} : vector<16x1024xf32> to vector<2x512xf32>
    %293 = vector.extract_strided_slice %5 {offsets = [4, 512], sizes = [2, 512], strides = [1, 1]} : vector<16x1024xf32> to vector<2x512xf32>
    %cst_53 = arith.constant dense<0.000000e+00> : vector<2x512xf32>
    %294 = tpu.matmul %266, %6, %cst_53 {dimension_numbers = #tpu.dot_dimension_numbers<[1], [0], [0], [1], [0, 0, 1, 1], [], []>} : vector<2x128xf32>, vector<128x512xf32>, vector<2x512xf32> -> vector<2x512xf32>
    %295 = arith.addf %292, %294 : vector<2x512xf32>
    %cst_54 = arith.constant dense<0.000000e+00> : vector<2x512xf32>
    %296 = tpu.matmul %291, %7, %cst_54 {dimension_numbers = #tpu.dot_dimension_numbers<[1], [0], [0], [1], [0, 0, 1, 1], [], []>} : vector<2x128xf32>, vector<128x512xf32>, vector<2x512xf32> -> vector<2x512xf32>
    %297 = arith.addf %293, %296 : vector<2x512xf32>
    %298 = vector.extract_strided_slice %295 {offsets = [0, 0], sizes = [2, 128], strides = [1, 1]} : vector<2x512xf32> to vector<2x128xf32>
    %299 = arith.negf %298 : vector<2x128xf32>
    %300 = math.exp %299 : vector<2x128xf32>
    %cst_55 = arith.constant 1.000000e+00 : f32
    %301 = vector.broadcast %cst_55 : f32 to vector<2x128xf32>
    %302 = arith.addf %301, %300 : vector<2x128xf32>
    %303 = arith.divf %301, %302 : vector<2x128xf32>
    %304 = vector.extract_strided_slice %295 {offsets = [0, 128], sizes = [2, 128], strides = [1, 1]} : vector<2x512xf32> to vector<2x128xf32>
    %305 = arith.negf %304 : vector<2x128xf32>
    %306 = math.exp %305 : vector<2x128xf32>
    %cst_56 = arith.constant 1.000000e+00 : f32
    %307 = vector.broadcast %cst_56 : f32 to vector<2x128xf32>
    %308 = arith.addf %307, %306 : vector<2x128xf32>
    %309 = arith.divf %307, %308 : vector<2x128xf32>
    %310 = vector.extract_strided_slice %295 {offsets = [0, 256], sizes = [2, 128], strides = [1, 1]} : vector<2x512xf32> to vector<2x128xf32>
    %311 = math.tanh %310 : vector<2x128xf32>
    %312 = vector.extract_strided_slice %295 {offsets = [0, 384], sizes = [2, 128], strides = [1, 1]} : vector<2x512xf32> to vector<2x128xf32>
    %313 = arith.negf %312 : vector<2x128xf32>
    %314 = math.exp %313 : vector<2x128xf32>
    %cst_57 = arith.constant 1.000000e+00 : f32
    %315 = vector.broadcast %cst_57 : f32 to vector<2x128xf32>
    %316 = arith.addf %315, %314 : vector<2x128xf32>
    %317 = arith.divf %315, %316 : vector<2x128xf32>
    %318 = arith.mulf %309, %264 : vector<2x128xf32>
    %319 = arith.mulf %303, %311 : vector<2x128xf32>
    %320 = arith.addf %318, %319 : vector<2x128xf32>
    %321 = math.tanh %320 : vector<2x128xf32>
    %322 = arith.mulf %317, %321 : vector<2x128xf32>
    %323 = vector.extract_strided_slice %297 {offsets = [0, 0], sizes = [2, 128], strides = [1, 1]} : vector<2x512xf32> to vector<2x128xf32>
    %324 = arith.negf %323 : vector<2x128xf32>
    %325 = math.exp %324 : vector<2x128xf32>
    %cst_58 = arith.constant 1.000000e+00 : f32
    %326 = vector.broadcast %cst_58 : f32 to vector<2x128xf32>
    %327 = arith.addf %326, %325 : vector<2x128xf32>
    %328 = arith.divf %326, %327 : vector<2x128xf32>
    %329 = vector.extract_strided_slice %297 {offsets = [0, 128], sizes = [2, 128], strides = [1, 1]} : vector<2x512xf32> to vector<2x128xf32>
    %330 = arith.negf %329 : vector<2x128xf32>
    %331 = math.exp %330 : vector<2x128xf32>
    %cst_59 = arith.constant 1.000000e+00 : f32
    %332 = vector.broadcast %cst_59 : f32 to vector<2x128xf32>
    %333 = arith.addf %332, %331 : vector<2x128xf32>
    %334 = arith.divf %332, %333 : vector<2x128xf32>
    %335 = vector.extract_strided_slice %297 {offsets = [0, 256], sizes = [2, 128], strides = [1, 1]} : vector<2x512xf32> to vector<2x128xf32>
    %336 = math.tanh %335 : vector<2x128xf32>
    %337 = vector.extract_strided_slice %297 {offsets = [0, 384], sizes = [2, 128], strides = [1, 1]} : vector<2x512xf32> to vector<2x128xf32>
    %338 = arith.negf %337 : vector<2x128xf32>
    %339 = math.exp %338 : vector<2x128xf32>
    %cst_60 = arith.constant 1.000000e+00 : f32
    %340 = vector.broadcast %cst_60 : f32 to vector<2x128xf32>
    %341 = arith.addf %340, %339 : vector<2x128xf32>
    %342 = arith.divf %340, %341 : vector<2x128xf32>
    %343 = arith.mulf %334, %289 : vector<2x128xf32>
    %344 = arith.mulf %328, %336 : vector<2x128xf32>
    %345 = arith.addf %343, %344 : vector<2x128xf32>
    %346 = math.tanh %345 : vector<2x128xf32>
    %347 = arith.mulf %342, %346 : vector<2x128xf32>
    %348 = vector.extract_strided_slice %5 {offsets = [12, 0], sizes = [2, 512], strides = [1, 1]} : vector<16x1024xf32> to vector<2x512xf32>
    %349 = vector.extract_strided_slice %5 {offsets = [2, 512], sizes = [2, 512], strides = [1, 1]} : vector<16x1024xf32> to vector<2x512xf32>
    %cst_61 = arith.constant dense<0.000000e+00> : vector<2x512xf32>
    %350 = tpu.matmul %322, %6, %cst_61 {dimension_numbers = #tpu.dot_dimension_numbers<[1], [0], [0], [1], [0, 0, 1, 1], [], []>} : vector<2x128xf32>, vector<128x512xf32>, vector<2x512xf32> -> vector<2x512xf32>
    %351 = arith.addf %348, %350 : vector<2x512xf32>
    %cst_62 = arith.constant dense<0.000000e+00> : vector<2x512xf32>
    %352 = tpu.matmul %347, %7, %cst_62 {dimension_numbers = #tpu.dot_dimension_numbers<[1], [0], [0], [1], [0, 0, 1, 1], [], []>} : vector<2x128xf32>, vector<128x512xf32>, vector<2x512xf32> -> vector<2x512xf32>
    %353 = arith.addf %349, %352 : vector<2x512xf32>
    %354 = vector.extract_strided_slice %351 {offsets = [0, 0], sizes = [2, 128], strides = [1, 1]} : vector<2x512xf32> to vector<2x128xf32>
    %355 = arith.negf %354 : vector<2x128xf32>
    %356 = math.exp %355 : vector<2x128xf32>
    %cst_63 = arith.constant 1.000000e+00 : f32
    %357 = vector.broadcast %cst_63 : f32 to vector<2x128xf32>
    %358 = arith.addf %357, %356 : vector<2x128xf32>
    %359 = arith.divf %357, %358 : vector<2x128xf32>
    %360 = vector.extract_strided_slice %351 {offsets = [0, 128], sizes = [2, 128], strides = [1, 1]} : vector<2x512xf32> to vector<2x128xf32>
    %361 = arith.negf %360 : vector<2x128xf32>
    %362 = math.exp %361 : vector<2x128xf32>
    %cst_64 = arith.constant 1.000000e+00 : f32
    %363 = vector.broadcast %cst_64 : f32 to vector<2x128xf32>
    %364 = arith.addf %363, %362 : vector<2x128xf32>
    %365 = arith.divf %363, %364 : vector<2x128xf32>
    %366 = vector.extract_strided_slice %351 {offsets = [0, 256], sizes = [2, 128], strides = [1, 1]} : vector<2x512xf32> to vector<2x128xf32>
    %367 = math.tanh %366 : vector<2x128xf32>
    %368 = vector.extract_strided_slice %351 {offsets = [0, 384], sizes = [2, 128], strides = [1, 1]} : vector<2x512xf32> to vector<2x128xf32>
    %369 = arith.negf %368 : vector<2x128xf32>
    %370 = math.exp %369 : vector<2x128xf32>
    %cst_65 = arith.constant 1.000000e+00 : f32
    %371 = vector.broadcast %cst_65 : f32 to vector<2x128xf32>
    %372 = arith.addf %371, %370 : vector<2x128xf32>
    %373 = arith.divf %371, %372 : vector<2x128xf32>
    %374 = arith.mulf %365, %320 : vector<2x128xf32>
    %375 = arith.mulf %359, %367 : vector<2x128xf32>
    %376 = arith.addf %374, %375 : vector<2x128xf32>
    %377 = math.tanh %376 : vector<2x128xf32>
    %378 = arith.mulf %373, %377 : vector<2x128xf32>
    %379 = vector.extract_strided_slice %353 {offsets = [0, 0], sizes = [2, 128], strides = [1, 1]} : vector<2x512xf32> to vector<2x128xf32>
    %380 = arith.negf %379 : vector<2x128xf32>
    %381 = math.exp %380 : vector<2x128xf32>
    %cst_66 = arith.constant 1.000000e+00 : f32
    %382 = vector.broadcast %cst_66 : f32 to vector<2x128xf32>
    %383 = arith.addf %382, %381 : vector<2x128xf32>
    %384 = arith.divf %382, %383 : vector<2x128xf32>
    %385 = vector.extract_strided_slice %353 {offsets = [0, 128], sizes = [2, 128], strides = [1, 1]} : vector<2x512xf32> to vector<2x128xf32>
    %386 = arith.negf %385 : vector<2x128xf32>
    %387 = math.exp %386 : vector<2x128xf32>
    %cst_67 = arith.constant 1.000000e+00 : f32
    %388 = vector.broadcast %cst_67 : f32 to vector<2x128xf32>
    %389 = arith.addf %388, %387 : vector<2x128xf32>
    %390 = arith.divf %388, %389 : vector<2x128xf32>
    %391 = vector.extract_strided_slice %353 {offsets = [0, 256], sizes = [2, 128], strides = [1, 1]} : vector<2x512xf32> to vector<2x128xf32>
    %392 = math.tanh %391 : vector<2x128xf32>
    %393 = vector.extract_strided_slice %353 {offsets = [0, 384], sizes = [2, 128], strides = [1, 1]} : vector<2x512xf32> to vector<2x128xf32>
    %394 = arith.negf %393 : vector<2x128xf32>
    %395 = math.exp %394 : vector<2x128xf32>
    %cst_68 = arith.constant 1.000000e+00 : f32
    %396 = vector.broadcast %cst_68 : f32 to vector<2x128xf32>
    %397 = arith.addf %396, %395 : vector<2x128xf32>
    %398 = arith.divf %396, %397 : vector<2x128xf32>
    %399 = arith.mulf %390, %345 : vector<2x128xf32>
    %400 = arith.mulf %384, %392 : vector<2x128xf32>
    %401 = arith.addf %399, %400 : vector<2x128xf32>
    %402 = math.tanh %401 : vector<2x128xf32>
    %403 = arith.mulf %398, %402 : vector<2x128xf32>
    %404 = vector.extract_strided_slice %5 {offsets = [14, 0], sizes = [2, 512], strides = [1, 1]} : vector<16x1024xf32> to vector<2x512xf32>
    %405 = vector.extract_strided_slice %5 {offsets = [0, 512], sizes = [2, 512], strides = [1, 1]} : vector<16x1024xf32> to vector<2x512xf32>
    %cst_69 = arith.constant dense<0.000000e+00> : vector<2x512xf32>
    %406 = tpu.matmul %378, %6, %cst_69 {dimension_numbers = #tpu.dot_dimension_numbers<[1], [0], [0], [1], [0, 0, 1, 1], [], []>} : vector<2x128xf32>, vector<128x512xf32>, vector<2x512xf32> -> vector<2x512xf32>
    %407 = arith.addf %404, %406 : vector<2x512xf32>
    %cst_70 = arith.constant dense<0.000000e+00> : vector<2x512xf32>
    %408 = tpu.matmul %403, %7, %cst_70 {dimension_numbers = #tpu.dot_dimension_numbers<[1], [0], [0], [1], [0, 0, 1, 1], [], []>} : vector<2x128xf32>, vector<128x512xf32>, vector<2x512xf32> -> vector<2x512xf32>
    %409 = arith.addf %405, %408 : vector<2x512xf32>
    %410 = vector.extract_strided_slice %407 {offsets = [0, 0], sizes = [2, 128], strides = [1, 1]} : vector<2x512xf32> to vector<2x128xf32>
    %411 = arith.negf %410 : vector<2x128xf32>
    %412 = math.exp %411 : vector<2x128xf32>
    %cst_71 = arith.constant 1.000000e+00 : f32
    %413 = vector.broadcast %cst_71 : f32 to vector<2x128xf32>
    %414 = arith.addf %413, %412 : vector<2x128xf32>
    %415 = arith.divf %413, %414 : vector<2x128xf32>
    %416 = vector.extract_strided_slice %407 {offsets = [0, 128], sizes = [2, 128], strides = [1, 1]} : vector<2x512xf32> to vector<2x128xf32>
    %417 = arith.negf %416 : vector<2x128xf32>
    %418 = math.exp %417 : vector<2x128xf32>
    %cst_72 = arith.constant 1.000000e+00 : f32
    %419 = vector.broadcast %cst_72 : f32 to vector<2x128xf32>
    %420 = arith.addf %419, %418 : vector<2x128xf32>
    %421 = arith.divf %419, %420 : vector<2x128xf32>
    %422 = vector.extract_strided_slice %407 {offsets = [0, 256], sizes = [2, 128], strides = [1, 1]} : vector<2x512xf32> to vector<2x128xf32>
    %423 = math.tanh %422 : vector<2x128xf32>
    %424 = vector.extract_strided_slice %407 {offsets = [0, 384], sizes = [2, 128], strides = [1, 1]} : vector<2x512xf32> to vector<2x128xf32>
    %425 = arith.negf %424 : vector<2x128xf32>
    %426 = math.exp %425 : vector<2x128xf32>
    %cst_73 = arith.constant 1.000000e+00 : f32
    %427 = vector.broadcast %cst_73 : f32 to vector<2x128xf32>
    %428 = arith.addf %427, %426 : vector<2x128xf32>
    %429 = arith.divf %427, %428 : vector<2x128xf32>
    %430 = arith.mulf %421, %376 : vector<2x128xf32>
    %431 = arith.mulf %415, %423 : vector<2x128xf32>
    %432 = arith.addf %430, %431 : vector<2x128xf32>
    %433 = math.tanh %432 : vector<2x128xf32>
    %434 = arith.mulf %429, %433 : vector<2x128xf32>
    %435 = vector.extract_strided_slice %409 {offsets = [0, 0], sizes = [2, 128], strides = [1, 1]} : vector<2x512xf32> to vector<2x128xf32>
    %436 = arith.negf %435 : vector<2x128xf32>
    %437 = math.exp %436 : vector<2x128xf32>
    %cst_74 = arith.constant 1.000000e+00 : f32
    %438 = vector.broadcast %cst_74 : f32 to vector<2x128xf32>
    %439 = arith.addf %438, %437 : vector<2x128xf32>
    %440 = arith.divf %438, %439 : vector<2x128xf32>
    %441 = vector.extract_strided_slice %409 {offsets = [0, 128], sizes = [2, 128], strides = [1, 1]} : vector<2x512xf32> to vector<2x128xf32>
    %442 = arith.negf %441 : vector<2x128xf32>
    %443 = math.exp %442 : vector<2x128xf32>
    %cst_75 = arith.constant 1.000000e+00 : f32
    %444 = vector.broadcast %cst_75 : f32 to vector<2x128xf32>
    %445 = arith.addf %444, %443 : vector<2x128xf32>
    %446 = arith.divf %444, %445 : vector<2x128xf32>
    %447 = vector.extract_strided_slice %409 {offsets = [0, 256], sizes = [2, 128], strides = [1, 1]} : vector<2x512xf32> to vector<2x128xf32>
    %448 = math.tanh %447 : vector<2x128xf32>
    %449 = vector.extract_strided_slice %409 {offsets = [0, 384], sizes = [2, 128], strides = [1, 1]} : vector<2x512xf32> to vector<2x128xf32>
    %450 = arith.negf %449 : vector<2x128xf32>
    %451 = math.exp %450 : vector<2x128xf32>
    %cst_76 = arith.constant 1.000000e+00 : f32
    %452 = vector.broadcast %cst_76 : f32 to vector<2x128xf32>
    %453 = arith.addf %452, %451 : vector<2x128xf32>
    %454 = arith.divf %452, %453 : vector<2x128xf32>
    %455 = arith.mulf %446, %401 : vector<2x128xf32>
    %456 = arith.mulf %440, %448 : vector<2x128xf32>
    %457 = arith.addf %455, %456 : vector<2x128xf32>
    %458 = math.tanh %457 : vector<2x128xf32>
    %459 = arith.mulf %454, %458 : vector<2x128xf32>
    %460 = tpu.concatenate %434, %459 in 1 : vector<2x128xf32>, vector<2x128xf32> -> vector<2x256xf32>
    %c0_77 = arith.constant 0 : index
    %c0_78 = arith.constant 0 : index
    %461 = vector.load %arg5[%c0_77, %c0_78] : memref<2x256xf32, #tpu.memory_space<vmem>>, vector<2x256xf32>
    tpu.vector_store %arg5[%c0_77, %c0_78], %460 {strides = array<i32>} : memref<2x256xf32, #tpu.memory_space<vmem>>, vector<2x256xf32>,
    return
  }
}

</mosaic_0001>

<llo_original>
// kernel: lstm_block_forward.1
$region0: #{lstm_block_forward.1}
  #allocation0 [shape = 'u32[]', space=smem, size = 0x4, offset = 0x4, fixed_abs, tag = 'smem constant byte address 0x4 - core index']
  #allocation1 [shape = 'u32[144,128]{1,0:T(1,128)}', space=vmem, size = 0x12000, scoped, tag = 'internal scratch']
  %s0 = inlined_call_operand.vmem [shape: f32[16,64], index: 0, kind: input, shape index: {}]
  %s1 = inlined_call_operand.hbm [shape: f32[64,1024], index: 1, kind: input, shape index: {}]
  %s2 = inlined_call_operand.vmem [shape: f32[1,1024], index: 2, kind: input, shape index: {}]
  %s3 = inlined_call_operand.hbm [shape: f32[128,512], index: 3, kind: input, shape index: {}]
  %s4 = inlined_call_operand.hbm [shape: f32[128,512], index: 4, kind: input, shape index: {}]
  %s5 = inlined_call_operand.hbm [shape: f32[2,256], index: 5, kind: output, shape index: {}]
  %s6 = sld [smem:[#allocation0]]
  $region42: #{lstm_block_forward.1} parent=0
    _
  %s8 = ssub.s32 1, %s6
  %s9 = scalar_select 0, %s8, %s6
  $region1: #{lstm_block_forward.1} parent=0
    #allocation2 [shape = 'u8[262144]{0}', space=vmem, size = 0x40000, scoped, tag = 'input window, operand 1, single buffered']
    #allocation3 [shape = 's32[1]{0}', space=sflag, size = 0x4, scoped, tag = 'scoped memory for lstm_block_forward.1']
    #allocation4 [shape = 's32[1]{0}', space=sflag, size = 0x4, scoped, tag = 'scoped memory for lstm_block_forward.1']
    #allocation5 [shape = 'u8[262144]{0}', space=vmem, size = 0x40000, scoped, tag = 'input window, operand 3, single buffered']
    #allocation6 [shape = 's32[1]{0}', space=sflag, size = 0x4, scoped, tag = 'scoped memory for lstm_block_forward.1']
    #allocation7 [shape = 'u8[262144]{0}', space=vmem, size = 0x40000, scoped, tag = 'input window, operand 4, single buffered']
    #allocation8 [shape = 'u8[2048]{0}', space=vmem, size = 0x800, scoped, tag = 'output window, operand 0, single buffered']
    %10 = vsyncpa [#allocation3], 0
    %11 = vsyncpa [#allocation6], 0
    %12 = vsyncpa [#allocation4], 0
    // Predicated region
    $region2: #{lstm_block_forward.1} parent=1 // pred_check
      _
    $region3: #{lstm_block_forward.1} parent=1 // pred_check_branch
      %14 = sbr.rel (0) target = $region5
    $region4: #{lstm_block_forward.1} parent=1 // pred_region
      _
    $region5: #{lstm_block_forward.1} parent=1 // pred_fallthru
      _
    // Predicated region
    $region6: #{lstm_block_forward.1} parent=1 // pred_check
      _
    $region7: #{lstm_block_forward.1} parent=1 // pred_check_branch
      %16 = sbr.rel (0) target = $region9
    $region8: #{lstm_block_forward.1} parent=1 // pred_region
      %s18 = ssub.s32 8192, 8192
      %19 = vsyncadd [#allocation3], %s18
      %s20 = sshll.u32 [#allocation2], 4
      %s21 = int_to_ptr.vmem [resolvable:$true] %s20
      %26 = dma.hbm_to_vmem [thread:$0]  %s1, 8192, %s21, [#allocation3], 1024, 1024, 64
    $region9: #{lstm_block_forward.1} parent=1 // pred_fallthru
      _
    // Predicated region
    $region10: #{lstm_block_forward.1} parent=1 // pred_check
      _
    $region11: #{lstm_block_forward.1} parent=1 // pred_check_branch
      %28 = sbr.rel (0) target = $region13
    $region12: #{lstm_block_forward.1} parent=1 // pred_region
      _
    $region13: #{lstm_block_forward.1} parent=1 // pred_fallthru
      _
    // Predicated region
    $region14: #{lstm_block_forward.1} parent=1 // pred_check
      _
    $region15: #{lstm_block_forward.1} parent=1 // pred_check_branch
      %30 = sbr.rel (0) target = $region17
    $region16: #{lstm_block_forward.1} parent=1 // pred_region
      %s32 = ssub.s32 8192, 8192
      %33 = vsyncadd [#allocation6], %s32
      %s34 = sshll.u32 [#allocation5], 4
      %s35 = int_to_ptr.vmem [resolvable:$true] %s34
      %40 = dma.hbm_to_vmem [thread:$0]  %s3, 8192, %s35, [#allocation6], 512, 512, 32
    $region17: #{lstm_block_forward.1} parent=1 // pred_fallthru
      _
    // Predicated region
    $region18: #{lstm_block_forward.1} parent=1 // pred_check
      _
    $region19: #{lstm_block_forward.1} parent=1 // pred_check_branch
      %42 = sbr.rel (0) target = $region21
    $region20: #{lstm_block_forward.1} parent=1 // pred_region
      %s44 = ssub.s32 8192, 8192
      %45 = vsyncadd [#allocation6], %s44
      %s46 = sshll.u32 [#allocation7], 4
      %s47 = int_to_ptr.vmem [resolvable:$true] %s46
      %52 = dma.hbm_to_vmem [thread:$0]  %s4, 8192, %s47, [#allocation6], 512, 512, 32
    $region21: #{lstm_block_forward.1} parent=1 // pred_fallthru
      _
    // Predicated region
    $region22: #{lstm_block_forward.1} parent=1 // pred_check
      _
    $region23: #{lstm_block_forward.1} parent=1 // pred_check_branch
      %54 = sbr.rel (0) target = $region25
    $region24: #{lstm_block_forward.1} parent=1 // pred_region
      %55 = dma.done [#allocation3], 8192
    $region25: #{lstm_block_forward.1} parent=1 // pred_fallthru
      _
    // Predicated region
    $region26: #{lstm_block_forward.1} parent=1 // pred_check
      _
    $region27: #{lstm_block_forward.1} parent=1 // pred_check_branch
      %57 = sbr.rel (0) target = $region29
    $region28: #{lstm_block_forward.1} parent=1 // pred_region
      %58 = dma.done [#allocation6], 8192
    $region29: #{lstm_block_forward.1} parent=1 // pred_fallthru
      _
    // Predicated region
    $region30: #{lstm_block_forward.1} parent=1 // pred_check
      _
    $region31: #{lstm_block_forward.1} parent=1 // pred_check_branch
      %60 = sbr.rel (0) target = $region33
    $region32: #{lstm_block_forward.1} parent=1 // pred_region
      %61 = dma.done [#allocation6], 8192
    $region33: #{lstm_block_forward.1} parent=1 // pred_fallthru
      _
    %v62 = vld [vmem:[%s0] sm:$0xff]
    %v63 = vld [vmem:[%s0 + $0x8] sm:$0xff]
    %v64 = vld [vmem:[#allocation2] sm:$0xff]
    %v65 = vld [vmem:[#allocation2 + $0x8] sm:$0xff]
    %v66 = vld [vmem:[#allocation2 + $0x10] sm:$0xff]
    %v67 = vld [vmem:[#allocation2 + $0x18] sm:$0xff]
    %v68 = vld [vmem:[#allocation2 + $0x20] sm:$0xff]
    %v69 = vld [vmem:[#allocation2 + $0x28] sm:$0xff]
    %v70 = vld [vmem:[#allocation2 + $0x30] sm:$0xff]
    %v71 = vld [vmem:[#allocation2 + $0x38] sm:$0xff]
    %v72 = vld [vmem:[#allocation2 + $0x40] sm:$0xff]
    %v73 = vld [vmem:[#allocation2 + $0x48] sm:$0xff]
    %v74 = vld [vmem:[#allocation2 + $0x50] sm:$0xff]
    %v75 = vld [vmem:[#allocation2 + $0x58] sm:$0xff]
    %v76 = vld [vmem:[#allocation2 + $0x60] sm:$0xff]
    %v77 = vld [vmem:[#allocation2 + $0x68] sm:$0xff]
    %v78 = vld [vmem:[#allocation2 + $0x70] sm:$0xff]
    %v79 = vld [vmem:[#allocation2 + $0x78] sm:$0xff]
    %v80 = vld [vmem:[#allocation2 + $0x80] sm:$0xff]
    %v81 = vld [vmem:[#allocation2 + $0x88] sm:$0xff]
    %v82 = vld [vmem:[#allocation2 + $0x90] sm:$0xff]
    %v83 = vld [vmem:[#allocation2 + $0x98] sm:$0xff]
    %v84 = vld [vmem:[#allocation2 + $0xa0] sm:$0xff]
    %v85 = vld [vmem:[#allocation2 + $0xa8] sm:$0xff]
    %v86 = vld [vmem:[#allocation2 + $0xb0] sm:$0xff]
    %v87 = vld [vmem:[#allocation2 + $0xb8] sm:$0xff]
    %v88 = vld [vmem:[#allocation2 + $0xc0] sm:$0xff]
    %v89 = vld [vmem:[#allocation2 + $0xc8] sm:$0xff]
    %v90 = vld [vmem:[#allocation2 + $0xd0] sm:$0xff]
    %v91 = vld [vmem:[#allocation2 + $0xd8] sm:$0xff]
    %v92 = vld [vmem:[#allocation2 + $0xe0] sm:$0xff]
    %v93 = vld [vmem:[#allocation2 + $0xe8] sm:$0xff]
    %v94 = vld [vmem:[#allocation2 + $0xf0] sm:$0xff]
    %v95 = vld [vmem:[#allocation2 + $0xf8] sm:$0xff]
    %v96 = vld [vmem:[#allocation2 + $0x100] sm:$0xff]
    %v97 = vld [vmem:[#allocation2 + $0x108] sm:$0xff]
    %v98 = vld [vmem:[#allocation2 + $0x110] sm:$0xff]
    %v99 = vld [vmem:[#allocation2 + $0x118] sm:$0xff]
    %v100 = vld [vmem:[#allocation2 + $0x120] sm:$0xff]
    %v101 = vld [vmem:[#allocation2 + $0x128] sm:$0xff]
    %v102 = vld [vmem:[#allocation2 + $0x130] sm:$0xff]
    %v103 = vld [vmem:[#allocation2 + $0x138] sm:$0xff]
    %v104 = vld [vmem:[#allocation2 + $0x140] sm:$0xff]
    %v105 = vld [vmem:[#allocation2 + $0x148] sm:$0xff]
    %v106 = vld [vmem:[#allocation2 + $0x150] sm:$0xff]
    %v107 = vld [vmem:[#allocation2 + $0x158] sm:$0xff]
    %v108 = vld [vmem:[#allocation2 + $0x160] sm:$0xff]
    %v109 = vld [vmem:[#allocation2 + $0x168] sm:$0xff]
    %v110 = vld [vmem:[#allocation2 + $0x170] sm:$0xff]
    %v111 = vld [vmem:[#allocation2 + $0x178] sm:$0xff]
    %v112 = vld [vmem:[#allocation2 + $0x180] sm:$0xff]
    %v113 = vld [vmem:[#allocation2 + $0x188] sm:$0xff]
    %v114 = vld [vmem:[#allocation2 + $0x190] sm:$0xff]
    %v115 = vld [vmem:[#allocation2 + $0x198] sm:$0xff]
    %v116 = vld [vmem:[#allocation2 + $0x1a0] sm:$0xff]
    %v117 = vld [vmem:[#allocation2 + $0x1a8] sm:$0xff]
    %v118 = vld [vmem:[#allocation2 + $0x1b0] sm:$0xff]
    %v119 = vld [vmem:[#allocation2 + $0x1b8] sm:$0xff]
    %v120 = vld [vmem:[#allocation2 + $0x1c0] sm:$0xff]
    %v121 = vld [vmem:[#allocation2 + $0x1c8] sm:$0xff]
    %v122 = vld [vmem:[#allocation2 + $0x1d0] sm:$0xff]
    %v123 = vld [vmem:[#allocation2 + $0x1d8] sm:$0xff]
    %v124 = vld [vmem:[#allocation2 + $0x1e0] sm:$0xff]
    %v125 = vld [vmem:[#allocation2 + $0x1e8] sm:$0xff]
    %v126 = vld [vmem:[#allocation2 + $0x1f0] sm:$0xff]
    %v127 = vld [vmem:[#allocation2 + $0x1f8] sm:$0xff]
    %v128 = vld [vmem:[%s2] sm:$0xff]
    %v130 = vlaneseq
    %v131 = vshrl.u32 %v130, 7
    %v132 = vsub.s32 0, %v131
    %v133 = vrot.slane %v128, %v132
    %v134 = vlaneseq
    %v135 = vshrl.u32 %v134, 7
    %v136 = vsub.s32 1, %v135
    %v137 = vrot.slane %v128, %v136
    %v138 = vlaneseq
    %v139 = vshrl.u32 %v138, 7
    %v140 = vsub.s32 2, %v139
    %v141 = vrot.slane %v128, %v140
    %v142 = vlaneseq
    %v143 = vshrl.u32 %v142, 7
    %v144 = vsub.s32 3, %v143
    %v145 = vrot.slane %v128, %v144
    %v146 = vlaneseq
    %v147 = vshrl.u32 %v146, 7
    %v148 = vsub.s32 4, %v147
    %v149 = vrot.slane %v128, %v148
    %v150 = vlaneseq
    %v151 = vshrl.u32 %v150, 7
    %v152 = vsub.s32 5, %v151
    %v153 = vrot.slane %v128, %v152
    %v154 = vlaneseq
    %v155 = vshrl.u32 %v154, 7
    %v156 = vsub.s32 6, %v155
    %v157 = vrot.slane %v128, %v156
    %v158 = vlaneseq
    %v159 = vshrl.u32 %v158, 7
    %v160 = vsub.s32 7, %v159
    %v161 = vrot.slane %v128, %v160
    %vm170 = vcmask 523264
    %v172 = vsel %vm170, %v62, 0
    %v175 = vsel %vm170, %v63, 0
    %177 = vmatprep.subr.mxu0 %v65
    %178 = vmatpush1.msra.mxu0 %v64
    %179 = vmatprep.subr.mxu0 %v73
    %180 = vmatpush1.msra.mxu0 %v72
    %181 = vmatprep.subr.mxu0 %v81
    %182 = vmatpush1.msra.mxu0 %v80
    %183 = vmatprep.subr.mxu0 %v89
    %184 = vmatpush1.msra.mxu0 %v88
    %185 = vmatprep.subr.mxu0 %v97
    %186 = vmatpush1.msra.mxu0 %v96
    %187 = vmatprep.subr.mxu0 %v105
    %188 = vmatpush1.msra.mxu0 %v104
    %189 = vmatprep.subr.mxu0 %v113
    %190 = vmatpush1.msra.mxu0 %v112
    %191 = vmatprep.subr.mxu0 %v121
    %192 = vmatpush1.msra.mxu0 %v120
    %193 = vmatprep.subr.mxu0 0.0
    %194 = vmatpush1.msra.mxu0 0.0
    %195 = vmatprep.subr.mxu0 0.0
    %196 = vmatpush1.msra.mxu0 0.0
    %197 = vmatprep.subr.mxu0 0.0
    %198 = vmatpush1.msra.mxu0 0.0
    %199 = vmatprep.subr.mxu0 0.0
    %200 = vmatpush1.msra.mxu0 0.0
    %201 = vmatprep.subr.mxu0 0.0
    %202 = vmatpush1.msra.mxu0 0.0
    %203 = vmatprep.subr.mxu0 0.0
    %204 = vmatpush1.msra.mxu0 0.0
    %205 = vmatprep.subr.mxu0 0.0
    %206 = vmatpush1.msra.mxu0 0.0
    %207 = vmatprep.subr.mxu0 0.0
    %208 = vmatpush1.msra.mxu0 0.0
    %209 = vmatprep.subr.mxu0 0.0
    %210 = vmatpush1.msra.mxu0 0.0
    %211 = vmatprep.subr.mxu0 0.0
    %212 = vmatpush1.msra.mxu0 0.0
    %213 = vmatprep.subr.mxu0 0.0
    %214 = vmatpush1.msra.mxu0 0.0
    %215 = vmatprep.subr.mxu0 0.0
    %216 = vmatpush1.msra.mxu0 0.0
    %217 = vmatprep.subr.mxu0 0.0
    %218 = vmatpush1.msra.mxu0 0.0
    %219 = vmatprep.subr.mxu0 0.0
    %220 = vmatpush1.msra.mxu0 0.0
    %221 = vmatprep.subr.mxu0 0.0
    %222 = vmatpush1.msra.mxu0 0.0
    %223 = vmatprep.subr.mxu0 0.0
    %224 = vmatpush1.msra.mxu0 0.0
    %225 = vmatprep.subr.mxu0 0.0
    %226 = vmatpush1.msra.mxu0 0.0
    %227 = vmatprep.subr.mxu0 0.0
    %228 = vmatpush1.msra.mxu0 0.0
    %229 = vmatprep.subr.mxu0 0.0
    %230 = vmatpush1.msra.mxu0 0.0
    %231 = vmatprep.subr.mxu0 0.0
    %232 = vmatpush1.msra.mxu0 0.0
    %233 = vmatprep.subr.mxu0 0.0
    %234 = vmatpush1.msra.mxu0 0.0
    %235 = vmatprep.subr.mxu0 0.0
    %236 = vmatpush1.msra.mxu0 0.0
    %237 = vmatprep.subr.mxu0 0.0
    %238 = vmatpush1.msra.mxu0 0.0
    %239 = vmatprep.subr.mxu0 0.0
    %240 = vmatpush1.msra.mxu0 0.0
    %241 = vmatprep.mubr.f32.mxu0 0.0
    %242 = vmatmul.mubr.f32.gmra.mrb[0].mxu0 %v172
    %v243 = vpop.f32.mrb[0].mxu0
    %v244 = vadd.f32 %v133, %v243
    %v245 = vpop.f32.mrb[0].mxu0
    %v246 = vadd.f32 %v137, %v245
    %247 = vmatprep.mubr.f32.mxu0 0.0
    %248 = vmatmul.mubr.f32.gmra.mrb[0].mxu0 %v175
    %v249 = vpop.f32.mrb[0].mxu0
    %v250 = vadd.f32 %v133, %v249
    %v251 = vpop.f32.mrb[0].mxu0
    %v252 = vadd.f32 %v137, %v251
    %253 = vdwg.mxu0
    %254 = vmatprep.subr.mxu0 %v67
    %255 = vmatpush1.msra.mxu0 %v66
    %256 = vmatprep.subr.mxu0 %v75
    %257 = vmatpush1.msra.mxu0 %v74
    %258 = vmatprep.subr.mxu0 %v83
    %259 = vmatpush1.msra.mxu0 %v82
    %260 = vmatprep.subr.mxu0 %v91
    %261 = vmatpush1.msra.mxu0 %v90
    %262 = vmatprep.subr.mxu0 %v99
    %263 = vmatpush1.msra.mxu0 %v98
    %264 = vmatprep.subr.mxu0 %v107
    %265 = vmatpush1.msra.mxu0 %v106
    %266 = vmatprep.subr.mxu0 %v115
    %267 = vmatpush1.msra.mxu0 %v114
    %268 = vmatprep.subr.mxu0 %v123
    %269 = vmatpush1.msra.mxu0 %v122
    %270 = vmatprep.subr.mxu0 0.0
    %271 = vmatpush1.msra.mxu0 0.0
    %272 = vmatprep.subr.mxu0 0.0
    %273 = vmatpush1.msra.mxu0 0.0
    %274 = vmatprep.subr.mxu0 0.0
    %275 = vmatpush1.msra.mxu0 0.0
    %276 = vmatprep.subr.mxu0 0.0
    %277 = vmatpush1.msra.mxu0 0.0
    %278 = vmatprep.subr.mxu0 0.0
    %279 = vmatpush1.msra.mxu0 0.0
    %280 = vmatprep.subr.mxu0 0.0
    %281 = vmatpush1.msra.mxu0 0.0
    %282 = vmatprep.subr.mxu0 0.0
    %283 = vmatpush1.msra.mxu0 0.0
    %284 = vmatprep.subr.mxu0 0.0
    %285 = vmatpush1.msra.mxu0 0.0
    %286 = vmatprep.subr.mxu0 0.0
    %287 = vmatpush1.msra.mxu0 0.0
    %288 = vmatprep.subr.mxu0 0.0
    %289 = vmatpush1.msra.mxu0 0.0
    %290 = vmatprep.subr.mxu0 0.0
    %291 = vmatpush1.msra.mxu0 0.0
    %292 = vmatprep.subr.mxu0 0.0
    %293 = vmatpush1.msra.mxu0 0.0
    %294 = vmatprep.subr.mxu0 0.0
    %295 = vmatpush1.msra.mxu0 0.0
    %296 = vmatprep.subr.mxu0 0.0
    %297 = vmatpush1.msra.mxu0 0.0
    %298 = vmatprep.subr.mxu0 0.0
    %299 = vmatpush1.msra.mxu0 0.0
    %300 = vmatprep.subr.mxu0 0.0
    %301 = vmatpush1.msra.mxu0 0.0
    %302 = vmatprep.subr.mxu0 0.0
    %303 = vmatpush1.msra.mxu0 0.0
    %304 = vmatprep.subr.mxu0 0.0
    %305 = vmatpush1.msra.mxu0 0.0
    %306 = vmatprep.subr.mxu0 0.0
    %307 = vmatpush1.msra.mxu0 0.0
    %308 = vmatprep.subr.mxu0 0.0
    %309 = vmatpush1.msra.mxu0 0.0
    %310 = vmatprep.subr.mxu0 0.0
    %311 = vmatpush1.msra.mxu0 0.0
    %312 = vmatprep.subr.mxu0 0.0
    %313 = vmatpush1.msra.mxu0 0.0
    %314 = vmatprep.subr.mxu0 0.0
    %315 = vmatpush1.msra.mxu0 0.0
    %316 = vmatprep.subr.mxu0 0.0
    %317 = vmatpush1.msra.mxu0 0.0
    %318 = vmatprep.mubr.f32.mxu0 0.0
    %319 = vmatmul.mubr.f32.gmra.mrb[0].mxu0 %v172
    %v320 = vpop.f32.mrb[0].mxu0
    %v321 = vadd.f32 %v141, %v320
    %v322 = vpop.f32.mrb[0].mxu0
    %v323 = vadd.f32 %v145, %v322
    %324 = vmatprep.mubr.f32.mxu0 0.0
    %325 = vmatmul.mubr.f32.gmra.mrb[0].mxu0 %v175
    %v326 = vpop.f32.mrb[0].mxu0
    %v327 = vadd.f32 %v141, %v326
    %v328 = vpop.f32.mrb[0].mxu0
    %v329 = vadd.f32 %v145, %v328
    %330 = vdwg.mxu0
    %331 = vmatprep.subr.mxu0 %v69
    %332 = vmatpush1.msra.mxu0 %v68
    %333 = vmatprep.subr.mxu0 %v77
    %334 = vmatpush1.msra.mxu0 %v76
    %335 = vmatprep.subr.mxu0 %v85
    %336 = vmatpush1.msra.mxu0 %v84
    %337 = vmatprep.subr.mxu0 %v93
    %338 = vmatpush1.msra.mxu0 %v92
    %339 = vmatprep.subr.mxu0 %v101
    %340 = vmatpush1.msra.mxu0 %v100
    %341 = vmatprep.subr.mxu0 %v109
    %342 = vmatpush1.msra.mxu0 %v108
    %343 = vmatprep.subr.mxu0 %v117
    %344 = vmatpush1.msra.mxu0 %v116
    %345 = vmatprep.subr.mxu0 %v125
    %346 = vmatpush1.msra.mxu0 %v124
    %347 = vmatprep.subr.mxu0 0.0
    %348 = vmatpush1.msra.mxu0 0.0
    %349 = vmatprep.subr.mxu0 0.0
    %350 = vmatpush1.msra.mxu0 0.0
    %351 = vmatprep.subr.mxu0 0.0
    %352 = vmatpush1.msra.mxu0 0.0
    %353 = vmatprep.subr.mxu0 0.0
    %354 = vmatpush1.msra.mxu0 0.0
    %355 = vmatprep.subr.mxu0 0.0
    %356 = vmatpush1.msra.mxu0 0.0
    %357 = vmatprep.subr.mxu0 0.0
    %358 = vmatpush1.msra.mxu0 0.0
    %359 = vmatprep.subr.mxu0 0.0
    %360 = vmatpush1.msra.mxu0 0.0
    %361 = vmatprep.subr.mxu0 0.0
    %362 = vmatpush1.msra.mxu0 0.0
    %363 = vmatprep.subr.mxu0 0.0
    %364 = vmatpush1.msra.mxu0 0.0
    %365 = vmatprep.subr.mxu0 0.0
    %366 = vmatpush1.msra.mxu0 0.0
    %367 = vmatprep.subr.mxu0 0.0
    %368 = vmatpush1.msra.mxu0 0.0
    %369 = vmatprep.subr.mxu0 0.0
    %370 = vmatpush1.msra.mxu0 0.0
    %371 = vmatprep.subr.mxu0 0.0
    %372 = vmatpush1.msra.mxu0 0.0
    %373 = vmatprep.subr.mxu0 0.0
    %374 = vmatpush1.msra.mxu0 0.0
    %375 = vmatprep.subr.mxu0 0.0
    %376 = vmatpush1.msra.mxu0 0.0
    %377 = vmatprep.subr.mxu0 0.0
    %378 = vmatpush1.msra.mxu0 0.0
    %379 = vmatprep.subr.mxu0 0.0
    %380 = vmatpush1.msra.mxu0 0.0
    %381 = vmatprep.subr.mxu0 0.0
    %382 = vmatpush1.msra.mxu0 0.0
    %383 = vmatprep.subr.mxu0 0.0
    %384 = vmatpush1.msra.mxu0 0.0
    %385 = vmatprep.subr.mxu0 0.0
    %386 = vmatpush1.msra.mxu0 0.0
    %387 = vmatprep.subr.mxu0 0.0
    %388 = vmatpush1.msra.mxu0 0.0
    %389 = vmatprep.subr.mxu0 0.0
    %390 = vmatpush1.msra.mxu0 0.0
    %391 = vmatprep.subr.mxu0 0.0
    %392 = vmatpush1.msra.mxu0 0.0
    %393 = vmatprep.subr.mxu0 0.0
    %394 = vmatpush1.msra.mxu0 0.0
    %395 = vmatprep.mubr.f32.mxu0 0.0
    %396 = vmatmul.mubr.f32.gmra.mrb[0].mxu0 %v172
    %v397 = vpop.f32.mrb[0].mxu0
    %v398 = vadd.f32 %v149, %v397
    %v399 = vpop.f32.mrb[0].mxu0
    %v400 = vadd.f32 %v153, %v399
    %401 = vmatprep.mubr.f32.mxu0 0.0
    %402 = vmatmul.mubr.f32.gmra.mrb[0].mxu0 %v175
    %v403 = vpop.f32.mrb[0].mxu0
    %v404 = vadd.f32 %v149, %v403
    %v405 = vpop.f32.mrb[0].mxu0
    %v406 = vadd.f32 %v153, %v405
    %407 = vdwg.mxu0
    %408 = vmatprep.subr.mxu0 %v71
    %409 = vmatpush1.msra.mxu0 %v70
    %410 = vmatprep.subr.mxu0 %v79
    %411 = vmatpush1.msra.mxu0 %v78
    %412 = vmatprep.subr.mxu0 %v87
    %413 = vmatpush1.msra.mxu0 %v86
    %414 = vmatprep.subr.mxu0 %v95
    %415 = vmatpush1.msra.mxu0 %v94
    %416 = vmatprep.subr.mxu0 %v103
    %417 = vmatpush1.msra.mxu0 %v102
    %418 = vmatprep.subr.mxu0 %v111
    %419 = vmatpush1.msra.mxu0 %v110
    %420 = vmatprep.subr.mxu0 %v119
    %421 = vmatpush1.msra.mxu0 %v118
    %422 = vmatprep.subr.mxu0 %v127
    %423 = vmatpush1.msra.mxu0 %v126
    %424 = vmatprep.subr.mxu0 0.0
    %425 = vmatpush1.msra.mxu0 0.0
    %426 = vmatprep.subr.mxu0 0.0
    %427 = vmatpush1.msra.mxu0 0.0
    %428 = vmatprep.subr.mxu0 0.0
    %429 = vmatpush1.msra.mxu0 0.0
    %430 = vmatprep.subr.mxu0 0.0
    %431 = vmatpush1.msra.mxu0 0.0
    %432 = vmatprep.subr.mxu0 0.0
    %433 = vmatpush1.msra.mxu0 0.0
    %434 = vmatprep.subr.mxu0 0.0
    %435 = vmatpush1.msra.mxu0 0.0
    %436 = vmatprep.subr.mxu0 0.0
    %437 = vmatpush1.msra.mxu0 0.0
    %438 = vmatprep.subr.mxu0 0.0
    %439 = vmatpush1.msra.mxu0 0.0
    %440 = vmatprep.subr.mxu0 0.0
    %441 = vmatpush1.msra.mxu0 0.0
    %442 = vmatprep.subr.mxu0 0.0
    %443 = vmatpush1.msra.mxu0 0.0
    %444 = vmatprep.subr.mxu0 0.0
    %445 = vmatpush1.msra.mxu0 0.0
    %446 = vmatprep.subr.mxu0 0.0
    %447 = vmatpush1.msra.mxu0 0.0
    %448 = vmatprep.subr.mxu0 0.0
    %449 = vmatpush1.msra.mxu0 0.0
    %450 = vmatprep.subr.mxu0 0.0
    %451 = vmatpush1.msra.mxu0 0.0
    %452 = vmatprep.subr.mxu0 0.0
    %453 = vmatpush1.msra.mxu0 0.0
    %454 = vmatprep.subr.mxu0 0.0
    %455 = vmatpush1.msra.mxu0 0.0
    %456 = vmatprep.subr.mxu0 0.0
    %457 = vmatpush1.msra.mxu0 0.0
    %458 = vmatprep.subr.mxu0 0.0
    %459 = vmatpush1.msra.mxu0 0.0
    %460 = vmatprep.subr.mxu0 0.0
    %461 = vmatpush1.msra.mxu0 0.0
    %462 = vmatprep.subr.mxu0 0.0
    %463 = vmatpush1.msra.mxu0 0.0
    %464 = vmatprep.subr.mxu0 0.0
    %465 = vmatpush1.msra.mxu0 0.0
    %466 = vmatprep.subr.mxu0 0.0
    %467 = vmatpush1.msra.mxu0 0.0
    %468 = vmatprep.subr.mxu0 0.0
    %469 = vmatpush1.msra.mxu0 0.0
    %470 = vmatprep.subr.mxu0 0.0
    %471 = vmatpush1.msra.mxu0 0.0
    %472 = vmatprep.mubr.f32.mxu0 0.0
    %473 = vmatmul.mubr.f32.gmra.mrb[0].mxu0 %v172
    %v474 = vpop.f32.mrb[0].mxu0
    %v475 = vadd.f32 %v157, %v474
    %v476 = vpop.f32.mrb[0].mxu0
    %v477 = vadd.f32 %v161, %v476
    %478 = vmatprep.mubr.f32.mxu0 0.0
    %479 = vmatmul.mubr.f32.gmra.mrb[0].mxu0 %v175
    %v480 = vpop.f32.mrb[0].mxu0
    %v481 = vadd.f32 %v157, %v480
    %v482 = vpop.f32.mrb[0].mxu0
    %v483 = vadd.f32 %v161, %v482
    %484 = vdwg.mxu0
    %v485 = vld [vmem:[#allocation5] sm:$0xff]
    %v486 = vld [vmem:[#allocation5 + $0x8] sm:$0xff]
    %v487 = vld [vmem:[#allocation5 + $0x10] sm:$0xff]
    %v488 = vld [vmem:[#allocation5 + $0x18] sm:$0xff]
    %v489 = vld [vmem:[#allocation5 + $0x20] sm:$0xff]
    %v490 = vld [vmem:[#allocation5 + $0x28] sm:$0xff]
    %v491 = vld [vmem:[#allocation5 + $0x30] sm:$0xff]
    %v492 = vld [vmem:[#allocation5 + $0x38] sm:$0xff]
    %v493 = vld [vmem:[#allocation5 + $0x40] sm:$0xff]
    %v494 = vld [vmem:[#allocation5 + $0x48] sm:$0xff]
    %v495 = vld [vmem:[#allocation5 + $0x50] sm:$0xff]
    %v496 = vld [vmem:[#allocation5 + $0x58] sm:$0xff]
    %v497 = vld [vmem:[#allocation5 + $0x60] sm:$0xff]
    %v498 = vld [vmem:[#allocation5 + $0x68] sm:$0xff]
    %v499 = vld [vmem:[#allocation5 + $0x70] sm:$0xff]
    %v500 = vld [vmem:[#allocation5 + $0x78] sm:$0xff]
    %v501 = vld [vmem:[#allocation5 + $0x80] sm:$0xff]
    %v502 = vld [vmem:[#allocation5 + $0x88] sm:$0xff]
    %v503 = vld [vmem:[#allocation5 + $0x90] sm:$0xff]
    %v504 = vld [vmem:[#allocation5 + $0x98] sm:$0xff]
    %v505 = vld [vmem:[#allocation5 + $0xa0] sm:$0xff]
    %v506 = vld [vmem:[#allocation5 + $0xa8] sm:$0xff]
    %v507 = vld [vmem:[#allocation5 + $0xb0] sm:$0xff]
    %v508 = vld [vmem:[#allocation5 + $0xb8] sm:$0xff]
    %v509 = vld [vmem:[#allocation5 + $0xc0] sm:$0xff]
    %v510 = vld [vmem:[#allocation5 + $0xc8] sm:$0xff]
    %v511 = vld [vmem:[#allocation5 + $0xd0] sm:$0xff]
    %v512 = vld [vmem:[#allocation5 + $0xd8] sm:$0xff]
    %v513 = vld [vmem:[#allocation5 + $0xe0] sm:$0xff]
    %v514 = vld [vmem:[#allocation5 + $0xe8] sm:$0xff]
    %v515 = vld [vmem:[#allocation5 + $0xf0] sm:$0xff]
    %v516 = vld [vmem:[#allocation5 + $0xf8] sm:$0xff]
    %v517 = vld [vmem:[#allocation5 + $0x100] sm:$0xff]
    %v518 = vld [vmem:[#allocation5 + $0x108] sm:$0xff]
    %v519 = vld [vmem:[#allocation5 + $0x110] sm:$0xff]
    %v520 = vld [vmem:[#allocation5 + $0x118] sm:$0xff]
    %v521 = vld [vmem:[#allocation5 + $0x120] sm:$0xff]
    %v522 = vld [vmem:[#allocation5 + $0x128] sm:$0xff]
    %v523 = vld [vmem:[#allocation5 + $0x130] sm:$0xff]
    %v524 = vld [vmem:[#allocation5 + $0x138] sm:$0xff]
    %v525 = vld [vmem:[#allocation5 + $0x140] sm:$0xff]
    %v526 = vld [vmem:[#allocation5 + $0x148] sm:$0xff]
    %v527 = vld [vmem:[#allocation5 + $0x150] sm:$0xff]
    %v528 = vld [vmem:[#allocation5 + $0x158] sm:$0xff]
    %v529 = vld [vmem:[#allocation5 + $0x160] sm:$0xff]
    %v530 = vld [vmem:[#allocation5 + $0x168] sm:$0xff]
    %v531 = vld [vmem:[#allocation5 + $0x170] sm:$0xff]
    %v532 = vld [vmem:[#allocation5 + $0x178] sm:$0xff]
    %v533 = vld [vmem:[#allocation5 + $0x180] sm:$0xff]
    %v534 = vld [vmem:[#allocation5 + $0x188] sm:$0xff]
    %v535 = vld [vmem:[#allocation5 + $0x190] sm:$0xff]
    %v536 = vld [vmem:[#allocation5 + $0x198] sm:$0xff]
    %v537 = vld [vmem:[#allocation5 + $0x1a0] sm:$0xff]
    %v538 = vld [vmem:[#allocation5 + $0x1a8] sm:$0xff]
    %v539 = vld [vmem:[#allocation5 + $0x1b0] sm:$0xff]
    %v540 = vld [vmem:[#allocation5 + $0x1b8] sm:$0xff]
    %v541 = vld [vmem:[#allocation5 + $0x1c0] sm:$0xff]
    %v542 = vld [vmem:[#allocation5 + $0x1c8] sm:$0xff]
    %v543 = vld [vmem:[#allocation5 + $0x1d0] sm:$0xff]
    %v544 = vld [vmem:[#allocation5 + $0x1d8] sm:$0xff]
    %v545 = vld [vmem:[#allocation5 + $0x1e0] sm:$0xff]
    %v546 = vld [vmem:[#allocation5 + $0x1e8] sm:$0xff]
    %v547 = vld [vmem:[#allocation5 + $0x1f0] sm:$0xff]
    %v548 = vld [vmem:[#allocation5 + $0x1f8] sm:$0xff]
    %v549 = vld [vmem:[#allocation7] sm:$0xff]
    %v550 = vld [vmem:[#allocation7 + $0x8] sm:$0xff]
    %v551 = vld [vmem:[#allocation7 + $0x10] sm:$0xff]
    %v552 = vld [vmem:[#allocation7 + $0x18] sm:$0xff]
    %v553 = vld [vmem:[#allocation7 + $0x20] sm:$0xff]
    %v554 = vld [vmem:[#allocation7 + $0x28] sm:$0xff]
    %v555 = vld [vmem:[#allocation7 + $0x30] sm:$0xff]
    %v556 = vld [vmem:[#allocation7 + $0x38] sm:$0xff]
    %v557 = vld [vmem:[#allocation7 + $0x40] sm:$0xff]
    %v558 = vld [vmem:[#allocation7 + $0x48] sm:$0xff]
    %v559 = vld [vmem:[#allocation7 + $0x50] sm:$0xff]
    %v560 = vld [vmem:[#allocation7 + $0x58] sm:$0xff]
    %v561 = vld [vmem:[#allocation7 + $0x60] sm:$0xff]
    %v562 = vld [vmem:[#allocation7 + $0x68] sm:$0xff]
    %v563 = vld [vmem:[#allocation7 + $0x70] sm:$0xff]
    %v564 = vld [vmem:[#allocation7 + $0x78] sm:$0xff]
    %v565 = vld [vmem:[#allocation7 + $0x80] sm:$0xff]
    %v566 = vld [vmem:[#allocation7 + $0x88] sm:$0xff]
    %v567 = vld [vmem:[#allocation7 + $0x90] sm:$0xff]
    %v568 = vld [vmem:[#allocation7 + $0x98] sm:$0xff]
    %v569 = vld [vmem:[#allocation7 + $0xa0] sm:$0xff]
    %v570 = vld [vmem:[#allocation7 + $0xa8] sm:$0xff]
    %v571 = vld [vmem:[#allocation7 + $0xb0] sm:$0xff]
    %v572 = vld [vmem:[#allocation7 + $0xb8] sm:$0xff]
    %v573 = vld [vmem:[#allocation7 + $0xc0] sm:$0xff]
    %v574 = vld [vmem:[#allocation7 + $0xc8] sm:$0xff]
    %v575 = vld [vmem:[#allocation7 + $0xd0] sm:$0xff]
    %v576 = vld [vmem:[#allocation7 + $0xd8] sm:$0xff]
    %v577 = vld [vmem:[#allocation7 + $0xe0] sm:$0xff]
    %v578 = vld [vmem:[#allocation7 + $0xe8] sm:$0xff]
    %v579 = vld [vmem:[#allocation7 + $0xf0] sm:$0xff]
    %v580 = vld [vmem:[#allocation7 + $0xf8] sm:$0xff]
    %v581 = vld [vmem:[#allocation7 + $0x100] sm:$0xff]
    %v582 = vld [vmem:[#allocation7 + $0x108] sm:$0xff]
    %v583 = vld [vmem:[#allocation7 + $0x110] sm:$0xff]
    %v584 = vld [vmem:[#allocation7 + $0x118] sm:$0xff]
    %v585 = vld [vmem:[#allocation7 + $0x120] sm:$0xff]
    %v586 = vld [vmem:[#allocation7 + $0x128] sm:$0xff]
    %v587 = vld [vmem:[#allocation7 + $0x130] sm:$0xff]
    %v588 = vld [vmem:[#allocation7 + $0x138] sm:$0xff]
    %v589 = vld [vmem:[#allocation7 + $0x140] sm:$0xff]
    %v590 = vld [vmem:[#allocation7 + $0x148] sm:$0xff]
    %v591 = vld [vmem:[#allocation7 + $0x150] sm:$0xff]
    %v592 = vld [vmem:[#allocation7 + $0x158] sm:$0xff]
    %v593 = vld [vmem:[#allocation7 + $0x160] sm:$0xff]
    %v594 = vld [vmem:[#allocation7 + $0x168] sm:$0xff]
    %v595 = vld [vmem:[#allocation7 + $0x170] sm:$0xff]
    %v596 = vld [vmem:[#allocation7 + $0x178] sm:$0xff]
    %v597 = vld [vmem:[#allocation7 + $0x180] sm:$0xff]
    %v598 = vld [vmem:[#allocation7 + $0x188] sm:$0xff]
    %v599 = vld [vmem:[#allocation7 + $0x190] sm:$0xff]
    %v600 = vld [vmem:[#allocation7 + $0x198] sm:$0xff]
    %v601 = vld [vmem:[#allocation7 + $0x1a0] sm:$0xff]
    %v602 = vld [vmem:[#allocation7 + $0x1a8] sm:$0xff]
    %v603 = vld [vmem:[#allocation7 + $0x1b0] sm:$0xff]
    %v604 = vld [vmem:[#allocation7 + $0x1b8] sm:$0xff]
    %v605 = vld [vmem:[#allocation7 + $0x1c0] sm:$0xff]
    %v606 = vld [vmem:[#allocation7 + $0x1c8] sm:$0xff]
    %v607 = vld [vmem:[#allocation7 + $0x1d0] sm:$0xff]
    %v608 = vld [vmem:[#allocation7 + $0x1d8] sm:$0xff]
    %v609 = vld [vmem:[#allocation7 + $0x1e0] sm:$0xff]
    %v610 = vld [vmem:[#allocation7 + $0x1e8] sm:$0xff]
    %v611 = vld [vmem:[#allocation7 + $0x1f0] sm:$0xff]
    %v612 = vld [vmem:[#allocation7 + $0x1f8] sm:$0xff]
    %613 = vmatprep.subr.mxu0 %v486
    %614 = vmatpush1.msra.mxu0 %v485
    %615 = vmatprep.subr.mxu0 %v490
    %616 = vmatpush1.msra.mxu0 %v489
    %617 = vmatprep.subr.mxu0 %v494
    %618 = vmatpush1.msra.mxu0 %v493
    %619 = vmatprep.subr.mxu0 %v498
    %620 = vmatpush1.msra.mxu0 %v497
    %621 = vmatprep.subr.mxu0 %v502
    %622 = vmatpush1.msra.mxu0 %v501
    %623 = vmatprep.subr.mxu0 %v506
    %624 = vmatpush1.msra.mxu0 %v505
    %625 = vmatprep.subr.mxu0 %v510
    %626 = vmatpush1.msra.mxu0 %v509
    %627 = vmatprep.subr.mxu0 %v514
    %628 = vmatpush1.msra.mxu0 %v513
    %629 = vmatprep.subr.mxu0 %v518
    %630 = vmatpush1.msra.mxu0 %v517
    %631 = vmatprep.subr.mxu0 %v522
    %632 = vmatpush1.msra.mxu0 %v521
    %633 = vmatprep.subr.mxu0 %v526
    %634 = vmatpush1.msra.mxu0 %v525
    %635 = vmatprep.subr.mxu0 %v530
    %636 = vmatpush1.msra.mxu0 %v529
    %637 = vmatprep.subr.mxu0 %v534
    %638 = vmatpush1.msra.mxu0 %v533
    %639 = vmatprep.subr.mxu0 %v538
    %640 = vmatpush1.msra.mxu0 %v537
    %641 = vmatprep.subr.mxu0 %v542
    %642 = vmatpush1.msra.mxu0 %v541
    %643 = vmatprep.subr.mxu0 %v546
    %644 = vmatpush1.msra.mxu0 %v545
    %645 = vmatprep.subr.mxu0 0.0
    %646 = vmatpush1.msra.mxu0 0.0
    %647 = vmatprep.subr.mxu0 0.0
    %648 = vmatpush1.msra.mxu0 0.0
    %649 = vmatprep.subr.mxu0 0.0
    %650 = vmatpush1.msra.mxu0 0.0
    %651 = vmatprep.subr.mxu0 0.0
    %652 = vmatpush1.msra.mxu0 0.0
    %653 = vmatprep.subr.mxu0 0.0
    %654 = vmatpush1.msra.mxu0 0.0
    %655 = vmatprep.subr.mxu0 0.0
    %656 = vmatpush1.msra.mxu0 0.0
    %657 = vmatprep.subr.mxu0 0.0
    %658 = vmatpush1.msra.mxu0 0.0
    %659 = vmatprep.subr.mxu0 0.0
    %660 = vmatpush1.msra.mxu0 0.0
    %661 = vmatprep.subr.mxu0 0.0
    %662 = vmatpush1.msra.mxu0 0.0
    %663 = vmatprep.subr.mxu0 0.0
    %664 = vmatpush1.msra.mxu0 0.0
    %665 = vmatprep.subr.mxu0 0.0
    %666 = vmatpush1.msra.mxu0 0.0
    %667 = vmatprep.subr.mxu0 0.0
    %668 = vmatpush1.msra.mxu0 0.0
    %669 = vmatprep.subr.mxu0 0.0
    %670 = vmatpush1.msra.mxu0 0.0
    %671 = vmatprep.subr.mxu0 0.0
    %672 = vmatpush1.msra.mxu0 0.0
    %673 = vmatprep.subr.mxu0 0.0
    %674 = vmatpush1.msra.mxu0 0.0
    %675 = vmatprep.subr.mxu0 0.0
    %676 = vmatpush1.msra.mxu0 0.0
    %677 = vmatprep.mubr.f32.mxu0 0.0
    %678 = vmatmul.mubr.f32.gmra.mrb[0].mxu0 0.0
    %v679 = vpop.f32.mrb[0].mxu0
    %v680 = vadd.f32 0.0, %v679
    %v681 = vpop.f32.mrb[0].mxu0
    %v682 = vadd.f32 0.0, %v681
    %683 = vdwg.mxu0
    %684 = vmatprep.subr.mxu0 %v488
    %685 = vmatpush1.msra.mxu0 %v487
    %686 = vmatprep.subr.mxu0 %v492
    %687 = vmatpush1.msra.mxu0 %v491
    %688 = vmatprep.subr.mxu0 %v496
    %689 = vmatpush1.msra.mxu0 %v495
    %690 = vmatprep.subr.mxu0 %v500
    %691 = vmatpush1.msra.mxu0 %v499
    %692 = vmatprep.subr.mxu0 %v504
    %693 = vmatpush1.msra.mxu0 %v503
    %694 = vmatprep.subr.mxu0 %v508
    %695 = vmatpush1.msra.mxu0 %v507
    %696 = vmatprep.subr.mxu0 %v512
    %697 = vmatpush1.msra.mxu0 %v511
    %698 = vmatprep.subr.mxu0 %v516
    %699 = vmatpush1.msra.mxu0 %v515
    %700 = vmatprep.subr.mxu0 %v520
    %701 = vmatpush1.msra.mxu0 %v519
    %702 = vmatprep.subr.mxu0 %v524
    %703 = vmatpush1.msra.mxu0 %v523
    %704 = vmatprep.subr.mxu0 %v528
    %705 = vmatpush1.msra.mxu0 %v527
    %706 = vmatprep.subr.mxu0 %v532
    %707 = vmatpush1.msra.mxu0 %v531
    %708 = vmatprep.subr.mxu0 %v536
    %709 = vmatpush1.msra.mxu0 %v535
    %710 = vmatprep.subr.mxu0 %v540
    %711 = vmatpush1.msra.mxu0 %v539
    %712 = vmatprep.subr.mxu0 %v544
    %713 = vmatpush1.msra.mxu0 %v543
    %714 = vmatprep.subr.mxu0 %v548
    %715 = vmatpush1.msra.mxu0 %v547
    %716 = vmatprep.subr.mxu0 0.0
    %717 = vmatpush1.msra.mxu0 0.0
    %718 = vmatprep.subr.mxu0 0.0
    %719 = vmatpush1.msra.mxu0 0.0
    %720 = vmatprep.subr.mxu0 0.0
    %721 = vmatpush1.msra.mxu0 0.0
    %722 = vmatprep.subr.mxu0 0.0
    %723 = vmatpush1.msra.mxu0 0.0
    %724 = vmatprep.subr.mxu0 0.0
    %725 = vmatpush1.msra.mxu0 0.0
    %726 = vmatprep.subr.mxu0 0.0
    %727 = vmatpush1.msra.mxu0 0.0
    %728 = vmatprep.subr.mxu0 0.0
    %729 = vmatpush1.msra.mxu0 0.0
    %730 = vmatprep.subr.mxu0 0.0
    %731 = vmatpush1.msra.mxu0 0.0
    %732 = vmatprep.subr.mxu0 0.0
    %733 = vmatpush1.msra.mxu0 0.0
    %734 = vmatprep.subr.mxu0 0.0
    %735 = vmatpush1.msra.mxu0 0.0
    %736 = vmatprep.subr.mxu0 0.0
    %737 = vmatpush1.msra.mxu0 0.0
    %738 = vmatprep.subr.mxu0 0.0
    %739 = vmatpush1.msra.mxu0 0.0
    %740 = vmatprep.subr.mxu0 0.0
    %741 = vmatpush1.msra.mxu0 0.0
    %742 = vmatprep.subr.mxu0 0.0
    %743 = vmatpush1.msra.mxu0 0.0
    %744 = vmatprep.subr.mxu0 0.0
    %745 = vmatpush1.msra.mxu0 0.0
    %746 = vmatprep.subr.mxu0 0.0
    %747 = vmatpush1.msra.mxu0 0.0
    %748 = vmatprep.mubr.f32.mxu0 0.0
    %749 = vmatmul.mubr.f32.gmra.mrb[0].mxu0 0.0
    %v750 = vpop.f32.mrb[0].mxu0
    %v751 = vadd.f32 0.0, %v750
    %v752 = vpop.f32.mrb[0].mxu0
    %v753 = vadd.f32 0.0, %v752
    %754 = vdwg.mxu0
    %v755 = vadd.f32 %v244, %v680
    %v756 = vadd.f32 %v246, %v682
    %v757 = vadd.f32 %v321, %v751
    %v758 = vadd.f32 %v323, %v753
    %759 = vmatprep.subr.mxu0 %v550
    %760 = vmatpush1.msra.mxu0 %v549
    %761 = vmatprep.subr.mxu0 %v554
    %762 = vmatpush1.msra.mxu0 %v553
    %763 = vmatprep.subr.mxu0 %v558
    %764 = vmatpush1.msra.mxu0 %v557
    %765 = vmatprep.subr.mxu0 %v562
    %766 = vmatpush1.msra.mxu0 %v561
    %767 = vmatprep.subr.mxu0 %v566
    %768 = vmatpush1.msra.mxu0 %v565
    %769 = vmatprep.subr.mxu0 %v570
    %770 = vmatpush1.msra.mxu0 %v569
    %771 = vmatprep.subr.mxu0 %v574
    %772 = vmatpush1.msra.mxu0 %v573
    %773 = vmatprep.subr.mxu0 %v578
    %774 = vmatpush1.msra.mxu0 %v577
    %775 = vmatprep.subr.mxu0 %v582
    %776 = vmatpush1.msra.mxu0 %v581
    %777 = vmatprep.subr.mxu0 %v586
    %778 = vmatpush1.msra.mxu0 %v585
    %779 = vmatprep.subr.mxu0 %v590
    %780 = vmatpush1.msra.mxu0 %v589
    %781 = vmatprep.subr.mxu0 %v594
    %782 = vmatpush1.msra.mxu0 %v593
    %783 = vmatprep.subr.mxu0 %v598
    %784 = vmatpush1.msra.mxu0 %v597
    %785 = vmatprep.subr.mxu0 %v602
    %786 = vmatpush1.msra.mxu0 %v601
    %787 = vmatprep.subr.mxu0 %v606
    %788 = vmatpush1.msra.mxu0 %v605
    %789 = vmatprep.subr.mxu0 %v610
    %790 = vmatpush1.msra.mxu0 %v609
    %791 = vmatprep.subr.mxu0 0.0
    %792 = vmatpush1.msra.mxu0 0.0
    %793 = vmatprep.subr.mxu0 0.0
    %794 = vmatpush1.msra.mxu0 0.0
    %795 = vmatprep.subr.mxu0 0.0
    %796 = vmatpush1.msra.mxu0 0.0
    %797 = vmatprep.subr.mxu0 0.0
    %798 = vmatpush1.msra.mxu0 0.0
    %799 = vmatprep.subr.mxu0 0.0
    %800 = vmatpush1.msra.mxu0 0.0
    %801 = vmatprep.subr.mxu0 0.0
    %802 = vmatpush1.msra.mxu0 0.0
    %803 = vmatprep.subr.mxu0 0.0
    %804 = vmatpush1.msra.mxu0 0.0
    %805 = vmatprep.subr.mxu0 0.0
    %806 = vmatpush1.msra.mxu0 0.0
    %807 = vmatprep.subr.mxu0 0.0
    %808 = vmatpush1.msra.mxu0 0.0
    %809 = vmatprep.subr.mxu0 0.0
    %810 = vmatpush1.msra.mxu0 0.0
    %811 = vmatprep.subr.mxu0 0.0
    %812 = vmatpush1.msra.mxu0 0.0
    %813 = vmatprep.subr.mxu0 0.0
    %814 = vmatpush1.msra.mxu0 0.0
    %815 = vmatprep.subr.mxu0 0.0
    %816 = vmatpush1.msra.mxu0 0.0
    %817 = vmatprep.subr.mxu0 0.0
    %818 = vmatpush1.msra.mxu0 0.0
    %819 = vmatprep.subr.mxu0 0.0
    %820 = vmatpush1.msra.mxu0 0.0
    %821 = vmatprep.subr.mxu0 0.0
    %822 = vmatpush1.msra.mxu0 0.0
    %823 = vmatprep.mubr.f32.mxu0 0.0
    %824 = vmatmul.mubr.f32.gmra.mrb[0].mxu0 0.0
    %v825 = vpop.f32.mrb[0].mxu0
    %v826 = vadd.f32 0.0, %v825
    %v827 = vpop.f32.mrb[0].mxu0
    %v828 = vadd.f32 0.0, %v827
    %829 = vdwg.mxu0
    %830 = vmatprep.subr.mxu0 %v552
    %831 = vmatpush1.msra.mxu0 %v551
    %832 = vmatprep.subr.mxu0 %v556
    %833 = vmatpush1.msra.mxu0 %v555
    %834 = vmatprep.subr.mxu0 %v560
    %835 = vmatpush1.msra.mxu0 %v559
    %836 = vmatprep.subr.mxu0 %v564
    %837 = vmatpush1.msra.mxu0 %v563
    %838 = vmatprep.subr.mxu0 %v568
    %839 = vmatpush1.msra.mxu0 %v567
    %840 = vmatprep.subr.mxu0 %v572
    %841 = vmatpush1.msra.mxu0 %v571
    %842 = vmatprep.subr.mxu0 %v576
    %843 = vmatpush1.msra.mxu0 %v575
    %844 = vmatprep.subr.mxu0 %v580
    %845 = vmatpush1.msra.mxu0 %v579
    %846 = vmatprep.subr.mxu0 %v584
    %847 = vmatpush1.msra.mxu0 %v583
    %848 = vmatprep.subr.mxu0 %v588
    %849 = vmatpush1.msra.mxu0 %v587
    %850 = vmatprep.subr.mxu0 %v592
    %851 = vmatpush1.msra.mxu0 %v591
    %852 = vmatprep.subr.mxu0 %v596
    %853 = vmatpush1.msra.mxu0 %v595
    %854 = vmatprep.subr.mxu0 %v600
    %855 = vmatpush1.msra.mxu0 %v599
    %856 = vmatprep.subr.mxu0 %v604
    %857 = vmatpush1.msra.mxu0 %v603
    %858 = vmatprep.subr.mxu0 %v608
    %859 = vmatpush1.msra.mxu0 %v607
    %860 = vmatprep.subr.mxu0 %v612
    %861 = vmatpush1.msra.mxu0 %v611
    %862 = vmatprep.subr.mxu0 0.0
    %863 = vmatpush1.msra.mxu0 0.0
    %864 = vmatprep.subr.mxu0 0.0
    %865 = vmatpush1.msra.mxu0 0.0
    %866 = vmatprep.subr.mxu0 0.0
    %867 = vmatpush1.msra.mxu0 0.0
    %868 = vmatprep.subr.mxu0 0.0
    %869 = vmatpush1.msra.mxu0 0.0
    %870 = vmatprep.subr.mxu0 0.0
    %871 = vmatpush1.msra.mxu0 0.0
    %872 = vmatprep.subr.mxu0 0.0
    %873 = vmatpush1.msra.mxu0 0.0
    %874 = vmatprep.subr.mxu0 0.0
    %875 = vmatpush1.msra.mxu0 0.0
    %876 = vmatprep.subr.mxu0 0.0
    %877 = vmatpush1.msra.mxu0 0.0
    %878 = vmatprep.subr.mxu0 0.0
    %879 = vmatpush1.msra.mxu0 0.0
    %880 = vmatprep.subr.mxu0 0.0
    %881 = vmatpush1.msra.mxu0 0.0
    %882 = vmatprep.subr.mxu0 0.0
    %883 = vmatpush1.msra.mxu0 0.0
    %884 = vmatprep.subr.mxu0 0.0
    %885 = vmatpush1.msra.mxu0 0.0
    %886 = vmatprep.subr.mxu0 0.0
    %887 = vmatpush1.msra.mxu0 0.0
    %888 = vmatprep.subr.mxu0 0.0
    %889 = vmatpush1.msra.mxu0 0.0
    %890 = vmatprep.subr.mxu0 0.0
    %891 = vmatpush1.msra.mxu0 0.0
    %892 = vmatprep.subr.mxu0 0.0
    %893 = vmatpush1.msra.mxu0 0.0
    %894 = vmatprep.mubr.f32.mxu0 0.0
    %895 = vmatmul.mubr.f32.gmra.mrb[0].mxu0 0.0
    %v896 = vpop.f32.mrb[0].mxu0
    %v897 = vadd.f32 0.0, %v896
    %v898 = vpop.f32.mrb[0].mxu0
    %v899 = vadd.f32 0.0, %v898
    %900 = vdwg.mxu0
    %v905 = vrot.slane %v826, 2
    %v906 = vrot.slane %v828, 2
    %v907 = vrot.slane %v897, 2
    %v908 = vrot.slane %v899, 2
    %v913 = vadd.f32 %v404, %v905
    %v914 = vadd.f32 %v406, %v906
    %v915 = vadd.f32 %v481, %v907
    %v916 = vadd.f32 %v483, %v908
    %v917 = vxor.u32 %v755, 2147483648
    %v918 = vmul.f32 %v917, 1.442695
    %v919 = vpow.pop %v918
    %v920 = vadd.f32 %v919, 1.0
    %v921 = vrcp.pop %v920
    %v922 = vmul.f32 1.0, %v921
    %v923 = vxor.u32 %v756, 2147483648
    %v924 = vmul.f32 %v923, 1.442695
    %v925 = vpow.pop %v924
    %v926 = vadd.f32 %v925, 1.0
    %v927 = vrcp.pop %v926
    %v928 = vmul.f32 1.0, %v927
    %v929 = vtanh.pop %v757
    %v930 = vxor.u32 %v758, 2147483648
    %v931 = vmul.f32 %v930, 1.442695
    %v932 = vpow.pop %v931
    %v933 = vadd.f32 %v932, 1.0
    %v934 = vrcp.pop %v933
    %v935 = vmul.f32 1.0, %v934
    %v936 = vmul.f32 %v928, 0.0
    %v937 = vmul.f32 %v922, %v929
    %v938 = vadd.f32 %v936, %v937
    %v939 = vtanh.pop %v938
    %v940 = vmul.f32 %v935, %v939
    %v941 = vxor.u32 %v913, 2147483648
    %v942 = vmul.f32 %v941, 1.442695
    %v943 = vpow.pop %v942
    %v944 = vadd.f32 %v943, 1.0
    %v945 = vrcp.pop %v944
    %v946 = vmul.f32 1.0, %v945
    %v947 = vxor.u32 %v914, 2147483648
    %v948 = vmul.f32 %v947, 1.442695
    %v949 = vpow.pop %v948
    %v950 = vadd.f32 %v949, 1.0
    %v951 = vrcp.pop %v950
    %v952 = vmul.f32 1.0, %v951
    %v953 = vtanh.pop %v915
    %v954 = vxor.u32 %v916, 2147483648
    %v955 = vmul.f32 %v954, 1.442695
    %v956 = vpow.pop %v955
    %v957 = vadd.f32 %v956, 1.0
    %v958 = vrcp.pop %v957
    %v959 = vmul.f32 1.0, %v958
    %v960 = vmul.f32 %v952, 0.0
    %v961 = vmul.f32 %v946, %v953
    %v962 = vadd.f32 %v960, %v961
    %v963 = vtanh.pop %v962
    %v964 = vmul.f32 %v959, %v963
    %965 = vmatprep.subr.mxu0 %v486
    %966 = vmatpush1.msra.mxu0 %v485
    %967 = vmatprep.subr.mxu0 %v490
    %968 = vmatpush1.msra.mxu0 %v489
    %969 = vmatprep.subr.mxu0 %v494
    %970 = vmatpush1.msra.mxu0 %v493
    %971 = vmatprep.subr.mxu0 %v498
    %972 = vmatpush1.msra.mxu0 %v497
    %973 = vmatprep.subr.mxu0 %v502
    %974 = vmatpush1.msra.mxu0 %v501
    %975 = vmatprep.subr.mxu0 %v506
    %976 = vmatpush1.msra.mxu0 %v505
    %977 = vmatprep.subr.mxu0 %v510
    %978 = vmatpush1.msra.mxu0 %v509
    %979 = vmatprep.subr.mxu0 %v514
    %980 = vmatpush1.msra.mxu0 %v513
    %981 = vmatprep.subr.mxu0 %v518
    %982 = vmatpush1.msra.mxu0 %v517
    %983 = vmatprep.subr.mxu0 %v522
    %984 = vmatpush1.msra.mxu0 %v521
    %985 = vmatprep.subr.mxu0 %v526
    %986 = vmatpush1.msra.mxu0 %v525
    %987 = vmatprep.subr.mxu0 %v530
    %988 = vmatpush1.msra.mxu0 %v529
    %989 = vmatprep.subr.mxu0 %v534
    %990 = vmatpush1.msra.mxu0 %v533
    %991 = vmatprep.subr.mxu0 %v538
    %992 = vmatpush1.msra.mxu0 %v537
    %993 = vmatprep.subr.mxu0 %v542
    %994 = vmatpush1.msra.mxu0 %v541
    %995 = vmatprep.subr.mxu0 %v546
    %996 = vmatpush1.msra.mxu0 %v545
    %997 = vmatprep.subr.mxu0 0.0
    %998 = vmatpush1.msra.mxu0 0.0
    %999 = vmatprep.subr.mxu0 0.0
    %1000 = vmatpush1.msra.mxu0 0.0
    %1001 = vmatprep.subr.mxu0 0.0
    %1002 = vmatpush1.msra.mxu0 0.0
    %1003 = vmatprep.subr.mxu0 0.0
    %1004 = vmatpush1.msra.mxu0 0.0
    %1005 = vmatprep.subr.mxu0 0.0
    %1006 = vmatpush1.msra.mxu0 0.0
    %1007 = vmatprep.subr.mxu0 0.0
    %1008 = vmatpush1.msra.mxu0 0.0
    %1009 = vmatprep.subr.mxu0 0.0
    %1010 = vmatpush1.msra.mxu0 0.0
    %1011 = vmatprep.subr.mxu0 0.0
    %1012 = vmatpush1.msra.mxu0 0.0
    %1013 = vmatprep.subr.mxu0 0.0
    %1014 = vmatpush1.msra.mxu0 0.0
    %1015 = vmatprep.subr.mxu0 0.0
    %1016 = vmatpush1.msra.mxu0 0.0
    %1017 = vmatprep.subr.mxu0 0.0
    %1018 = vmatpush1.msra.mxu0 0.0
    %1019 = vmatprep.subr.mxu0 0.0
    %1020 = vmatpush1.msra.mxu0 0.0
    %1021 = vmatprep.subr.mxu0 0.0
    %1022 = vmatpush1.msra.mxu0 0.0
    %1023 = vmatprep.subr.mxu0 0.0
    %1024 = vmatpush1.msra.mxu0 0.0
    %1025 = vmatprep.subr.mxu0 0.0
    %1026 = vmatpush1.msra.mxu0 0.0
    %1027 = vmatprep.subr.mxu0 0.0
    %1028 = vmatpush1.msra.mxu0 0.0
    %1029 = vmatprep.mubr.f32.mxu0 0.0
    %1030 = vmatmul.mubr.f32.gmra.mrb[0].mxu0 %v940
    %v1031 = vpop.f32.mrb[0].mxu0
    %v1032 = vadd.f32 0.0, %v1031
    %v1033 = vpop.f32.mrb[0].mxu0
    %v1034 = vadd.f32 0.0, %v1033
    %1035 = vdwg.mxu0
    %1036 = vmatprep.subr.mxu0 %v488
    %1037 = vmatpush1.msra.mxu0 %v487
    %1038 = vmatprep.subr.mxu0 %v492
    %1039 = vmatpush1.msra.mxu0 %v491
    %1040 = vmatprep.subr.mxu0 %v496
    %1041 = vmatpush1.msra.mxu0 %v495
    %1042 = vmatprep.subr.mxu0 %v500
    %1043 = vmatpush1.msra.mxu0 %v499
    %1044 = vmatprep.subr.mxu0 %v504
    %1045 = vmatpush1.msra.mxu0 %v503
    %1046 = vmatprep.subr.mxu0 %v508
    %1047 = vmatpush1.msra.mxu0 %v507
    %1048 = vmatprep.subr.mxu0 %v512
    %1049 = vmatpush1.msra.mxu0 %v511
    %1050 = vmatprep.subr.mxu0 %v516
    %1051 = vmatpush1.msra.mxu0 %v515
    %1052 = vmatprep.subr.mxu0 %v520
    %1053 = vmatpush1.msra.mxu0 %v519
    %1054 = vmatprep.subr.mxu0 %v524
    %1055 = vmatpush1.msra.mxu0 %v523
    %1056 = vmatprep.subr.mxu0 %v528
    %1057 = vmatpush1.msra.mxu0 %v527
    %1058 = vmatprep.subr.mxu0 %v532
    %1059 = vmatpush1.msra.mxu0 %v531
    %1060 = vmatprep.subr.mxu0 %v536
    %1061 = vmatpush1.msra.mxu0 %v535
    %1062 = vmatprep.subr.mxu0 %v540
    %1063 = vmatpush1.msra.mxu0 %v539
    %1064 = vmatprep.subr.mxu0 %v544
    %1065 = vmatpush1.msra.mxu0 %v543
    %1066 = vmatprep.subr.mxu0 %v548
    %1067 = vmatpush1.msra.mxu0 %v547
    %1068 = vmatprep.subr.mxu0 0.0
    %1069 = vmatpush1.msra.mxu0 0.0
    %1070 = vmatprep.subr.mxu0 0.0
    %1071 = vmatpush1.msra.mxu0 0.0
    %1072 = vmatprep.subr.mxu0 0.0
    %1073 = vmatpush1.msra.mxu0 0.0
    %1074 = vmatprep.subr.mxu0 0.0
    %1075 = vmatpush1.msra.mxu0 0.0
    %1076 = vmatprep.subr.mxu0 0.0
    %1077 = vmatpush1.msra.mxu0 0.0
    %1078 = vmatprep.subr.mxu0 0.0
    %1079 = vmatpush1.msra.mxu0 0.0
    %1080 = vmatprep.subr.mxu0 0.0
    %1081 = vmatpush1.msra.mxu0 0.0
    %1082 = vmatprep.subr.mxu0 0.0
    %1083 = vmatpush1.msra.mxu0 0.0
    %1084 = vmatprep.subr.mxu0 0.0
    %1085 = vmatpush1.msra.mxu0 0.0
    %1086 = vmatprep.subr.mxu0 0.0
    %1087 = vmatpush1.msra.mxu0 0.0
    %1088 = vmatprep.subr.mxu0 0.0
    %1089 = vmatpush1.msra.mxu0 0.0
    %1090 = vmatprep.subr.mxu0 0.0
    %1091 = vmatpush1.msra.mxu0 0.0
    %1092 = vmatprep.subr.mxu0 0.0
    %1093 = vmatpush1.msra.mxu0 0.0
    %1094 = vmatprep.subr.mxu0 0.0
    %1095 = vmatpush1.msra.mxu0 0.0
    %1096 = vmatprep.subr.mxu0 0.0
    %1097 = vmatpush1.msra.mxu0 0.0
    %1098 = vmatprep.subr.mxu0 0.0
    %1099 = vmatpush1.msra.mxu0 0.0
    %1100 = vmatprep.mubr.f32.mxu0 0.0
    %1101 = vmatmul.mubr.f32.gmra.mrb[0].mxu0 %v940
    %v1102 = vpop.f32.mrb[0].mxu0
    %v1103 = vadd.f32 0.0, %v1102
    %v1104 = vpop.f32.mrb[0].mxu0
    %v1105 = vadd.f32 0.0, %v1104
    %1106 = vdwg.mxu0
    %v1111 = vrot.slane %v1032, 6
    %v1112 = vrot.slane %v1034, 6
    %v1113 = vrot.slane %v1103, 6
    %v1114 = vrot.slane %v1105, 6
    %v1119 = vadd.f32 %v244, %v1111
    %v1120 = vadd.f32 %v246, %v1112
    %v1121 = vadd.f32 %v321, %v1113
    %v1122 = vadd.f32 %v323, %v1114
    %v1124 = vrot.slane %v964, 6
    %1126 = vmatprep.subr.mxu0 %v550
    %1127 = vmatpush1.msra.mxu0 %v549
    %1128 = vmatprep.subr.mxu0 %v554
    %1129 = vmatpush1.msra.mxu0 %v553
    %1130 = vmatprep.subr.mxu0 %v558
    %1131 = vmatpush1.msra.mxu0 %v557
    %1132 = vmatprep.subr.mxu0 %v562
    %1133 = vmatpush1.msra.mxu0 %v561
    %1134 = vmatprep.subr.mxu0 %v566
    %1135 = vmatpush1.msra.mxu0 %v565
    %1136 = vmatprep.subr.mxu0 %v570
    %1137 = vmatpush1.msra.mxu0 %v569
    %1138 = vmatprep.subr.mxu0 %v574
    %1139 = vmatpush1.msra.mxu0 %v573
    %1140 = vmatprep.subr.mxu0 %v578
    %1141 = vmatpush1.msra.mxu0 %v577
    %1142 = vmatprep.subr.mxu0 %v582
    %1143 = vmatpush1.msra.mxu0 %v581
    %1144 = vmatprep.subr.mxu0 %v586
    %1145 = vmatpush1.msra.mxu0 %v585
    %1146 = vmatprep.subr.mxu0 %v590
    %1147 = vmatpush1.msra.mxu0 %v589
    %1148 = vmatprep.subr.mxu0 %v594
    %1149 = vmatpush1.msra.mxu0 %v593
    %1150 = vmatprep.subr.mxu0 %v598
    %1151 = vmatpush1.msra.mxu0 %v597
    %1152 = vmatprep.subr.mxu0 %v602
    %1153 = vmatpush1.msra.mxu0 %v601
    %1154 = vmatprep.subr.mxu0 %v606
    %1155 = vmatpush1.msra.mxu0 %v605
    %1156 = vmatprep.subr.mxu0 %v610
    %1157 = vmatpush1.msra.mxu0 %v609
    %1158 = vmatprep.subr.mxu0 0.0
    %1159 = vmatpush1.msra.mxu0 0.0
    %1160 = vmatprep.subr.mxu0 0.0
    %1161 = vmatpush1.msra.mxu0 0.0
    %1162 = vmatprep.subr.mxu0 0.0
    %1163 = vmatpush1.msra.mxu0 0.0
    %1164 = vmatprep.subr.mxu0 0.0
    %1165 = vmatpush1.msra.mxu0 0.0
    %1166 = vmatprep.subr.mxu0 0.0
    %1167 = vmatpush1.msra.mxu0 0.0
    %1168 = vmatprep.subr.mxu0 0.0
    %1169 = vmatpush1.msra.mxu0 0.0
    %1170 = vmatprep.subr.mxu0 0.0
    %1171 = vmatpush1.msra.mxu0 0.0
    %1172 = vmatprep.subr.mxu0 0.0
    %1173 = vmatpush1.msra.mxu0 0.0
    %1174 = vmatprep.subr.mxu0 0.0
    %1175 = vmatpush1.msra.mxu0 0.0
    %1176 = vmatprep.subr.mxu0 0.0
    %1177 = vmatpush1.msra.mxu0 0.0
    %1178 = vmatprep.subr.mxu0 0.0
    %1179 = vmatpush1.msra.mxu0 0.0
    %1180 = vmatprep.subr.mxu0 0.0
    %1181 = vmatpush1.msra.mxu0 0.0
    %1182 = vmatprep.subr.mxu0 0.0
    %1183 = vmatpush1.msra.mxu0 0.0
    %1184 = vmatprep.subr.mxu0 0.0
    %1185 = vmatpush1.msra.mxu0 0.0
    %1186 = vmatprep.subr.mxu0 0.0
    %1187 = vmatpush1.msra.mxu0 0.0
    %1188 = vmatprep.subr.mxu0 0.0
    %1189 = vmatpush1.msra.mxu0 0.0
    %1190 = vmatprep.mubr.f32.mxu0 0.0
    %1191 = vmatmul.mubr.f32.gmra.mrb[0].mxu0 %v1124
    %v1192 = vpop.f32.mrb[0].mxu0
    %v1193 = vadd.f32 0.0, %v1192
    %v1194 = vpop.f32.mrb[0].mxu0
    %v1195 = vadd.f32 0.0, %v1194
    %1196 = vdwg.mxu0
    %1197 = vmatprep.subr.mxu0 %v552
    %1198 = vmatpush1.msra.mxu0 %v551
    %1199 = vmatprep.subr.mxu0 %v556
    %1200 = vmatpush1.msra.mxu0 %v555
    %1201 = vmatprep.subr.mxu0 %v560
    %1202 = vmatpush1.msra.mxu0 %v559
    %1203 = vmatprep.subr.mxu0 %v564
    %1204 = vmatpush1.msra.mxu0 %v563
    %1205 = vmatprep.subr.mxu0 %v568
    %1206 = vmatpush1.msra.mxu0 %v567
    %1207 = vmatprep.subr.mxu0 %v572
    %1208 = vmatpush1.msra.mxu0 %v571
    %1209 = vmatprep.subr.mxu0 %v576
    %1210 = vmatpush1.msra.mxu0 %v575
    %1211 = vmatprep.subr.mxu0 %v580
    %1212 = vmatpush1.msra.mxu0 %v579
    %1213 = vmatprep.subr.mxu0 %v584
    %1214 = vmatpush1.msra.mxu0 %v583
    %1215 = vmatprep.subr.mxu0 %v588
    %1216 = vmatpush1.msra.mxu0 %v587
    %1217 = vmatprep.subr.mxu0 %v592
    %1218 = vmatpush1.msra.mxu0 %v591
    %1219 = vmatprep.subr.mxu0 %v596
    %1220 = vmatpush1.msra.mxu0 %v595
    %1221 = vmatprep.subr.mxu0 %v600
    %1222 = vmatpush1.msra.mxu0 %v599
    %1223 = vmatprep.subr.mxu0 %v604
    %1224 = vmatpush1.msra.mxu0 %v603
    %1225 = vmatprep.subr.mxu0 %v608
    %1226 = vmatpush1.msra.mxu0 %v607
    %1227 = vmatprep.subr.mxu0 %v612
    %1228 = vmatpush1.msra.mxu0 %v611
    %1229 = vmatprep.subr.mxu0 0.0
    %1230 = vmatpush1.msra.mxu0 0.0
    %1231 = vmatprep.subr.mxu0 0.0
    %1232 = vmatpush1.msra.mxu0 0.0
    %1233 = vmatprep.subr.mxu0 0.0
    %1234 = vmatpush1.msra.mxu0 0.0
    %1235 = vmatprep.subr.mxu0 0.0
    %1236 = vmatpush1.msra.mxu0 0.0
    %1237 = vmatprep.subr.mxu0 0.0
    %1238 = vmatpush1.msra.mxu0 0.0
    %1239 = vmatprep.subr.mxu0 0.0
    %1240 = vmatpush1.msra.mxu0 0.0
    %1241 = vmatprep.subr.mxu0 0.0
    %1242 = vmatpush1.msra.mxu0 0.0
    %1243 = vmatprep.subr.mxu0 0.0
    %1244 = vmatpush1.msra.mxu0 0.0
    %1245 = vmatprep.subr.mxu0 0.0
    %1246 = vmatpush1.msra.mxu0 0.0
    %1247 = vmatprep.subr.mxu0 0.0
    %1248 = vmatpush1.msra.mxu0 0.0
    %1249 = vmatprep.subr.mxu0 0.0
    %1250 = vmatpush1.msra.mxu0 0.0
    %1251 = vmatprep.subr.mxu0 0.0
    %1252 = vmatpush1.msra.mxu0 0.0
    %1253 = vmatprep.subr.mxu0 0.0
    %1254 = vmatpush1.msra.mxu0 0.0
    %1255 = vmatprep.subr.mxu0 0.0
    %1256 = vmatpush1.msra.mxu0 0.0
    %1257 = vmatprep.subr.mxu0 0.0
    %1258 = vmatpush1.msra.mxu0 0.0
    %1259 = vmatprep.subr.mxu0 0.0
    %1260 = vmatpush1.msra.mxu0 0.0
    %1261 = vmatprep.mubr.f32.mxu0 0.0
    %1262 = vmatmul.mubr.f32.gmra.mrb[0].mxu0 %v1124
    %v1263 = vpop.f32.mrb[0].mxu0
    %v1264 = vadd.f32 0.0, %v1263
    %v1265 = vpop.f32.mrb[0].mxu0
    %v1266 = vadd.f32 0.0, %v1265
    %1267 = vdwg.mxu0
    %v1272 = vrot.slane %v1193, 4
    %v1273 = vrot.slane %v1195, 4
    %v1274 = vrot.slane %v1264, 4
    %v1275 = vrot.slane %v1266, 4
    %v1280 = vadd.f32 %v404, %v1272
    %v1281 = vadd.f32 %v406, %v1273
    %v1282 = vadd.f32 %v481, %v1274
    %v1283 = vadd.f32 %v483, %v1275
    %v1284 = vxor.u32 %v1119, 2147483648
    %v1285 = vmul.f32 %v1284, 1.442695
    %v1286 = vpow.pop %v1285
    %v1287 = vadd.f32 %v1286, 1.0
    %v1288 = vrcp.pop %v1287
    %v1289 = vmul.f32 1.0, %v1288
    %v1290 = vxor.u32 %v1120, 2147483648
    %v1291 = vmul.f32 %v1290, 1.442695
    %v1292 = vpow.pop %v1291
    %v1293 = vadd.f32 %v1292, 1.0
    %v1294 = vrcp.pop %v1293
    %v1295 = vmul.f32 1.0, %v1294
    %v1296 = vtanh.pop %v1121
    %v1297 = vxor.u32 %v1122, 2147483648
    %v1298 = vmul.f32 %v1297, 1.442695
    %v1299 = vpow.pop %v1298
    %v1300 = vadd.f32 %v1299, 1.0
    %v1301 = vrcp.pop %v1300
    %v1302 = vmul.f32 1.0, %v1301
    %v1304 = vrot.slane %v938, 6
    %v1306 = vmul.f32 %v1295, %v1304
    %v1307 = vmul.f32 %v1289, %v1296
    %v1308 = vadd.f32 %v1306, %v1307
    %v1309 = vtanh.pop %v1308
    %v1310 = vmul.f32 %v1302, %v1309
    %v1311 = vxor.u32 %v1280, 2147483648
    %v1312 = vmul.f32 %v1311, 1.442695
    %v1313 = vpow.pop %v1312
    %v1314 = vadd.f32 %v1313, 1.0
    %v1315 = vrcp.pop %v1314
    %v1316 = vmul.f32 1.0, %v1315
    %v1317 = vxor.u32 %v1281, 2147483648
    %v1318 = vmul.f32 %v1317, 1.442695
    %v1319 = vpow.pop %v1318
    %v1320 = vadd.f32 %v1319, 1.0
    %v1321 = vrcp.pop %v1320
    %v1322 = vmul.f32 1.0, %v1321
    %v1323 = vtanh.pop %v1282
    %v1324 = vxor.u32 %v1283, 2147483648
    %v1325 = vmul.f32 %v1324, 1.442695
    %v1326 = vpow.pop %v1325
    %v1327 = vadd.f32 %v1326, 1.0
    %v1328 = vrcp.pop %v1327
    %v1329 = vmul.f32 1.0, %v1328
    %v1331 = vrot.slane %v962, 2
    %v1333 = vmul.f32 %v1322, %v1331
    %v1334 = vmul.f32 %v1316, %v1323
    %v1335 = vadd.f32 %v1333, %v1334
    %v1336 = vtanh.pop %v1335
    %v1337 = vmul.f32 %v1329, %v1336
    %v1339 = vrot.slane %v1310, 2
    %1341 = vmatprep.subr.mxu0 %v486
    %1342 = vmatpush1.msra.mxu0 %v485
    %1343 = vmatprep.subr.mxu0 %v490
    %1344 = vmatpush1.msra.mxu0 %v489
    %1345 = vmatprep.subr.mxu0 %v494
    %1346 = vmatpush1.msra.mxu0 %v493
    %1347 = vmatprep.subr.mxu0 %v498
    %1348 = vmatpush1.msra.mxu0 %v497
    %1349 = vmatprep.subr.mxu0 %v502
    %1350 = vmatpush1.msra.mxu0 %v501
    %1351 = vmatprep.subr.mxu0 %v506
    %1352 = vmatpush1.msra.mxu0 %v505
    %1353 = vmatprep.subr.mxu0 %v510
    %1354 = vmatpush1.msra.mxu0 %v509
    %1355 = vmatprep.subr.mxu0 %v514
    %1356 = vmatpush1.msra.mxu0 %v513
    %1357 = vmatprep.subr.mxu0 %v518
    %1358 = vmatpush1.msra.mxu0 %v517
    %1359 = vmatprep.subr.mxu0 %v522
    %1360 = vmatpush1.msra.mxu0 %v521
    %1361 = vmatprep.subr.mxu0 %v526
    %1362 = vmatpush1.msra.mxu0 %v525
    %1363 = vmatprep.subr.mxu0 %v530
    %1364 = vmatpush1.msra.mxu0 %v529
    %1365 = vmatprep.subr.mxu0 %v534
    %1366 = vmatpush1.msra.mxu0 %v533
    %1367 = vmatprep.subr.mxu0 %v538
    %1368 = vmatpush1.msra.mxu0 %v537
    %1369 = vmatprep.subr.mxu0 %v542
    %1370 = vmatpush1.msra.mxu0 %v541
    %1371 = vmatprep.subr.mxu0 %v546
    %1372 = vmatpush1.msra.mxu0 %v545
    %1373 = vmatprep.subr.mxu0 0.0
    %1374 = vmatpush1.msra.mxu0 0.0
    %1375 = vmatprep.subr.mxu0 0.0
    %1376 = vmatpush1.msra.mxu0 0.0
    %1377 = vmatprep.subr.mxu0 0.0
    %1378 = vmatpush1.msra.mxu0 0.0
    %1379 = vmatprep.subr.mxu0 0.0
    %1380 = vmatpush1.msra.mxu0 0.0
    %1381 = vmatprep.subr.mxu0 0.0
    %1382 = vmatpush1.msra.mxu0 0.0
    %1383 = vmatprep.subr.mxu0 0.0
    %1384 = vmatpush1.msra.mxu0 0.0
    %1385 = vmatprep.subr.mxu0 0.0
    %1386 = vmatpush1.msra.mxu0 0.0
    %1387 = vmatprep.subr.mxu0 0.0
    %1388 = vmatpush1.msra.mxu0 0.0
    %1389 = vmatprep.subr.mxu0 0.0
    %1390 = vmatpush1.msra.mxu0 0.0
    %1391 = vmatprep.subr.mxu0 0.0
    %1392 = vmatpush1.msra.mxu0 0.0
    %1393 = vmatprep.subr.mxu0 0.0
    %1394 = vmatpush1.msra.mxu0 0.0
    %1395 = vmatprep.subr.mxu0 0.0
    %1396 = vmatpush1.msra.mxu0 0.0
    %1397 = vmatprep.subr.mxu0 0.0
    %1398 = vmatpush1.msra.mxu0 0.0
    %1399 = vmatprep.subr.mxu0 0.0
    %1400 = vmatpush1.msra.mxu0 0.0
    %1401 = vmatprep.subr.mxu0 0.0
    %1402 = vmatpush1.msra.mxu0 0.0
    %1403 = vmatprep.subr.mxu0 0.0
    %1404 = vmatpush1.msra.mxu0 0.0
    %1405 = vmatprep.mubr.f32.mxu0 0.0
    %1406 = vmatmul.mubr.f32.gmra.mrb[0].mxu0 %v1339
    %v1407 = vpop.f32.mrb[0].mxu0
    %v1408 = vadd.f32 0.0, %v1407
    %v1409 = vpop.f32.mrb[0].mxu0
    %v1410 = vadd.f32 0.0, %v1409
    %1411 = vdwg.mxu0
    %1412 = vmatprep.subr.mxu0 %v488
    %1413 = vmatpush1.msra.mxu0 %v487
    %1414 = vmatprep.subr.mxu0 %v492
    %1415 = vmatpush1.msra.mxu0 %v491
    %1416 = vmatprep.subr.mxu0 %v496
    %1417 = vmatpush1.msra.mxu0 %v495
    %1418 = vmatprep.subr.mxu0 %v500
    %1419 = vmatpush1.msra.mxu0 %v499
    %1420 = vmatprep.subr.mxu0 %v504
    %1421 = vmatpush1.msra.mxu0 %v503
    %1422 = vmatprep.subr.mxu0 %v508
    %1423 = vmatpush1.msra.mxu0 %v507
    %1424 = vmatprep.subr.mxu0 %v512
    %1425 = vmatpush1.msra.mxu0 %v511
    %1426 = vmatprep.subr.mxu0 %v516
    %1427 = vmatpush1.msra.mxu0 %v515
    %1428 = vmatprep.subr.mxu0 %v520
    %1429 = vmatpush1.msra.mxu0 %v519
    %1430 = vmatprep.subr.mxu0 %v524
    %1431 = vmatpush1.msra.mxu0 %v523
    %1432 = vmatprep.subr.mxu0 %v528
    %1433 = vmatpush1.msra.mxu0 %v527
    %1434 = vmatprep.subr.mxu0 %v532
    %1435 = vmatpush1.msra.mxu0 %v531
    %1436 = vmatprep.subr.mxu0 %v536
    %1437 = vmatpush1.msra.mxu0 %v535
    %1438 = vmatprep.subr.mxu0 %v540
    %1439 = vmatpush1.msra.mxu0 %v539
    %1440 = vmatprep.subr.mxu0 %v544
    %1441 = vmatpush1.msra.mxu0 %v543
    %1442 = vmatprep.subr.mxu0 %v548
    %1443 = vmatpush1.msra.mxu0 %v547
    %1444 = vmatprep.subr.mxu0 0.0
    %1445 = vmatpush1.msra.mxu0 0.0
    %1446 = vmatprep.subr.mxu0 0.0
    %1447 = vmatpush1.msra.mxu0 0.0
    %1448 = vmatprep.subr.mxu0 0.0
    %1449 = vmatpush1.msra.mxu0 0.0
    %1450 = vmatprep.subr.mxu0 0.0
    %1451 = vmatpush1.msra.mxu0 0.0
    %1452 = vmatprep.subr.mxu0 0.0
    %1453 = vmatpush1.msra.mxu0 0.0
    %1454 = vmatprep.subr.mxu0 0.0
    %1455 = vmatpush1.msra.mxu0 0.0
    %1456 = vmatprep.subr.mxu0 0.0
    %1457 = vmatpush1.msra.mxu0 0.0
    %1458 = vmatprep.subr.mxu0 0.0
    %1459 = vmatpush1.msra.mxu0 0.0
    %1460 = vmatprep.subr.mxu0 0.0
    %1461 = vmatpush1.msra.mxu0 0.0
    %1462 = vmatprep.subr.mxu0 0.0
    %1463 = vmatpush1.msra.mxu0 0.0
    %1464 = vmatprep.subr.mxu0 0.0
    %1465 = vmatpush1.msra.mxu0 0.0
    %1466 = vmatprep.subr.mxu0 0.0
    %1467 = vmatpush1.msra.mxu0 0.0
    %1468 = vmatprep.subr.mxu0 0.0
    %1469 = vmatpush1.msra.mxu0 0.0
    %1470 = vmatprep.subr.mxu0 0.0
    %1471 = vmatpush1.msra.mxu0 0.0
    %1472 = vmatprep.subr.mxu0 0.0
    %1473 = vmatpush1.msra.mxu0 0.0
    %1474 = vmatprep.subr.mxu0 0.0
    %1475 = vmatpush1.msra.mxu0 0.0
    %1476 = vmatprep.mubr.f32.mxu0 0.0
    %1477 = vmatmul.mubr.f32.gmra.mrb[0].mxu0 %v1339
    %v1478 = vpop.f32.mrb[0].mxu0
    %v1479 = vadd.f32 0.0, %v1478
    %v1480 = vpop.f32.mrb[0].mxu0
    %v1481 = vadd.f32 0.0, %v1480
    %1482 = vdwg.mxu0
    %v1487 = vrot.slane %v1408, 4
    %v1488 = vrot.slane %v1410, 4
    %v1489 = vrot.slane %v1479, 4
    %v1490 = vrot.slane %v1481, 4
    %v1495 = vadd.f32 %v244, %v1487
    %v1496 = vadd.f32 %v246, %v1488
    %v1497 = vadd.f32 %v321, %v1489
    %v1498 = vadd.f32 %v323, %v1490
    %v1500 = vrot.slane %v1337, 4
    %1502 = vmatprep.subr.mxu0 %v550
    %1503 = vmatpush1.msra.mxu0 %v549
    %1504 = vmatprep.subr.mxu0 %v554
    %1505 = vmatpush1.msra.mxu0 %v553
    %1506 = vmatprep.subr.mxu0 %v558
    %1507 = vmatpush1.msra.mxu0 %v557
    %1508 = vmatprep.subr.mxu0 %v562
    %1509 = vmatpush1.msra.mxu0 %v561
    %1510 = vmatprep.subr.mxu0 %v566
    %1511 = vmatpush1.msra.mxu0 %v565
    %1512 = vmatprep.subr.mxu0 %v570
    %1513 = vmatpush1.msra.mxu0 %v569
    %1514 = vmatprep.subr.mxu0 %v574
    %1515 = vmatpush1.msra.mxu0 %v573
    %1516 = vmatprep.subr.mxu0 %v578
    %1517 = vmatpush1.msra.mxu0 %v577
    %1518 = vmatprep.subr.mxu0 %v582
    %1519 = vmatpush1.msra.mxu0 %v581
    %1520 = vmatprep.subr.mxu0 %v586
    %1521 = vmatpush1.msra.mxu0 %v585
    %1522 = vmatprep.subr.mxu0 %v590
    %1523 = vmatpush1.msra.mxu0 %v589
    %1524 = vmatprep.subr.mxu0 %v594
    %1525 = vmatpush1.msra.mxu0 %v593
    %1526 = vmatprep.subr.mxu0 %v598
    %1527 = vmatpush1.msra.mxu0 %v597
    %1528 = vmatprep.subr.mxu0 %v602
    %1529 = vmatpush1.msra.mxu0 %v601
    %1530 = vmatprep.subr.mxu0 %v606
    %1531 = vmatpush1.msra.mxu0 %v605
    %1532 = vmatprep.subr.mxu0 %v610
    %1533 = vmatpush1.msra.mxu0 %v609
    %1534 = vmatprep.subr.mxu0 0.0
    %1535 = vmatpush1.msra.mxu0 0.0
    %1536 = vmatprep.subr.mxu0 0.0
    %1537 = vmatpush1.msra.mxu0 0.0
    %1538 = vmatprep.subr.mxu0 0.0
    %1539 = vmatpush1.msra.mxu0 0.0
    %1540 = vmatprep.subr.mxu0 0.0
    %1541 = vmatpush1.msra.mxu0 0.0
    %1542 = vmatprep.subr.mxu0 0.0
    %1543 = vmatpush1.msra.mxu0 0.0
    %1544 = vmatprep.subr.mxu0 0.0
    %1545 = vmatpush1.msra.mxu0 0.0
    %1546 = vmatprep.subr.mxu0 0.0
    %1547 = vmatpush1.msra.mxu0 0.0
    %1548 = vmatprep.subr.mxu0 0.0
    %1549 = vmatpush1.msra.mxu0 0.0
    %1550 = vmatprep.subr.mxu0 0.0
    %1551 = vmatpush1.msra.mxu0 0.0
    %1552 = vmatprep.subr.mxu0 0.0
    %1553 = vmatpush1.msra.mxu0 0.0
    %1554 = vmatprep.subr.mxu0 0.0
    %1555 = vmatpush1.msra.mxu0 0.0
    %1556 = vmatprep.subr.mxu0 0.0
    %1557 = vmatpush1.msra.mxu0 0.0
    %1558 = vmatprep.subr.mxu0 0.0
    %1559 = vmatpush1.msra.mxu0 0.0
    %1560 = vmatprep.subr.mxu0 0.0
    %1561 = vmatpush1.msra.mxu0 0.0
    %1562 = vmatprep.subr.mxu0 0.0
    %1563 = vmatpush1.msra.mxu0 0.0
    %1564 = vmatprep.subr.mxu0 0.0
    %1565 = vmatpush1.msra.mxu0 0.0
    %1566 = vmatprep.mubr.f32.mxu0 0.0
    %1567 = vmatmul.mubr.f32.gmra.mrb[0].mxu0 %v1500
    %v1568 = vpop.f32.mrb[0].mxu0
    %v1569 = vadd.f32 0.0, %v1568
    %v1570 = vpop.f32.mrb[0].mxu0
    %v1571 = vadd.f32 0.0, %v1570
    %1572 = vdwg.mxu0
    %1573 = vmatprep.subr.mxu0 %v552
    %1574 = vmatpush1.msra.mxu0 %v551
    %1575 = vmatprep.subr.mxu0 %v556
    %1576 = vmatpush1.msra.mxu0 %v555
    %1577 = vmatprep.subr.mxu0 %v560
    %1578 = vmatpush1.msra.mxu0 %v559
    %1579 = vmatprep.subr.mxu0 %v564
    %1580 = vmatpush1.msra.mxu0 %v563
    %1581 = vmatprep.subr.mxu0 %v568
    %1582 = vmatpush1.msra.mxu0 %v567
    %1583 = vmatprep.subr.mxu0 %v572
    %1584 = vmatpush1.msra.mxu0 %v571
    %1585 = vmatprep.subr.mxu0 %v576
    %1586 = vmatpush1.msra.mxu0 %v575
    %1587 = vmatprep.subr.mxu0 %v580
    %1588 = vmatpush1.msra.mxu0 %v579
    %1589 = vmatprep.subr.mxu0 %v584
    %1590 = vmatpush1.msra.mxu0 %v583
    %1591 = vmatprep.subr.mxu0 %v588
    %1592 = vmatpush1.msra.mxu0 %v587
    %1593 = vmatprep.subr.mxu0 %v592
    %1594 = vmatpush1.msra.mxu0 %v591
    %1595 = vmatprep.subr.mxu0 %v596
    %1596 = vmatpush1.msra.mxu0 %v595
    %1597 = vmatprep.subr.mxu0 %v600
    %1598 = vmatpush1.msra.mxu0 %v599
    %1599 = vmatprep.subr.mxu0 %v604
    %1600 = vmatpush1.msra.mxu0 %v603
    %1601 = vmatprep.subr.mxu0 %v608
    %1602 = vmatpush1.msra.mxu0 %v607
    %1603 = vmatprep.subr.mxu0 %v612
    %1604 = vmatpush1.msra.mxu0 %v611
    %1605 = vmatprep.subr.mxu0 0.0
    %1606 = vmatpush1.msra.mxu0 0.0
    %1607 = vmatprep.subr.mxu0 0.0
    %1608 = vmatpush1.msra.mxu0 0.0
    %1609 = vmatprep.subr.mxu0 0.0
    %1610 = vmatpush1.msra.mxu0 0.0
    %1611 = vmatprep.subr.mxu0 0.0
    %1612 = vmatpush1.msra.mxu0 0.0
    %1613 = vmatprep.subr.mxu0 0.0
    %1614 = vmatpush1.msra.mxu0 0.0
    %1615 = vmatprep.subr.mxu0 0.0
    %1616 = vmatpush1.msra.mxu0 0.0
    %1617 = vmatprep.subr.mxu0 0.0
    %1618 = vmatpush1.msra.mxu0 0.0
    %1619 = vmatprep.subr.mxu0 0.0
    %1620 = vmatpush1.msra.mxu0 0.0
    %1621 = vmatprep.subr.mxu0 0.0
    %1622 = vmatpush1.msra.mxu0 0.0
    %1623 = vmatprep.subr.mxu0 0.0
    %1624 = vmatpush1.msra.mxu0 0.0
    %1625 = vmatprep.subr.mxu0 0.0
    %1626 = vmatpush1.msra.mxu0 0.0
    %1627 = vmatprep.subr.mxu0 0.0
    %1628 = vmatpush1.msra.mxu0 0.0
    %1629 = vmatprep.subr.mxu0 0.0
    %1630 = vmatpush1.msra.mxu0 0.0
    %1631 = vmatprep.subr.mxu0 0.0
    %1632 = vmatpush1.msra.mxu0 0.0
    %1633 = vmatprep.subr.mxu0 0.0
    %1634 = vmatpush1.msra.mxu0 0.0
    %1635 = vmatprep.subr.mxu0 0.0
    %1636 = vmatpush1.msra.mxu0 0.0
    %1637 = vmatprep.mubr.f32.mxu0 0.0
    %1638 = vmatmul.mubr.f32.gmra.mrb[0].mxu0 %v1500
    %v1639 = vpop.f32.mrb[0].mxu0
    %v1640 = vadd.f32 0.0, %v1639
    %v1641 = vpop.f32.mrb[0].mxu0
    %v1642 = vadd.f32 0.0, %v1641
    %1643 = vdwg.mxu0
    %v1648 = vrot.slane %v1569, 6
    %v1649 = vrot.slane %v1571, 6
    %v1650 = vrot.slane %v1640, 6
    %v1651 = vrot.slane %v1642, 6
    %v1656 = vadd.f32 %v404, %v1648
    %v1657 = vadd.f32 %v406, %v1649
    %v1658 = vadd.f32 %v481, %v1650
    %v1659 = vadd.f32 %v483, %v1651
    %v1660 = vxor.u32 %v1495, 2147483648
    %v1661 = vmul.f32 %v1660, 1.442695
    %v1662 = vpow.pop %v1661
    %v1663 = vadd.f32 %v1662, 1.0
    %v1664 = vrcp.pop %v1663
    %v1665 = vmul.f32 1.0, %v1664
    %v1666 = vxor.u32 %v1496, 2147483648
    %v1667 = vmul.f32 %v1666, 1.442695
    %v1668 = vpow.pop %v1667
    %v1669 = vadd.f32 %v1668, 1.0
    %v1670 = vrcp.pop %v1669
    %v1671 = vmul.f32 1.0, %v1670
    %v1672 = vtanh.pop %v1497
    %v1673 = vxor.u32 %v1498, 2147483648
    %v1674 = vmul.f32 %v1673, 1.442695
    %v1675 = vpow.pop %v1674
    %v1676 = vadd.f32 %v1675, 1.0
    %v1677 = vrcp.pop %v1676
    %v1678 = vmul.f32 1.0, %v1677
    %v1680 = vrot.slane %v1308, 6
    %v1682 = vmul.f32 %v1671, %v1680
    %v1683 = vmul.f32 %v1665, %v1672
    %v1684 = vadd.f32 %v1682, %v1683
    %v1685 = vtanh.pop %v1684
    %v1686 = vmul.f32 %v1678, %v1685
    %v1687 = vxor.u32 %v1656, 2147483648
    %v1688 = vmul.f32 %v1687, 1.442695
    %v1689 = vpow.pop %v1688
    %v1690 = vadd.f32 %v1689, 1.0
    %v1691 = vrcp.pop %v1690
    %v1692 = vmul.f32 1.0, %v1691
    %v1693 = vxor.u32 %v1657, 2147483648
    %v1694 = vmul.f32 %v1693, 1.442695
    %v1695 = vpow.pop %v1694
    %v1696 = vadd.f32 %v1695, 1.0
    %v1697 = vrcp.pop %v1696
    %v1698 = vmul.f32 1.0, %v1697
    %v1699 = vtanh.pop %v1658
    %v1700 = vxor.u32 %v1659, 2147483648
    %v1701 = vmul.f32 %v1700, 1.442695
    %v1702 = vpow.pop %v1701
    %v1703 = vadd.f32 %v1702, 1.0
    %v1704 = vrcp.pop %v1703
    %v1705 = vmul.f32 1.0, %v1704
    %v1707 = vrot.slane %v1335, 2
    %v1709 = vmul.f32 %v1698, %v1707
    %v1710 = vmul.f32 %v1692, %v1699
    %v1711 = vadd.f32 %v1709, %v1710
    %v1712 = vtanh.pop %v1711
    %v1713 = vmul.f32 %v1705, %v1712
    %v1715 = vrot.slane %v1686, 4
    %1717 = vmatprep.subr.mxu0 %v486
    %1718 = vmatpush1.msra.mxu0 %v485
    %1719 = vmatprep.subr.mxu0 %v490
    %1720 = vmatpush1.msra.mxu0 %v489
    %1721 = vmatprep.subr.mxu0 %v494
    %1722 = vmatpush1.msra.mxu0 %v493
    %1723 = vmatprep.subr.mxu0 %v498
    %1724 = vmatpush1.msra.mxu0 %v497
    %1725 = vmatprep.subr.mxu0 %v502
    %1726 = vmatpush1.msra.mxu0 %v501
    %1727 = vmatprep.subr.mxu0 %v506
    %1728 = vmatpush1.msra.mxu0 %v505
    %1729 = vmatprep.subr.mxu0 %v510
    %1730 = vmatpush1.msra.mxu0 %v509
    %1731 = vmatprep.subr.mxu0 %v514
    %1732 = vmatpush1.msra.mxu0 %v513
    %1733 = vmatprep.subr.mxu0 %v518
    %1734 = vmatpush1.msra.mxu0 %v517
    %1735 = vmatprep.subr.mxu0 %v522
    %1736 = vmatpush1.msra.mxu0 %v521
    %1737 = vmatprep.subr.mxu0 %v526
    %1738 = vmatpush1.msra.mxu0 %v525
    %1739 = vmatprep.subr.mxu0 %v530
    %1740 = vmatpush1.msra.mxu0 %v529
    %1741 = vmatprep.subr.mxu0 %v534
    %1742 = vmatpush1.msra.mxu0 %v533
    %1743 = vmatprep.subr.mxu0 %v538
    %1744 = vmatpush1.msra.mxu0 %v537
    %1745 = vmatprep.subr.mxu0 %v542
    %1746 = vmatpush1.msra.mxu0 %v541
    %1747 = vmatprep.subr.mxu0 %v546
    %1748 = vmatpush1.msra.mxu0 %v545
    %1749 = vmatprep.subr.mxu0 0.0
    %1750 = vmatpush1.msra.mxu0 0.0
    %1751 = vmatprep.subr.mxu0 0.0
    %1752 = vmatpush1.msra.mxu0 0.0
    %1753 = vmatprep.subr.mxu0 0.0
    %1754 = vmatpush1.msra.mxu0 0.0
    %1755 = vmatprep.subr.mxu0 0.0
    %1756 = vmatpush1.msra.mxu0 0.0
    %1757 = vmatprep.subr.mxu0 0.0
    %1758 = vmatpush1.msra.mxu0 0.0
    %1759 = vmatprep.subr.mxu0 0.0
    %1760 = vmatpush1.msra.mxu0 0.0
    %1761 = vmatprep.subr.mxu0 0.0
    %1762 = vmatpush1.msra.mxu0 0.0
    %1763 = vmatprep.subr.mxu0 0.0
    %1764 = vmatpush1.msra.mxu0 0.0
    %1765 = vmatprep.subr.mxu0 0.0
    %1766 = vmatpush1.msra.mxu0 0.0
    %1767 = vmatprep.subr.mxu0 0.0
    %1768 = vmatpush1.msra.mxu0 0.0
    %1769 = vmatprep.subr.mxu0 0.0
    %1770 = vmatpush1.msra.mxu0 0.0
    %1771 = vmatprep.subr.mxu0 0.0
    %1772 = vmatpush1.msra.mxu0 0.0
    %1773 = vmatprep.subr.mxu0 0.0
    %1774 = vmatpush1.msra.mxu0 0.0
    %1775 = vmatprep.subr.mxu0 0.0
    %1776 = vmatpush1.msra.mxu0 0.0
    %1777 = vmatprep.subr.mxu0 0.0
    %1778 = vmatpush1.msra.mxu0 0.0
    %1779 = vmatprep.subr.mxu0 0.0
    %1780 = vmatpush1.msra.mxu0 0.0
    %1781 = vmatprep.mubr.f32.mxu0 0.0
    %1782 = vmatmul.mubr.f32.gmra.mrb[0].mxu0 %v1715
    %v1783 = vpop.f32.mrb[0].mxu0
    %v1784 = vadd.f32 0.0, %v1783
    %v1785 = vpop.f32.mrb[0].mxu0
    %v1786 = vadd.f32 0.0, %v1785
    %1787 = vdwg.mxu0
    %1788 = vmatprep.subr.mxu0 %v488
    %1789 = vmatpush1.msra.mxu0 %v487
    %1790 = vmatprep.subr.mxu0 %v492
    %1791 = vmatpush1.msra.mxu0 %v491
    %1792 = vmatprep.subr.mxu0 %v496
    %1793 = vmatpush1.msra.mxu0 %v495
    %1794 = vmatprep.subr.mxu0 %v500
    %1795 = vmatpush1.msra.mxu0 %v499
    %1796 = vmatprep.subr.mxu0 %v504
    %1797 = vmatpush1.msra.mxu0 %v503
    %1798 = vmatprep.subr.mxu0 %v508
    %1799 = vmatpush1.msra.mxu0 %v507
    %1800 = vmatprep.subr.mxu0 %v512
    %1801 = vmatpush1.msra.mxu0 %v511
    %1802 = vmatprep.subr.mxu0 %v516
    %1803 = vmatpush1.msra.mxu0 %v515
    %1804 = vmatprep.subr.mxu0 %v520
    %1805 = vmatpush1.msra.mxu0 %v519
    %1806 = vmatprep.subr.mxu0 %v524
    %1807 = vmatpush1.msra.mxu0 %v523
    %1808 = vmatprep.subr.mxu0 %v528
    %1809 = vmatpush1.msra.mxu0 %v527
    %1810 = vmatprep.subr.mxu0 %v532
    %1811 = vmatpush1.msra.mxu0 %v531
    %1812 = vmatprep.subr.mxu0 %v536
    %1813 = vmatpush1.msra.mxu0 %v535
    %1814 = vmatprep.subr.mxu0 %v540
    %1815 = vmatpush1.msra.mxu0 %v539
    %1816 = vmatprep.subr.mxu0 %v544
    %1817 = vmatpush1.msra.mxu0 %v543
    %1818 = vmatprep.subr.mxu0 %v548
    %1819 = vmatpush1.msra.mxu0 %v547
    %1820 = vmatprep.subr.mxu0 0.0
    %1821 = vmatpush1.msra.mxu0 0.0
    %1822 = vmatprep.subr.mxu0 0.0
    %1823 = vmatpush1.msra.mxu0 0.0
    %1824 = vmatprep.subr.mxu0 0.0
    %1825 = vmatpush1.msra.mxu0 0.0
    %1826 = vmatprep.subr.mxu0 0.0
    %1827 = vmatpush1.msra.mxu0 0.0
    %1828 = vmatprep.subr.mxu0 0.0
    %1829 = vmatpush1.msra.mxu0 0.0
    %1830 = vmatprep.subr.mxu0 0.0
    %1831 = vmatpush1.msra.mxu0 0.0
    %1832 = vmatprep.subr.mxu0 0.0
    %1833 = vmatpush1.msra.mxu0 0.0
    %1834 = vmatprep.subr.mxu0 0.0
    %1835 = vmatpush1.msra.mxu0 0.0
    %1836 = vmatprep.subr.mxu0 0.0
    %1837 = vmatpush1.msra.mxu0 0.0
    %1838 = vmatprep.subr.mxu0 0.0
    %1839 = vmatpush1.msra.mxu0 0.0
    %1840 = vmatprep.subr.mxu0 0.0
    %1841 = vmatpush1.msra.mxu0 0.0
    %1842 = vmatprep.subr.mxu0 0.0
    %1843 = vmatpush1.msra.mxu0 0.0
    %1844 = vmatprep.subr.mxu0 0.0
    %1845 = vmatpush1.msra.mxu0 0.0
    %1846 = vmatprep.subr.mxu0 0.0
    %1847 = vmatpush1.msra.mxu0 0.0
    %1848 = vmatprep.subr.mxu0 0.0
    %1849 = vmatpush1.msra.mxu0 0.0
    %1850 = vmatprep.subr.mxu0 0.0
    %1851 = vmatpush1.msra.mxu0 0.0
    %1852 = vmatprep.mubr.f32.mxu0 0.0
    %1853 = vmatmul.mubr.f32.gmra.mrb[0].mxu0 %v1715
    %v1854 = vpop.f32.mrb[0].mxu0
    %v1855 = vadd.f32 0.0, %v1854
    %v1856 = vpop.f32.mrb[0].mxu0
    %v1857 = vadd.f32 0.0, %v1856
    %1858 = vdwg.mxu0
    %v1863 = vrot.slane %v1784, 2
    %v1864 = vrot.slane %v1786, 2
    %v1865 = vrot.slane %v1855, 2
    %v1866 = vrot.slane %v1857, 2
    %v1871 = vadd.f32 %v244, %v1863
    %v1872 = vadd.f32 %v246, %v1864
    %v1873 = vadd.f32 %v321, %v1865
    %v1874 = vadd.f32 %v323, %v1866
    %v1876 = vrot.slane %v1713, 2
    %1878 = vmatprep.subr.mxu0 %v550
    %1879 = vmatpush1.msra.mxu0 %v549
    %1880 = vmatprep.subr.mxu0 %v554
    %1881 = vmatpush1.msra.mxu0 %v553
    %1882 = vmatprep.subr.mxu0 %v558
    %1883 = vmatpush1.msra.mxu0 %v557
    %1884 = vmatprep.subr.mxu0 %v562
    %1885 = vmatpush1.msra.mxu0 %v561
    %1886 = vmatprep.subr.mxu0 %v566
    %1887 = vmatpush1.msra.mxu0 %v565
    %1888 = vmatprep.subr.mxu0 %v570
    %1889 = vmatpush1.msra.mxu0 %v569
    %1890 = vmatprep.subr.mxu0 %v574
    %1891 = vmatpush1.msra.mxu0 %v573
    %1892 = vmatprep.subr.mxu0 %v578
    %1893 = vmatpush1.msra.mxu0 %v577
    %1894 = vmatprep.subr.mxu0 %v582
    %1895 = vmatpush1.msra.mxu0 %v581
    %1896 = vmatprep.subr.mxu0 %v586
    %1897 = vmatpush1.msra.mxu0 %v585
    %1898 = vmatprep.subr.mxu0 %v590
    %1899 = vmatpush1.msra.mxu0 %v589
    %1900 = vmatprep.subr.mxu0 %v594
    %1901 = vmatpush1.msra.mxu0 %v593
    %1902 = vmatprep.subr.mxu0 %v598
    %1903 = vmatpush1.msra.mxu0 %v597
    %1904 = vmatprep.subr.mxu0 %v602
    %1905 = vmatpush1.msra.mxu0 %v601
    %1906 = vmatprep.subr.mxu0 %v606
    %1907 = vmatpush1.msra.mxu0 %v605
    %1908 = vmatprep.subr.mxu0 %v610
    %1909 = vmatpush1.msra.mxu0 %v609
    %1910 = vmatprep.subr.mxu0 0.0
    %1911 = vmatpush1.msra.mxu0 0.0
    %1912 = vmatprep.subr.mxu0 0.0
    %1913 = vmatpush1.msra.mxu0 0.0
    %1914 = vmatprep.subr.mxu0 0.0
    %1915 = vmatpush1.msra.mxu0 0.0
    %1916 = vmatprep.subr.mxu0 0.0
    %1917 = vmatpush1.msra.mxu0 0.0
    %1918 = vmatprep.subr.mxu0 0.0
    %1919 = vmatpush1.msra.mxu0 0.0
    %1920 = vmatprep.subr.mxu0 0.0
    %1921 = vmatpush1.msra.mxu0 0.0
    %1922 = vmatprep.subr.mxu0 0.0
    %1923 = vmatpush1.msra.mxu0 0.0
    %1924 = vmatprep.subr.mxu0 0.0
    %1925 = vmatpush1.msra.mxu0 0.0
    %1926 = vmatprep.subr.mxu0 0.0
    %1927 = vmatpush1.msra.mxu0 0.0
    %1928 = vmatprep.subr.mxu0 0.0
    %1929 = vmatpush1.msra.mxu0 0.0
    %1930 = vmatprep.subr.mxu0 0.0
    %1931 = vmatpush1.msra.mxu0 0.0
    %1932 = vmatprep.subr.mxu0 0.0
    %1933 = vmatpush1.msra.mxu0 0.0
    %1934 = vmatprep.subr.mxu0 0.0
    %1935 = vmatpush1.msra.mxu0 0.0
    %1936 = vmatprep.subr.mxu0 0.0
    %1937 = vmatpush1.msra.mxu0 0.0
    %1938 = vmatprep.subr.mxu0 0.0
    %1939 = vmatpush1.msra.mxu0 0.0
    %1940 = vmatprep.subr.mxu0 0.0
    %1941 = vmatpush1.msra.mxu0 0.0
    %1942 = vmatprep.mubr.f32.mxu0 0.0
    %1943 = vmatmul.mubr.f32.gmra.mrb[0].mxu0 %v1876
    %v1944 = vpop.f32.mrb[0].mxu0
    %v1945 = vadd.f32 0.0, %v1944
    %v1946 = vpop.f32.mrb[0].mxu0
    %v1947 = vadd.f32 0.0, %v1946
    %1948 = vdwg.mxu0
    %1949 = vmatprep.subr.mxu0 %v552
    %1950 = vmatpush1.msra.mxu0 %v551
    %1951 = vmatprep.subr.mxu0 %v556
    %1952 = vmatpush1.msra.mxu0 %v555
    %1953 = vmatprep.subr.mxu0 %v560
    %1954 = vmatpush1.msra.mxu0 %v559
    %1955 = vmatprep.subr.mxu0 %v564
    %1956 = vmatpush1.msra.mxu0 %v563
    %1957 = vmatprep.subr.mxu0 %v568
    %1958 = vmatpush1.msra.mxu0 %v567
    %1959 = vmatprep.subr.mxu0 %v572
    %1960 = vmatpush1.msra.mxu0 %v571
    %1961 = vmatprep.subr.mxu0 %v576
    %1962 = vmatpush1.msra.mxu0 %v575
    %1963 = vmatprep.subr.mxu0 %v580
    %1964 = vmatpush1.msra.mxu0 %v579
    %1965 = vmatprep.subr.mxu0 %v584
    %1966 = vmatpush1.msra.mxu0 %v583
    %1967 = vmatprep.subr.mxu0 %v588
    %1968 = vmatpush1.msra.mxu0 %v587
    %1969 = vmatprep.subr.mxu0 %v592
    %1970 = vmatpush1.msra.mxu0 %v591
    %1971 = vmatprep.subr.mxu0 %v596
    %1972 = vmatpush1.msra.mxu0 %v595
    %1973 = vmatprep.subr.mxu0 %v600
    %1974 = vmatpush1.msra.mxu0 %v599
    %1975 = vmatprep.subr.mxu0 %v604
    %1976 = vmatpush1.msra.mxu0 %v603
    %1977 = vmatprep.subr.mxu0 %v608
    %1978 = vmatpush1.msra.mxu0 %v607
    %1979 = vmatprep.subr.mxu0 %v612
    %1980 = vmatpush1.msra.mxu0 %v611
    %1981 = vmatprep.subr.mxu0 0.0
    %1982 = vmatpush1.msra.mxu0 0.0
    %1983 = vmatprep.subr.mxu0 0.0
    %1984 = vmatpush1.msra.mxu0 0.0
    %1985 = vmatprep.subr.mxu0 0.0
    %1986 = vmatpush1.msra.mxu0 0.0
    %1987 = vmatprep.subr.mxu0 0.0
    %1988 = vmatpush1.msra.mxu0 0.0
    %1989 = vmatprep.subr.mxu0 0.0
    %1990 = vmatpush1.msra.mxu0 0.0
    %1991 = vmatprep.subr.mxu0 0.0
    %1992 = vmatpush1.msra.mxu0 0.0
    %1993 = vmatprep.subr.mxu0 0.0
    %1994 = vmatpush1.msra.mxu0 0.0
    %1995 = vmatprep.subr.mxu0 0.0
    %1996 = vmatpush1.msra.mxu0 0.0
    %1997 = vmatprep.subr.mxu0 0.0
    %1998 = vmatpush1.msra.mxu0 0.0
    %1999 = vmatprep.subr.mxu0 0.0
    %2000 = vmatpush1.msra.mxu0 0.0
    %2001 = vmatprep.subr.mxu0 0.0
    %2002 = vmatpush1.msra.mxu0 0.0
    %2003 = vmatprep.subr.mxu0 0.0
    %2004 = vmatpush1.msra.mxu0 0.0
    %2005 = vmatprep.subr.mxu0 0.0
    %2006 = vmatpush1.msra.mxu0 0.0
    %2007 = vmatprep.subr.mxu0 0.0
    %2008 = vmatpush1.msra.mxu0 0.0
    %2009 = vmatprep.subr.mxu0 0.0
    %2010 = vmatpush1.msra.mxu0 0.0
    %2011 = vmatprep.subr.mxu0 0.0
    %2012 = vmatpush1.msra.mxu0 0.0
    %2013 = vmatprep.mubr.f32.mxu0 0.0
    %2014 = vmatmul.mubr.f32.gmra.mrb[0].mxu0 %v1876
    %v2015 = vpop.f32.mrb[0].mxu0
    %v2016 = vadd.f32 0.0, %v2015
    %v2017 = vpop.f32.mrb[0].mxu0
    %v2018 = vadd.f32 0.0, %v2017
    %2019 = vdwg.mxu0
    %v2020 = vadd.f32 %v404, %v1945
    %v2021 = vadd.f32 %v406, %v1947
    %v2022 = vadd.f32 %v481, %v2016
    %v2023 = vadd.f32 %v483, %v2018
    %v2024 = vxor.u32 %v1871, 2147483648
    %v2025 = vmul.f32 %v2024, 1.442695
    %v2026 = vpow.pop %v2025
    %v2027 = vadd.f32 %v2026, 1.0
    %v2028 = vrcp.pop %v2027
    %v2029 = vmul.f32 1.0, %v2028
    %v2030 = vxor.u32 %v1872, 2147483648
    %v2031 = vmul.f32 %v2030, 1.442695
    %v2032 = vpow.pop %v2031
    %v2033 = vadd.f32 %v2032, 1.0
    %v2034 = vrcp.pop %v2033
    %v2035 = vmul.f32 1.0, %v2034
    %v2036 = vtanh.pop %v1873
    %v2037 = vxor.u32 %v1874, 2147483648
    %v2038 = vmul.f32 %v2037, 1.442695
    %v2039 = vpow.pop %v2038
    %v2040 = vadd.f32 %v2039, 1.0
    %v2041 = vrcp.pop %v2040
    %v2042 = vmul.f32 1.0, %v2041
    %v2044 = vrot.slane %v1684, 6
    %v2046 = vmul.f32 %v2035, %v2044
    %v2047 = vmul.f32 %v2029, %v2036
    %v2048 = vadd.f32 %v2046, %v2047
    %v2049 = vtanh.pop %v2048
    %v2050 = vmul.f32 %v2042, %v2049
    %v2051 = vxor.u32 %v2020, 2147483648
    %v2052 = vmul.f32 %v2051, 1.442695
    %v2053 = vpow.pop %v2052
    %v2054 = vadd.f32 %v2053, 1.0
    %v2055 = vrcp.pop %v2054
    %v2056 = vmul.f32 1.0, %v2055
    %v2057 = vxor.u32 %v2021, 2147483648
    %v2058 = vmul.f32 %v2057, 1.442695
    %v2059 = vpow.pop %v2058
    %v2060 = vadd.f32 %v2059, 1.0
    %v2061 = vrcp.pop %v2060
    %v2062 = vmul.f32 1.0, %v2061
    %v2063 = vtanh.pop %v2022
    %v2064 = vxor.u32 %v2023, 2147483648
    %v2065 = vmul.f32 %v2064, 1.442695
    %v2066 = vpow.pop %v2065
    %v2067 = vadd.f32 %v2066, 1.0
    %v2068 = vrcp.pop %v2067
    %v2069 = vmul.f32 1.0, %v2068
    %v2071 = vrot.slane %v1711, 2
    %v2073 = vmul.f32 %v2062, %v2071
    %v2074 = vmul.f32 %v2056, %v2063
    %v2075 = vadd.f32 %v2073, %v2074
    %v2076 = vtanh.pop %v2075
    %v2077 = vmul.f32 %v2069, %v2076
    %v2079 = vrot.slane %v2050, 6
    %2081 = vmatprep.subr.mxu0 %v486
    %2082 = vmatpush1.msra.mxu0 %v485
    %2083 = vmatprep.subr.mxu0 %v490
    %2084 = vmatpush1.msra.mxu0 %v489
    %2085 = vmatprep.subr.mxu0 %v494
    %2086 = vmatpush1.msra.mxu0 %v493
    %2087 = vmatprep.subr.mxu0 %v498
    %2088 = vmatpush1.msra.mxu0 %v497
    %2089 = vmatprep.subr.mxu0 %v502
    %2090 = vmatpush1.msra.mxu0 %v501
    %2091 = vmatprep.subr.mxu0 %v506
    %2092 = vmatpush1.msra.mxu0 %v505
    %2093 = vmatprep.subr.mxu0 %v510
    %2094 = vmatpush1.msra.mxu0 %v509
    %2095 = vmatprep.subr.mxu0 %v514
    %2096 = vmatpush1.msra.mxu0 %v513
    %2097 = vmatprep.subr.mxu0 %v518
    %2098 = vmatpush1.msra.mxu0 %v517
    %2099 = vmatprep.subr.mxu0 %v522
    %2100 = vmatpush1.msra.mxu0 %v521
    %2101 = vmatprep.subr.mxu0 %v526
    %2102 = vmatpush1.msra.mxu0 %v525
    %2103 = vmatprep.subr.mxu0 %v530
    %2104 = vmatpush1.msra.mxu0 %v529
    %2105 = vmatprep.subr.mxu0 %v534
    %2106 = vmatpush1.msra.mxu0 %v533
    %2107 = vmatprep.subr.mxu0 %v538
    %2108 = vmatpush1.msra.mxu0 %v537
    %2109 = vmatprep.subr.mxu0 %v542
    %2110 = vmatpush1.msra.mxu0 %v541
    %2111 = vmatprep.subr.mxu0 %v546
    %2112 = vmatpush1.msra.mxu0 %v545
    %2113 = vmatprep.subr.mxu0 0.0
    %2114 = vmatpush1.msra.mxu0 0.0
    %2115 = vmatprep.subr.mxu0 0.0
    %2116 = vmatpush1.msra.mxu0 0.0
    %2117 = vmatprep.subr.mxu0 0.0
    %2118 = vmatpush1.msra.mxu0 0.0
    %2119 = vmatprep.subr.mxu0 0.0
    %2120 = vmatpush1.msra.mxu0 0.0
    %2121 = vmatprep.subr.mxu0 0.0
    %2122 = vmatpush1.msra.mxu0 0.0
    %2123 = vmatprep.subr.mxu0 0.0
    %2124 = vmatpush1.msra.mxu0 0.0
    %2125 = vmatprep.subr.mxu0 0.0
    %2126 = vmatpush1.msra.mxu0 0.0
    %2127 = vmatprep.subr.mxu0 0.0
    %2128 = vmatpush1.msra.mxu0 0.0
    %2129 = vmatprep.subr.mxu0 0.0
    %2130 = vmatpush1.msra.mxu0 0.0
    %2131 = vmatprep.subr.mxu0 0.0
    %2132 = vmatpush1.msra.mxu0 0.0
    %2133 = vmatprep.subr.mxu0 0.0
    %2134 = vmatpush1.msra.mxu0 0.0
    %2135 = vmatprep.subr.mxu0 0.0
    %2136 = vmatpush1.msra.mxu0 0.0
    %2137 = vmatprep.subr.mxu0 0.0
    %2138 = vmatpush1.msra.mxu0 0.0
    %2139 = vmatprep.subr.mxu0 0.0
    %2140 = vmatpush1.msra.mxu0 0.0
    %2141 = vmatprep.subr.mxu0 0.0
    %2142 = vmatpush1.msra.mxu0 0.0
    %2143 = vmatprep.subr.mxu0 0.0
    %2144 = vmatpush1.msra.mxu0 0.0
    %2145 = vmatprep.mubr.f32.mxu0 0.0
    %2146 = vmatmul.mubr.f32.gmra.mrb[0].mxu0 %v2079
    %v2147 = vpop.f32.mrb[0].mxu0
    %v2148 = vadd.f32 0.0, %v2147
    %v2149 = vpop.f32.mrb[0].mxu0
    %v2150 = vadd.f32 0.0, %v2149
    %2151 = vdwg.mxu0
    %2152 = vmatprep.subr.mxu0 %v488
    %2153 = vmatpush1.msra.mxu0 %v487
    %2154 = vmatprep.subr.mxu0 %v492
    %2155 = vmatpush1.msra.mxu0 %v491
    %2156 = vmatprep.subr.mxu0 %v496
    %2157 = vmatpush1.msra.mxu0 %v495
    %2158 = vmatprep.subr.mxu0 %v500
    %2159 = vmatpush1.msra.mxu0 %v499
    %2160 = vmatprep.subr.mxu0 %v504
    %2161 = vmatpush1.msra.mxu0 %v503
    %2162 = vmatprep.subr.mxu0 %v508
    %2163 = vmatpush1.msra.mxu0 %v507
    %2164 = vmatprep.subr.mxu0 %v512
    %2165 = vmatpush1.msra.mxu0 %v511
    %2166 = vmatprep.subr.mxu0 %v516
    %2167 = vmatpush1.msra.mxu0 %v515
    %2168 = vmatprep.subr.mxu0 %v520
    %2169 = vmatpush1.msra.mxu0 %v519
    %2170 = vmatprep.subr.mxu0 %v524
    %2171 = vmatpush1.msra.mxu0 %v523
    %2172 = vmatprep.subr.mxu0 %v528
    %2173 = vmatpush1.msra.mxu0 %v527
    %2174 = vmatprep.subr.mxu0 %v532
    %2175 = vmatpush1.msra.mxu0 %v531
    %2176 = vmatprep.subr.mxu0 %v536
    %2177 = vmatpush1.msra.mxu0 %v535
    %2178 = vmatprep.subr.mxu0 %v540
    %2179 = vmatpush1.msra.mxu0 %v539
    %2180 = vmatprep.subr.mxu0 %v544
    %2181 = vmatpush1.msra.mxu0 %v543
    %2182 = vmatprep.subr.mxu0 %v548
    %2183 = vmatpush1.msra.mxu0 %v547
    %2184 = vmatprep.subr.mxu0 0.0
    %2185 = vmatpush1.msra.mxu0 0.0
    %2186 = vmatprep.subr.mxu0 0.0
    %2187 = vmatpush1.msra.mxu0 0.0
    %2188 = vmatprep.subr.mxu0 0.0
    %2189 = vmatpush1.msra.mxu0 0.0
    %2190 = vmatprep.subr.mxu0 0.0
    %2191 = vmatpush1.msra.mxu0 0.0
    %2192 = vmatprep.subr.mxu0 0.0
    %2193 = vmatpush1.msra.mxu0 0.0
    %2194 = vmatprep.subr.mxu0 0.0
    %2195 = vmatpush1.msra.mxu0 0.0
    %2196 = vmatprep.subr.mxu0 0.0
    %2197 = vmatpush1.msra.mxu0 0.0
    %2198 = vmatprep.subr.mxu0 0.0
    %2199 = vmatpush1.msra.mxu0 0.0
    %2200 = vmatprep.subr.mxu0 0.0
    %2201 = vmatpush1.msra.mxu0 0.0
    %2202 = vmatprep.subr.mxu0 0.0
    %2203 = vmatpush1.msra.mxu0 0.0
    %2204 = vmatprep.subr.mxu0 0.0
    %2205 = vmatpush1.msra.mxu0 0.0
    %2206 = vmatprep.subr.mxu0 0.0
    %2207 = vmatpush1.msra.mxu0 0.0
    %2208 = vmatprep.subr.mxu0 0.0
    %2209 = vmatpush1.msra.mxu0 0.0
    %2210 = vmatprep.subr.mxu0 0.0
    %2211 = vmatpush1.msra.mxu0 0.0
    %2212 = vmatprep.subr.mxu0 0.0
    %2213 = vmatpush1.msra.mxu0 0.0
    %2214 = vmatprep.subr.mxu0 0.0
    %2215 = vmatpush1.msra.mxu0 0.0
    %2216 = vmatprep.mubr.f32.mxu0 0.0
    %2217 = vmatmul.mubr.f32.gmra.mrb[0].mxu0 %v2079
    %v2218 = vpop.f32.mrb[0].mxu0
    %v2219 = vadd.f32 0.0, %v2218
    %v2220 = vpop.f32.mrb[0].mxu0
    %v2221 = vadd.f32 0.0, %v2220
    %2222 = vdwg.mxu0
    %v2223 = vadd.f32 %v250, %v2148
    %v2224 = vadd.f32 %v252, %v2150
    %v2225 = vadd.f32 %v327, %v2219
    %v2226 = vadd.f32 %v329, %v2221
    %2227 = vmatprep.subr.mxu0 %v550
    %2228 = vmatpush1.msra.mxu0 %v549
    %2229 = vmatprep.subr.mxu0 %v554
    %2230 = vmatpush1.msra.mxu0 %v553
    %2231 = vmatprep.subr.mxu0 %v558
    %2232 = vmatpush1.msra.mxu0 %v557
    %2233 = vmatprep.subr.mxu0 %v562
    %2234 = vmatpush1.msra.mxu0 %v561
    %2235 = vmatprep.subr.mxu0 %v566
    %2236 = vmatpush1.msra.mxu0 %v565
    %2237 = vmatprep.subr.mxu0 %v570
    %2238 = vmatpush1.msra.mxu0 %v569
    %2239 = vmatprep.subr.mxu0 %v574
    %2240 = vmatpush1.msra.mxu0 %v573
    %2241 = vmatprep.subr.mxu0 %v578
    %2242 = vmatpush1.msra.mxu0 %v577
    %2243 = vmatprep.subr.mxu0 %v582
    %2244 = vmatpush1.msra.mxu0 %v581
    %2245 = vmatprep.subr.mxu0 %v586
    %2246 = vmatpush1.msra.mxu0 %v585
    %2247 = vmatprep.subr.mxu0 %v590
    %2248 = vmatpush1.msra.mxu0 %v589
    %2249 = vmatprep.subr.mxu0 %v594
    %2250 = vmatpush1.msra.mxu0 %v593
    %2251 = vmatprep.subr.mxu0 %v598
    %2252 = vmatpush1.msra.mxu0 %v597
    %2253 = vmatprep.subr.mxu0 %v602
    %2254 = vmatpush1.msra.mxu0 %v601
    %2255 = vmatprep.subr.mxu0 %v606
    %2256 = vmatpush1.msra.mxu0 %v605
    %2257 = vmatprep.subr.mxu0 %v610
    %2258 = vmatpush1.msra.mxu0 %v609
    %2259 = vmatprep.subr.mxu0 0.0
    %2260 = vmatpush1.msra.mxu0 0.0
    %2261 = vmatprep.subr.mxu0 0.0
    %2262 = vmatpush1.msra.mxu0 0.0
    %2263 = vmatprep.subr.mxu0 0.0
    %2264 = vmatpush1.msra.mxu0 0.0
    %2265 = vmatprep.subr.mxu0 0.0
    %2266 = vmatpush1.msra.mxu0 0.0
    %2267 = vmatprep.subr.mxu0 0.0
    %2268 = vmatpush1.msra.mxu0 0.0
    %2269 = vmatprep.subr.mxu0 0.0
    %2270 = vmatpush1.msra.mxu0 0.0
    %2271 = vmatprep.subr.mxu0 0.0
    %2272 = vmatpush1.msra.mxu0 0.0
    %2273 = vmatprep.subr.mxu0 0.0
    %2274 = vmatpush1.msra.mxu0 0.0
    %2275 = vmatprep.subr.mxu0 0.0
    %2276 = vmatpush1.msra.mxu0 0.0
    %2277 = vmatprep.subr.mxu0 0.0
    %2278 = vmatpush1.msra.mxu0 0.0
    %2279 = vmatprep.subr.mxu0 0.0
    %2280 = vmatpush1.msra.mxu0 0.0
    %2281 = vmatprep.subr.mxu0 0.0
    %2282 = vmatpush1.msra.mxu0 0.0
    %2283 = vmatprep.subr.mxu0 0.0
    %2284 = vmatpush1.msra.mxu0 0.0
    %2285 = vmatprep.subr.mxu0 0.0
    %2286 = vmatpush1.msra.mxu0 0.0
    %2287 = vmatprep.subr.mxu0 0.0
    %2288 = vmatpush1.msra.mxu0 0.0
    %2289 = vmatprep.subr.mxu0 0.0
    %2290 = vmatpush1.msra.mxu0 0.0
    %2291 = vmatprep.mubr.f32.mxu0 0.0
    %2292 = vmatmul.mubr.f32.gmra.mrb[0].mxu0 %v2077
    %v2293 = vpop.f32.mrb[0].mxu0
    %v2294 = vadd.f32 0.0, %v2293
    %v2295 = vpop.f32.mrb[0].mxu0
    %v2296 = vadd.f32 0.0, %v2295
    %2297 = vdwg.mxu0
    %2298 = vmatprep.subr.mxu0 %v552
    %2299 = vmatpush1.msra.mxu0 %v551
    %2300 = vmatprep.subr.mxu0 %v556
    %2301 = vmatpush1.msra.mxu0 %v555
    %2302 = vmatprep.subr.mxu0 %v560
    %2303 = vmatpush1.msra.mxu0 %v559
    %2304 = vmatprep.subr.mxu0 %v564
    %2305 = vmatpush1.msra.mxu0 %v563
    %2306 = vmatprep.subr.mxu0 %v568
    %2307 = vmatpush1.msra.mxu0 %v567
    %2308 = vmatprep.subr.mxu0 %v572
    %2309 = vmatpush1.msra.mxu0 %v571
    %2310 = vmatprep.subr.mxu0 %v576
    %2311 = vmatpush1.msra.mxu0 %v575
    %2312 = vmatprep.subr.mxu0 %v580
    %2313 = vmatpush1.msra.mxu0 %v579
    %2314 = vmatprep.subr.mxu0 %v584
    %2315 = vmatpush1.msra.mxu0 %v583
    %2316 = vmatprep.subr.mxu0 %v588
    %2317 = vmatpush1.msra.mxu0 %v587
    %2318 = vmatprep.subr.mxu0 %v592
    %2319 = vmatpush1.msra.mxu0 %v591
    %2320 = vmatprep.subr.mxu0 %v596
    %2321 = vmatpush1.msra.mxu0 %v595
    %2322 = vmatprep.subr.mxu0 %v600
    %2323 = vmatpush1.msra.mxu0 %v599
    %2324 = vmatprep.subr.mxu0 %v604
    %2325 = vmatpush1.msra.mxu0 %v603
    %2326 = vmatprep.subr.mxu0 %v608
    %2327 = vmatpush1.msra.mxu0 %v607
    %2328 = vmatprep.subr.mxu0 %v612
    %2329 = vmatpush1.msra.mxu0 %v611
    %2330 = vmatprep.subr.mxu0 0.0
    %2331 = vmatpush1.msra.mxu0 0.0
    %2332 = vmatprep.subr.mxu0 0.0
    %2333 = vmatpush1.msra.mxu0 0.0
    %2334 = vmatprep.subr.mxu0 0.0
    %2335 = vmatpush1.msra.mxu0 0.0
    %2336 = vmatprep.subr.mxu0 0.0
    %2337 = vmatpush1.msra.mxu0 0.0
    %2338 = vmatprep.subr.mxu0 0.0
    %2339 = vmatpush1.msra.mxu0 0.0
    %2340 = vmatprep.subr.mxu0 0.0
    %2341 = vmatpush1.msra.mxu0 0.0
    %2342 = vmatprep.subr.mxu0 0.0
    %2343 = vmatpush1.msra.mxu0 0.0
    %2344 = vmatprep.subr.mxu0 0.0
    %2345 = vmatpush1.msra.mxu0 0.0
    %2346 = vmatprep.subr.mxu0 0.0
    %2347 = vmatpush1.msra.mxu0 0.0
    %2348 = vmatprep.subr.mxu0 0.0
    %2349 = vmatpush1.msra.mxu0 0.0
    %2350 = vmatprep.subr.mxu0 0.0
    %2351 = vmatpush1.msra.mxu0 0.0
    %2352 = vmatprep.subr.mxu0 0.0
    %2353 = vmatpush1.msra.mxu0 0.0
    %2354 = vmatprep.subr.mxu0 0.0
    %2355 = vmatpush1.msra.mxu0 0.0
    %2356 = vmatprep.subr.mxu0 0.0
    %2357 = vmatpush1.msra.mxu0 0.0
    %2358 = vmatprep.subr.mxu0 0.0
    %2359 = vmatpush1.msra.mxu0 0.0
    %2360 = vmatprep.subr.mxu0 0.0
    %2361 = vmatpush1.msra.mxu0 0.0
    %2362 = vmatprep.mubr.f32.mxu0 0.0
    %2363 = vmatmul.mubr.f32.gmra.mrb[0].mxu0 %v2077
    %v2364 = vpop.f32.mrb[0].mxu0
    %v2365 = vadd.f32 0.0, %v2364
    %v2366 = vpop.f32.mrb[0].mxu0
    %v2367 = vadd.f32 0.0, %v2366
    %2368 = vdwg.mxu0
    %v2373 = vrot.slane %v2294, 2
    %v2374 = vrot.slane %v2296, 2
    %v2375 = vrot.slane %v2365, 2
    %v2376 = vrot.slane %v2367, 2
    %v2381 = vadd.f32 %v398, %v2373
    %v2382 = vadd.f32 %v400, %v2374
    %v2383 = vadd.f32 %v475, %v2375
    %v2384 = vadd.f32 %v477, %v2376
    %v2385 = vxor.u32 %v2223, 2147483648
    %v2386 = vmul.f32 %v2385, 1.442695
    %v2387 = vpow.pop %v2386
    %v2388 = vadd.f32 %v2387, 1.0
    %v2389 = vrcp.pop %v2388
    %v2390 = vmul.f32 1.0, %v2389
    %v2391 = vxor.u32 %v2224, 2147483648
    %v2392 = vmul.f32 %v2391, 1.442695
    %v2393 = vpow.pop %v2392
    %v2394 = vadd.f32 %v2393, 1.0
    %v2395 = vrcp.pop %v2394
    %v2396 = vmul.f32 1.0, %v2395
    %v2397 = vtanh.pop %v2225
    %v2398 = vxor.u32 %v2226, 2147483648
    %v2399 = vmul.f32 %v2398, 1.442695
    %v2400 = vpow.pop %v2399
    %v2401 = vadd.f32 %v2400, 1.0
    %v2402 = vrcp.pop %v2401
    %v2403 = vmul.f32 1.0, %v2402
    %v2405 = vrot.slane %v2048, 6
    %v2407 = vmul.f32 %v2396, %v2405
    %v2408 = vmul.f32 %v2390, %v2397
    %v2409 = vadd.f32 %v2407, %v2408
    %v2410 = vtanh.pop %v2409
    %v2411 = vmul.f32 %v2403, %v2410
    %v2412 = vxor.u32 %v2381, 2147483648
    %v2413 = vmul.f32 %v2412, 1.442695
    %v2414 = vpow.pop %v2413
    %v2415 = vadd.f32 %v2414, 1.0
    %v2416 = vrcp.pop %v2415
    %v2417 = vmul.f32 1.0, %v2416
    %v2418 = vxor.u32 %v2382, 2147483648
    %v2419 = vmul.f32 %v2418, 1.442695
    %v2420 = vpow.pop %v2419
    %v2421 = vadd.f32 %v2420, 1.0
    %v2422 = vrcp.pop %v2421
    %v2423 = vmul.f32 1.0, %v2422
    %v2424 = vtanh.pop %v2383
    %v2425 = vxor.u32 %v2384, 2147483648
    %v2426 = vmul.f32 %v2425, 1.442695
    %v2427 = vpow.pop %v2426
    %v2428 = vadd.f32 %v2427, 1.0
    %v2429 = vrcp.pop %v2428
    %v2430 = vmul.f32 1.0, %v2429
    %v2432 = vrot.slane %v2075, 2
    %v2434 = vmul.f32 %v2423, %v2432
    %v2435 = vmul.f32 %v2417, %v2424
    %v2436 = vadd.f32 %v2434, %v2435
    %v2437 = vtanh.pop %v2436
    %v2438 = vmul.f32 %v2430, %v2437
    %2439 = vmatprep.subr.mxu0 %v486
    %2440 = vmatpush1.msra.mxu0 %v485
    %2441 = vmatprep.subr.mxu0 %v490
    %2442 = vmatpush1.msra.mxu0 %v489
    %2443 = vmatprep.subr.mxu0 %v494
    %2444 = vmatpush1.msra.mxu0 %v493
    %2445 = vmatprep.subr.mxu0 %v498
    %2446 = vmatpush1.msra.mxu0 %v497
    %2447 = vmatprep.subr.mxu0 %v502
    %2448 = vmatpush1.msra.mxu0 %v501
    %2449 = vmatprep.subr.mxu0 %v506
    %2450 = vmatpush1.msra.mxu0 %v505
    %2451 = vmatprep.subr.mxu0 %v510
    %2452 = vmatpush1.msra.mxu0 %v509
    %2453 = vmatprep.subr.mxu0 %v514
    %2454 = vmatpush1.msra.mxu0 %v513
    %2455 = vmatprep.subr.mxu0 %v518
    %2456 = vmatpush1.msra.mxu0 %v517
    %2457 = vmatprep.subr.mxu0 %v522
    %2458 = vmatpush1.msra.mxu0 %v521
    %2459 = vmatprep.subr.mxu0 %v526
    %2460 = vmatpush1.msra.mxu0 %v525
    %2461 = vmatprep.subr.mxu0 %v530
    %2462 = vmatpush1.msra.mxu0 %v529
    %2463 = vmatprep.subr.mxu0 %v534
    %2464 = vmatpush1.msra.mxu0 %v533
    %2465 = vmatprep.subr.mxu0 %v538
    %2466 = vmatpush1.msra.mxu0 %v537
    %2467 = vmatprep.subr.mxu0 %v542
    %2468 = vmatpush1.msra.mxu0 %v541
    %2469 = vmatprep.subr.mxu0 %v546
    %2470 = vmatpush1.msra.mxu0 %v545
    %2471 = vmatprep.subr.mxu0 0.0
    %2472 = vmatpush1.msra.mxu0 0.0
    %2473 = vmatprep.subr.mxu0 0.0
    %2474 = vmatpush1.msra.mxu0 0.0
    %2475 = vmatprep.subr.mxu0 0.0
    %2476 = vmatpush1.msra.mxu0 0.0
    %2477 = vmatprep.subr.mxu0 0.0
    %2478 = vmatpush1.msra.mxu0 0.0
    %2479 = vmatprep.subr.mxu0 0.0
    %2480 = vmatpush1.msra.mxu0 0.0
    %2481 = vmatprep.subr.mxu0 0.0
    %2482 = vmatpush1.msra.mxu0 0.0
    %2483 = vmatprep.subr.mxu0 0.0
    %2484 = vmatpush1.msra.mxu0 0.0
    %2485 = vmatprep.subr.mxu0 0.0
    %2486 = vmatpush1.msra.mxu0 0.0
    %2487 = vmatprep.subr.mxu0 0.0
    %2488 = vmatpush1.msra.mxu0 0.0
    %2489 = vmatprep.subr.mxu0 0.0
    %2490 = vmatpush1.msra.mxu0 0.0
    %2491 = vmatprep.subr.mxu0 0.0
    %2492 = vmatpush1.msra.mxu0 0.0
    %2493 = vmatprep.subr.mxu0 0.0
    %2494 = vmatpush1.msra.mxu0 0.0
    %2495 = vmatprep.subr.mxu0 0.0
    %2496 = vmatpush1.msra.mxu0 0.0
    %2497 = vmatprep.subr.mxu0 0.0
    %2498 = vmatpush1.msra.mxu0 0.0
    %2499 = vmatprep.subr.mxu0 0.0
    %2500 = vmatpush1.msra.mxu0 0.0
    %2501 = vmatprep.subr.mxu0 0.0
    %2502 = vmatpush1.msra.mxu0 0.0
    %2503 = vmatprep.mubr.f32.mxu0 0.0
    %2504 = vmatmul.mubr.f32.gmra.mrb[0].mxu0 %v2411
    %v2505 = vpop.f32.mrb[0].mxu0
    %v2506 = vadd.f32 0.0, %v2505
    %v2507 = vpop.f32.mrb[0].mxu0
    %v2508 = vadd.f32 0.0, %v2507
    %2509 = vdwg.mxu0
    %2510 = vmatprep.subr.mxu0 %v488
    %2511 = vmatpush1.msra.mxu0 %v487
    %2512 = vmatprep.subr.mxu0 %v492
    %2513 = vmatpush1.msra.mxu0 %v491
    %2514 = vmatprep.subr.mxu0 %v496
    %2515 = vmatpush1.msra.mxu0 %v495
    %2516 = vmatprep.subr.mxu0 %v500
    %2517 = vmatpush1.msra.mxu0 %v499
    %2518 = vmatprep.subr.mxu0 %v504
    %2519 = vmatpush1.msra.mxu0 %v503
    %2520 = vmatprep.subr.mxu0 %v508
    %2521 = vmatpush1.msra.mxu0 %v507
    %2522 = vmatprep.subr.mxu0 %v512
    %2523 = vmatpush1.msra.mxu0 %v511
    %2524 = vmatprep.subr.mxu0 %v516
    %2525 = vmatpush1.msra.mxu0 %v515
    %2526 = vmatprep.subr.mxu0 %v520
    %2527 = vmatpush1.msra.mxu0 %v519
    %2528 = vmatprep.subr.mxu0 %v524
    %2529 = vmatpush1.msra.mxu0 %v523
    %2530 = vmatprep.subr.mxu0 %v528
    %2531 = vmatpush1.msra.mxu0 %v527
    %2532 = vmatprep.subr.mxu0 %v532
    %2533 = vmatpush1.msra.mxu0 %v531
    %2534 = vmatprep.subr.mxu0 %v536
    %2535 = vmatpush1.msra.mxu0 %v535
    %2536 = vmatprep.subr.mxu0 %v540
    %2537 = vmatpush1.msra.mxu0 %v539
    %2538 = vmatprep.subr.mxu0 %v544
    %2539 = vmatpush1.msra.mxu0 %v543
    %2540 = vmatprep.subr.mxu0 %v548
    %2541 = vmatpush1.msra.mxu0 %v547
    %2542 = vmatprep.subr.mxu0 0.0
    %2543 = vmatpush1.msra.mxu0 0.0
    %2544 = vmatprep.subr.mxu0 0.0
    %2545 = vmatpush1.msra.mxu0 0.0
    %2546 = vmatprep.subr.mxu0 0.0
    %2547 = vmatpush1.msra.mxu0 0.0
    %2548 = vmatprep.subr.mxu0 0.0
    %2549 = vmatpush1.msra.mxu0 0.0
    %2550 = vmatprep.subr.mxu0 0.0
    %2551 = vmatpush1.msra.mxu0 0.0
    %2552 = vmatprep.subr.mxu0 0.0
    %2553 = vmatpush1.msra.mxu0 0.0
    %2554 = vmatprep.subr.mxu0 0.0
    %2555 = vmatpush1.msra.mxu0 0.0
    %2556 = vmatprep.subr.mxu0 0.0
    %2557 = vmatpush1.msra.mxu0 0.0
    %2558 = vmatprep.subr.mxu0 0.0
    %2559 = vmatpush1.msra.mxu0 0.0
    %2560 = vmatprep.subr.mxu0 0.0
    %2561 = vmatpush1.msra.mxu0 0.0
    %2562 = vmatprep.subr.mxu0 0.0
    %2563 = vmatpush1.msra.mxu0 0.0
    %2564 = vmatprep.subr.mxu0 0.0
    %2565 = vmatpush1.msra.mxu0 0.0
    %2566 = vmatprep.subr.mxu0 0.0
    %2567 = vmatpush1.msra.mxu0 0.0
    %2568 = vmatprep.subr.mxu0 0.0
    %2569 = vmatpush1.msra.mxu0 0.0
    %2570 = vmatprep.subr.mxu0 0.0
    %2571 = vmatpush1.msra.mxu0 0.0
    %2572 = vmatprep.subr.mxu0 0.0
    %2573 = vmatpush1.msra.mxu0 0.0
    %2574 = vmatprep.mubr.f32.mxu0 0.0
    %2575 = vmatmul.mubr.f32.gmra.mrb[0].mxu0 %v2411
    %v2576 = vpop.f32.mrb[0].mxu0
    %v2577 = vadd.f32 0.0, %v2576
    %v2578 = vpop.f32.mrb[0].mxu0
    %v2579 = vadd.f32 0.0, %v2578
    %2580 = vdwg.mxu0
    %v2585 = vrot.slane %v2506, 6
    %v2586 = vrot.slane %v2508, 6
    %v2587 = vrot.slane %v2577, 6
    %v2588 = vrot.slane %v2579, 6
    %v2593 = vadd.f32 %v250, %v2585
    %v2594 = vadd.f32 %v252, %v2586
    %v2595 = vadd.f32 %v327, %v2587
    %v2596 = vadd.f32 %v329, %v2588
    %v2598 = vrot.slane %v2438, 6
    %2600 = vmatprep.subr.mxu0 %v550
    %2601 = vmatpush1.msra.mxu0 %v549
    %2602 = vmatprep.subr.mxu0 %v554
    %2603 = vmatpush1.msra.mxu0 %v553
    %2604 = vmatprep.subr.mxu0 %v558
    %2605 = vmatpush1.msra.mxu0 %v557
    %2606 = vmatprep.subr.mxu0 %v562
    %2607 = vmatpush1.msra.mxu0 %v561
    %2608 = vmatprep.subr.mxu0 %v566
    %2609 = vmatpush1.msra.mxu0 %v565
    %2610 = vmatprep.subr.mxu0 %v570
    %2611 = vmatpush1.msra.mxu0 %v569
    %2612 = vmatprep.subr.mxu0 %v574
    %2613 = vmatpush1.msra.mxu0 %v573
    %2614 = vmatprep.subr.mxu0 %v578
    %2615 = vmatpush1.msra.mxu0 %v577
    %2616 = vmatprep.subr.mxu0 %v582
    %2617 = vmatpush1.msra.mxu0 %v581
    %2618 = vmatprep.subr.mxu0 %v586
    %2619 = vmatpush1.msra.mxu0 %v585
    %2620 = vmatprep.subr.mxu0 %v590
    %2621 = vmatpush1.msra.mxu0 %v589
    %2622 = vmatprep.subr.mxu0 %v594
    %2623 = vmatpush1.msra.mxu0 %v593
    %2624 = vmatprep.subr.mxu0 %v598
    %2625 = vmatpush1.msra.mxu0 %v597
    %2626 = vmatprep.subr.mxu0 %v602
    %2627 = vmatpush1.msra.mxu0 %v601
    %2628 = vmatprep.subr.mxu0 %v606
    %2629 = vmatpush1.msra.mxu0 %v605
    %2630 = vmatprep.subr.mxu0 %v610
    %2631 = vmatpush1.msra.mxu0 %v609
    %2632 = vmatprep.subr.mxu0 0.0
    %2633 = vmatpush1.msra.mxu0 0.0
    %2634 = vmatprep.subr.mxu0 0.0
    %2635 = vmatpush1.msra.mxu0 0.0
    %2636 = vmatprep.subr.mxu0 0.0
    %2637 = vmatpush1.msra.mxu0 0.0
    %2638 = vmatprep.subr.mxu0 0.0
    %2639 = vmatpush1.msra.mxu0 0.0
    %2640 = vmatprep.subr.mxu0 0.0
    %2641 = vmatpush1.msra.mxu0 0.0
    %2642 = vmatprep.subr.mxu0 0.0
    %2643 = vmatpush1.msra.mxu0 0.0
    %2644 = vmatprep.subr.mxu0 0.0
    %2645 = vmatpush1.msra.mxu0 0.0
    %2646 = vmatprep.subr.mxu0 0.0
    %2647 = vmatpush1.msra.mxu0 0.0
    %2648 = vmatprep.subr.mxu0 0.0
    %2649 = vmatpush1.msra.mxu0 0.0
    %2650 = vmatprep.subr.mxu0 0.0
    %2651 = vmatpush1.msra.mxu0 0.0
    %2652 = vmatprep.subr.mxu0 0.0
    %2653 = vmatpush1.msra.mxu0 0.0
    %2654 = vmatprep.subr.mxu0 0.0
    %2655 = vmatpush1.msra.mxu0 0.0
    %2656 = vmatprep.subr.mxu0 0.0
    %2657 = vmatpush1.msra.mxu0 0.0
    %2658 = vmatprep.subr.mxu0 0.0
    %2659 = vmatpush1.msra.mxu0 0.0
    %2660 = vmatprep.subr.mxu0 0.0
    %2661 = vmatpush1.msra.mxu0 0.0
    %2662 = vmatprep.subr.mxu0 0.0
    %2663 = vmatpush1.msra.mxu0 0.0
    %2664 = vmatprep.mubr.f32.mxu0 0.0
    %2665 = vmatmul.mubr.f32.gmra.mrb[0].mxu0 %v2598
    %v2666 = vpop.f32.mrb[0].mxu0
    %v2667 = vadd.f32 0.0, %v2666
    %v2668 = vpop.f32.mrb[0].mxu0
    %v2669 = vadd.f32 0.0, %v2668
    %2670 = vdwg.mxu0
    %2671 = vmatprep.subr.mxu0 %v552
    %2672 = vmatpush1.msra.mxu0 %v551
    %2673 = vmatprep.subr.mxu0 %v556
    %2674 = vmatpush1.msra.mxu0 %v555
    %2675 = vmatprep.subr.mxu0 %v560
    %2676 = vmatpush1.msra.mxu0 %v559
    %2677 = vmatprep.subr.mxu0 %v564
    %2678 = vmatpush1.msra.mxu0 %v563
    %2679 = vmatprep.subr.mxu0 %v568
    %2680 = vmatpush1.msra.mxu0 %v567
    %2681 = vmatprep.subr.mxu0 %v572
    %2682 = vmatpush1.msra.mxu0 %v571
    %2683 = vmatprep.subr.mxu0 %v576
    %2684 = vmatpush1.msra.mxu0 %v575
    %2685 = vmatprep.subr.mxu0 %v580
    %2686 = vmatpush1.msra.mxu0 %v579
    %2687 = vmatprep.subr.mxu0 %v584
    %2688 = vmatpush1.msra.mxu0 %v583
    %2689 = vmatprep.subr.mxu0 %v588
    %2690 = vmatpush1.msra.mxu0 %v587
    %2691 = vmatprep.subr.mxu0 %v592
    %2692 = vmatpush1.msra.mxu0 %v591
    %2693 = vmatprep.subr.mxu0 %v596
    %2694 = vmatpush1.msra.mxu0 %v595
    %2695 = vmatprep.subr.mxu0 %v600
    %2696 = vmatpush1.msra.mxu0 %v599
    %2697 = vmatprep.subr.mxu0 %v604
    %2698 = vmatpush1.msra.mxu0 %v603
    %2699 = vmatprep.subr.mxu0 %v608
    %2700 = vmatpush1.msra.mxu0 %v607
    %2701 = vmatprep.subr.mxu0 %v612
    %2702 = vmatpush1.msra.mxu0 %v611
    %2703 = vmatprep.subr.mxu0 0.0
    %2704 = vmatpush1.msra.mxu0 0.0
    %2705 = vmatprep.subr.mxu0 0.0
    %2706 = vmatpush1.msra.mxu0 0.0
    %2707 = vmatprep.subr.mxu0 0.0
    %2708 = vmatpush1.msra.mxu0 0.0
    %2709 = vmatprep.subr.mxu0 0.0
    %2710 = vmatpush1.msra.mxu0 0.0
    %2711 = vmatprep.subr.mxu0 0.0
    %2712 = vmatpush1.msra.mxu0 0.0
    %2713 = vmatprep.subr.mxu0 0.0
    %2714 = vmatpush1.msra.mxu0 0.0
    %2715 = vmatprep.subr.mxu0 0.0
    %2716 = vmatpush1.msra.mxu0 0.0
    %2717 = vmatprep.subr.mxu0 0.0
    %2718 = vmatpush1.msra.mxu0 0.0
    %2719 = vmatprep.subr.mxu0 0.0
    %2720 = vmatpush1.msra.mxu0 0.0
    %2721 = vmatprep.subr.mxu0 0.0
    %2722 = vmatpush1.msra.mxu0 0.0
    %2723 = vmatprep.subr.mxu0 0.0
    %2724 = vmatpush1.msra.mxu0 0.0
    %2725 = vmatprep.subr.mxu0 0.0
    %2726 = vmatpush1.msra.mxu0 0.0
    %2727 = vmatprep.subr.mxu0 0.0
    %2728 = vmatpush1.msra.mxu0 0.0
    %2729 = vmatprep.subr.mxu0 0.0
    %2730 = vmatpush1.msra.mxu0 0.0
    %2731 = vmatprep.subr.mxu0 0.0
    %2732 = vmatpush1.msra.mxu0 0.0
    %2733 = vmatprep.subr.mxu0 0.0
    %2734 = vmatpush1.msra.mxu0 0.0
    %2735 = vmatprep.mubr.f32.mxu0 0.0
    %2736 = vmatmul.mubr.f32.gmra.mrb[0].mxu0 %v2598
    %v2737 = vpop.f32.mrb[0].mxu0
    %v2738 = vadd.f32 0.0, %v2737
    %v2739 = vpop.f32.mrb[0].mxu0
    %v2740 = vadd.f32 0.0, %v2739
    %2741 = vdwg.mxu0
    %v2746 = vrot.slane %v2667, 4
    %v2747 = vrot.slane %v2669, 4
    %v2748 = vrot.slane %v2738, 4
    %v2749 = vrot.slane %v2740, 4
    %v2754 = vadd.f32 %v398, %v2746
    %v2755 = vadd.f32 %v400, %v2747
    %v2756 = vadd.f32 %v475, %v2748
    %v2757 = vadd.f32 %v477, %v2749
    %v2758 = vxor.u32 %v2593, 2147483648
    %v2759 = vmul.f32 %v2758, 1.442695
    %v2760 = vpow.pop %v2759
    %v2761 = vadd.f32 %v2760, 1.0
    %v2762 = vrcp.pop %v2761
    %v2763 = vmul.f32 1.0, %v2762
    %v2764 = vxor.u32 %v2594, 2147483648
    %v2765 = vmul.f32 %v2764, 1.442695
    %v2766 = vpow.pop %v2765
    %v2767 = vadd.f32 %v2766, 1.0
    %v2768 = vrcp.pop %v2767
    %v2769 = vmul.f32 1.0, %v2768
    %v2770 = vtanh.pop %v2595
    %v2771 = vxor.u32 %v2596, 2147483648
    %v2772 = vmul.f32 %v2771, 1.442695
    %v2773 = vpow.pop %v2772
    %v2774 = vadd.f32 %v2773, 1.0
    %v2775 = vrcp.pop %v2774
    %v2776 = vmul.f32 1.0, %v2775
    %v2778 = vrot.slane %v2409, 6
    %v2780 = vmul.f32 %v2769, %v2778
    %v2781 = vmul.f32 %v2763, %v2770
    %v2782 = vadd.f32 %v2780, %v2781
    %v2783 = vtanh.pop %v2782
    %v2784 = vmul.f32 %v2776, %v2783
    %v2785 = vxor.u32 %v2754, 2147483648
    %v2786 = vmul.f32 %v2785, 1.442695
    %v2787 = vpow.pop %v2786
    %v2788 = vadd.f32 %v2787, 1.0
    %v2789 = vrcp.pop %v2788
    %v2790 = vmul.f32 1.0, %v2789
    %v2791 = vxor.u32 %v2755, 2147483648
    %v2792 = vmul.f32 %v2791, 1.442695
    %v2793 = vpow.pop %v2792
    %v2794 = vadd.f32 %v2793, 1.0
    %v2795 = vrcp.pop %v2794
    %v2796 = vmul.f32 1.0, %v2795
    %v2797 = vtanh.pop %v2756
    %v2798 = vxor.u32 %v2757, 2147483648
    %v2799 = vmul.f32 %v2798, 1.442695
    %v2800 = vpow.pop %v2799
    %v2801 = vadd.f32 %v2800, 1.0
    %v2802 = vrcp.pop %v2801
    %v2803 = vmul.f32 1.0, %v2802
    %v2805 = vrot.slane %v2436, 2
    %v2807 = vmul.f32 %v2796, %v2805
    %v2808 = vmul.f32 %v2790, %v2797
    %v2809 = vadd.f32 %v2807, %v2808
    %v2810 = vtanh.pop %v2809
    %v2811 = vmul.f32 %v2803, %v2810
    %v2813 = vrot.slane %v2784, 2
    %2815 = vmatprep.subr.mxu0 %v486
    %2816 = vmatpush1.msra.mxu0 %v485
    %2817 = vmatprep.subr.mxu0 %v490
    %2818 = vmatpush1.msra.mxu0 %v489
    %2819 = vmatprep.subr.mxu0 %v494
    %2820 = vmatpush1.msra.mxu0 %v493
    %2821 = vmatprep.subr.mxu0 %v498
    %2822 = vmatpush1.msra.mxu0 %v497
    %2823 = vmatprep.subr.mxu0 %v502
    %2824 = vmatpush1.msra.mxu0 %v501
    %2825 = vmatprep.subr.mxu0 %v506
    %2826 = vmatpush1.msra.mxu0 %v505
    %2827 = vmatprep.subr.mxu0 %v510
    %2828 = vmatpush1.msra.mxu0 %v509
    %2829 = vmatprep.subr.mxu0 %v514
    %2830 = vmatpush1.msra.mxu0 %v513
    %2831 = vmatprep.subr.mxu0 %v518
    %2832 = vmatpush1.msra.mxu0 %v517
    %2833 = vmatprep.subr.mxu0 %v522
    %2834 = vmatpush1.msra.mxu0 %v521
    %2835 = vmatprep.subr.mxu0 %v526
    %2836 = vmatpush1.msra.mxu0 %v525
    %2837 = vmatprep.subr.mxu0 %v530
    %2838 = vmatpush1.msra.mxu0 %v529
    %2839 = vmatprep.subr.mxu0 %v534
    %2840 = vmatpush1.msra.mxu0 %v533
    %2841 = vmatprep.subr.mxu0 %v538
    %2842 = vmatpush1.msra.mxu0 %v537
    %2843 = vmatprep.subr.mxu0 %v542
    %2844 = vmatpush1.msra.mxu0 %v541
    %2845 = vmatprep.subr.mxu0 %v546
    %2846 = vmatpush1.msra.mxu0 %v545
    %2847 = vmatprep.subr.mxu0 0.0
    %2848 = vmatpush1.msra.mxu0 0.0
    %2849 = vmatprep.subr.mxu0 0.0
    %2850 = vmatpush1.msra.mxu0 0.0
    %2851 = vmatprep.subr.mxu0 0.0
    %2852 = vmatpush1.msra.mxu0 0.0
    %2853 = vmatprep.subr.mxu0 0.0
    %2854 = vmatpush1.msra.mxu0 0.0
    %2855 = vmatprep.subr.mxu0 0.0
    %2856 = vmatpush1.msra.mxu0 0.0
    %2857 = vmatprep.subr.mxu0 0.0
    %2858 = vmatpush1.msra.mxu0 0.0
    %2859 = vmatprep.subr.mxu0 0.0
    %2860 = vmatpush1.msra.mxu0 0.0
    %2861 = vmatprep.subr.mxu0 0.0
    %2862 = vmatpush1.msra.mxu0 0.0
    %2863 = vmatprep.subr.mxu0 0.0
    %2864 = vmatpush1.msra.mxu0 0.0
    %2865 = vmatprep.subr.mxu0 0.0
    %2866 = vmatpush1.msra.mxu0 0.0
    %2867 = vmatprep.subr.mxu0 0.0
    %2868 = vmatpush1.msra.mxu0 0.0
    %2869 = vmatprep.subr.mxu0 0.0
    %2870 = vmatpush1.msra.mxu0 0.0
    %2871 = vmatprep.subr.mxu0 0.0
    %2872 = vmatpush1.msra.mxu0 0.0
    %2873 = vmatprep.subr.mxu0 0.0
    %2874 = vmatpush1.msra.mxu0 0.0
    %2875 = vmatprep.subr.mxu0 0.0
    %2876 = vmatpush1.msra.mxu0 0.0
    %2877 = vmatprep.subr.mxu0 0.0
    %2878 = vmatpush1.msra.mxu0 0.0
    %2879 = vmatprep.mubr.f32.mxu0 0.0
    %2880 = vmatmul.mubr.f32.gmra.mrb[0].mxu0 %v2813
    %v2881 = vpop.f32.mrb[0].mxu0
    %v2882 = vadd.f32 0.0, %v2881
    %v2883 = vpop.f32.mrb[0].mxu0
    %v2884 = vadd.f32 0.0, %v2883
    %2885 = vdwg.mxu0
    %2886 = vmatprep.subr.mxu0 %v488
    %2887 = vmatpush1.msra.mxu0 %v487
    %2888 = vmatprep.subr.mxu0 %v492
    %2889 = vmatpush1.msra.mxu0 %v491
    %2890 = vmatprep.subr.mxu0 %v496
    %2891 = vmatpush1.msra.mxu0 %v495
    %2892 = vmatprep.subr.mxu0 %v500
    %2893 = vmatpush1.msra.mxu0 %v499
    %2894 = vmatprep.subr.mxu0 %v504
    %2895 = vmatpush1.msra.mxu0 %v503
    %2896 = vmatprep.subr.mxu0 %v508
    %2897 = vmatpush1.msra.mxu0 %v507
    %2898 = vmatprep.subr.mxu0 %v512
    %2899 = vmatpush1.msra.mxu0 %v511
    %2900 = vmatprep.subr.mxu0 %v516
    %2901 = vmatpush1.msra.mxu0 %v515
    %2902 = vmatprep.subr.mxu0 %v520
    %2903 = vmatpush1.msra.mxu0 %v519
    %2904 = vmatprep.subr.mxu0 %v524
    %2905 = vmatpush1.msra.mxu0 %v523
    %2906 = vmatprep.subr.mxu0 %v528
    %2907 = vmatpush1.msra.mxu0 %v527
    %2908 = vmatprep.subr.mxu0 %v532
    %2909 = vmatpush1.msra.mxu0 %v531
    %2910 = vmatprep.subr.mxu0 %v536
    %2911 = vmatpush1.msra.mxu0 %v535
    %2912 = vmatprep.subr.mxu0 %v540
    %2913 = vmatpush1.msra.mxu0 %v539
    %2914 = vmatprep.subr.mxu0 %v544
    %2915 = vmatpush1.msra.mxu0 %v543
    %2916 = vmatprep.subr.mxu0 %v548
    %2917 = vmatpush1.msra.mxu0 %v547
    %2918 = vmatprep.subr.mxu0 0.0
    %2919 = vmatpush1.msra.mxu0 0.0
    %2920 = vmatprep.subr.mxu0 0.0
    %2921 = vmatpush1.msra.mxu0 0.0
    %2922 = vmatprep.subr.mxu0 0.0
    %2923 = vmatpush1.msra.mxu0 0.0
    %2924 = vmatprep.subr.mxu0 0.0
    %2925 = vmatpush1.msra.mxu0 0.0
    %2926 = vmatprep.subr.mxu0 0.0
    %2927 = vmatpush1.msra.mxu0 0.0
    %2928 = vmatprep.subr.mxu0 0.0
    %2929 = vmatpush1.msra.mxu0 0.0
    %2930 = vmatprep.subr.mxu0 0.0
    %2931 = vmatpush1.msra.mxu0 0.0
    %2932 = vmatprep.subr.mxu0 0.0
    %2933 = vmatpush1.msra.mxu0 0.0
    %2934 = vmatprep.subr.mxu0 0.0
    %2935 = vmatpush1.msra.mxu0 0.0
    %2936 = vmatprep.subr.mxu0 0.0
    %2937 = vmatpush1.msra.mxu0 0.0
    %2938 = vmatprep.subr.mxu0 0.0
    %2939 = vmatpush1.msra.mxu0 0.0
    %2940 = vmatprep.subr.mxu0 0.0
    %2941 = vmatpush1.msra.mxu0 0.0
    %2942 = vmatprep.subr.mxu0 0.0
    %2943 = vmatpush1.msra.mxu0 0.0
    %2944 = vmatprep.subr.mxu0 0.0
    %2945 = vmatpush1.msra.mxu0 0.0
    %2946 = vmatprep.subr.mxu0 0.0
    %2947 = vmatpush1.msra.mxu0 0.0
    %2948 = vmatprep.subr.mxu0 0.0
    %2949 = vmatpush1.msra.mxu0 0.0
    %2950 = vmatprep.mubr.f32.mxu0 0.0
    %2951 = vmatmul.mubr.f32.gmra.mrb[0].mxu0 %v2813
    %v2952 = vpop.f32.mrb[0].mxu0
    %v2953 = vadd.f32 0.0, %v2952
    %v2954 = vpop.f32.mrb[0].mxu0
    %v2955 = vadd.f32 0.0, %v2954
    %2956 = vdwg.mxu0
    %v2961 = vrot.slane %v2882, 4
    %v2962 = vrot.slane %v2884, 4
    %v2963 = vrot.slane %v2953, 4
    %v2964 = vrot.slane %v2955, 4
    %v2969 = vadd.f32 %v250, %v2961
    %v2970 = vadd.f32 %v252, %v2962
    %v2971 = vadd.f32 %v327, %v2963
    %v2972 = vadd.f32 %v329, %v2964
    %v2974 = vrot.slane %v2811, 4
    %2976 = vmatprep.subr.mxu0 %v550
    %2977 = vmatpush1.msra.mxu0 %v549
    %2978 = vmatprep.subr.mxu0 %v554
    %2979 = vmatpush1.msra.mxu0 %v553
    %2980 = vmatprep.subr.mxu0 %v558
    %2981 = vmatpush1.msra.mxu0 %v557
    %2982 = vmatprep.subr.mxu0 %v562
    %2983 = vmatpush1.msra.mxu0 %v561
    %2984 = vmatprep.subr.mxu0 %v566
    %2985 = vmatpush1.msra.mxu0 %v565
    %2986 = vmatprep.subr.mxu0 %v570
    %2987 = vmatpush1.msra.mxu0 %v569
    %2988 = vmatprep.subr.mxu0 %v574
    %2989 = vmatpush1.msra.mxu0 %v573
    %2990 = vmatprep.subr.mxu0 %v578
    %2991 = vmatpush1.msra.mxu0 %v577
    %2992 = vmatprep.subr.mxu0 %v582
    %2993 = vmatpush1.msra.mxu0 %v581
    %2994 = vmatprep.subr.mxu0 %v586
    %2995 = vmatpush1.msra.mxu0 %v585
    %2996 = vmatprep.subr.mxu0 %v590
    %2997 = vmatpush1.msra.mxu0 %v589
    %2998 = vmatprep.subr.mxu0 %v594
    %2999 = vmatpush1.msra.mxu0 %v593
    %3000 = vmatprep.subr.mxu0 %v598
    %3001 = vmatpush1.msra.mxu0 %v597
    %3002 = vmatprep.subr.mxu0 %v602
    %3003 = vmatpush1.msra.mxu0 %v601
    %3004 = vmatprep.subr.mxu0 %v606
    %3005 = vmatpush1.msra.mxu0 %v605
    %3006 = vmatprep.subr.mxu0 %v610
    %3007 = vmatpush1.msra.mxu0 %v609
    %3008 = vmatprep.subr.mxu0 0.0
    %3009 = vmatpush1.msra.mxu0 0.0
    %3010 = vmatprep.subr.mxu0 0.0
    %3011 = vmatpush1.msra.mxu0 0.0
    %3012 = vmatprep.subr.mxu0 0.0
    %3013 = vmatpush1.msra.mxu0 0.0
    %3014 = vmatprep.subr.mxu0 0.0
    %3015 = vmatpush1.msra.mxu0 0.0
    %3016 = vmatprep.subr.mxu0 0.0
    %3017 = vmatpush1.msra.mxu0 0.0
    %3018 = vmatprep.subr.mxu0 0.0
    %3019 = vmatpush1.msra.mxu0 0.0
    %3020 = vmatprep.subr.mxu0 0.0
    %3021 = vmatpush1.msra.mxu0 0.0
    %3022 = vmatprep.subr.mxu0 0.0
    %3023 = vmatpush1.msra.mxu0 0.0
    %3024 = vmatprep.subr.mxu0 0.0
    %3025 = vmatpush1.msra.mxu0 0.0
    %3026 = vmatprep.subr.mxu0 0.0
    %3027 = vmatpush1.msra.mxu0 0.0
    %3028 = vmatprep.subr.mxu0 0.0
    %3029 = vmatpush1.msra.mxu0 0.0
    %3030 = vmatprep.subr.mxu0 0.0
    %3031 = vmatpush1.msra.mxu0 0.0
    %3032 = vmatprep.subr.mxu0 0.0
    %3033 = vmatpush1.msra.mxu0 0.0
    %3034 = vmatprep.subr.mxu0 0.0
    %3035 = vmatpush1.msra.mxu0 0.0
    %3036 = vmatprep.subr.mxu0 0.0
    %3037 = vmatpush1.msra.mxu0 0.0
    %3038 = vmatprep.subr.mxu0 0.0
    %3039 = vmatpush1.msra.mxu0 0.0
    %3040 = vmatprep.mubr.f32.mxu0 0.0
    %3041 = vmatmul.mubr.f32.gmra.mrb[0].mxu0 %v2974
    %v3042 = vpop.f32.mrb[0].mxu0
    %v3043 = vadd.f32 0.0, %v3042
    %v3044 = vpop.f32.mrb[0].mxu0
    %v3045 = vadd.f32 0.0, %v3044
    %3046 = vdwg.mxu0
    %3047 = vmatprep.subr.mxu0 %v552
    %3048 = vmatpush1.msra.mxu0 %v551
    %3049 = vmatprep.subr.mxu0 %v556
    %3050 = vmatpush1.msra.mxu0 %v555
    %3051 = vmatprep.subr.mxu0 %v560
    %3052 = vmatpush1.msra.mxu0 %v559
    %3053 = vmatprep.subr.mxu0 %v564
    %3054 = vmatpush1.msra.mxu0 %v563
    %3055 = vmatprep.subr.mxu0 %v568
    %3056 = vmatpush1.msra.mxu0 %v567
    %3057 = vmatprep.subr.mxu0 %v572
    %3058 = vmatpush1.msra.mxu0 %v571
    %3059 = vmatprep.subr.mxu0 %v576
    %3060 = vmatpush1.msra.mxu0 %v575
    %3061 = vmatprep.subr.mxu0 %v580
    %3062 = vmatpush1.msra.mxu0 %v579
    %3063 = vmatprep.subr.mxu0 %v584
    %3064 = vmatpush1.msra.mxu0 %v583
    %3065 = vmatprep.subr.mxu0 %v588
    %3066 = vmatpush1.msra.mxu0 %v587
    %3067 = vmatprep.subr.mxu0 %v592
    %3068 = vmatpush1.msra.mxu0 %v591
    %3069 = vmatprep.subr.mxu0 %v596
    %3070 = vmatpush1.msra.mxu0 %v595
    %3071 = vmatprep.subr.mxu0 %v600
    %3072 = vmatpush1.msra.mxu0 %v599
    %3073 = vmatprep.subr.mxu0 %v604
    %3074 = vmatpush1.msra.mxu0 %v603
    %3075 = vmatprep.subr.mxu0 %v608
    %3076 = vmatpush1.msra.mxu0 %v607
    %3077 = vmatprep.subr.mxu0 %v612
    %3078 = vmatpush1.msra.mxu0 %v611
    %3079 = vmatprep.subr.mxu0 0.0
    %3080 = vmatpush1.msra.mxu0 0.0
    %3081 = vmatprep.subr.mxu0 0.0
    %3082 = vmatpush1.msra.mxu0 0.0
    %3083 = vmatprep.subr.mxu0 0.0
    %3084 = vmatpush1.msra.mxu0 0.0
    %3085 = vmatprep.subr.mxu0 0.0
    %3086 = vmatpush1.msra.mxu0 0.0
    %3087 = vmatprep.subr.mxu0 0.0
    %3088 = vmatpush1.msra.mxu0 0.0
    %3089 = vmatprep.subr.mxu0 0.0
    %3090 = vmatpush1.msra.mxu0 0.0
    %3091 = vmatprep.subr.mxu0 0.0
    %3092 = vmatpush1.msra.mxu0 0.0
    %3093 = vmatprep.subr.mxu0 0.0
    %3094 = vmatpush1.msra.mxu0 0.0
    %3095 = vmatprep.subr.mxu0 0.0
    %3096 = vmatpush1.msra.mxu0 0.0
    %3097 = vmatprep.subr.mxu0 0.0
    %3098 = vmatpush1.msra.mxu0 0.0
    %3099 = vmatprep.subr.mxu0 0.0
    %3100 = vmatpush1.msra.mxu0 0.0
    %3101 = vmatprep.subr.mxu0 0.0
    %3102 = vmatpush1.msra.mxu0 0.0
    %3103 = vmatprep.subr.mxu0 0.0
    %3104 = vmatpush1.msra.mxu0 0.0
    %3105 = vmatprep.subr.mxu0 0.0
    %3106 = vmatpush1.msra.mxu0 0.0
    %3107 = vmatprep.subr.mxu0 0.0
    %3108 = vmatpush1.msra.mxu0 0.0
    %3109 = vmatprep.subr.mxu0 0.0
    %3110 = vmatpush1.msra.mxu0 0.0
    %3111 = vmatprep.mubr.f32.mxu0 0.0
    %3112 = vmatmul.mubr.f32.gmra.mrb[0].mxu0 %v2974
    %v3113 = vpop.f32.mrb[0].mxu0
    %v3114 = vadd.f32 0.0, %v3113
    %v3115 = vpop.f32.mrb[0].mxu0
    %v3116 = vadd.f32 0.0, %v3115
    %3117 = vdwg.mxu0
    %v3122 = vrot.slane %v3043, 6
    %v3123 = vrot.slane %v3045, 6
    %v3124 = vrot.slane %v3114, 6
    %v3125 = vrot.slane %v3116, 6
    %v3130 = vadd.f32 %v398, %v3122
    %v3131 = vadd.f32 %v400, %v3123
    %v3132 = vadd.f32 %v475, %v3124
    %v3133 = vadd.f32 %v477, %v3125
    %v3134 = vxor.u32 %v2969, 2147483648
    %v3135 = vmul.f32 %v3134, 1.442695
    %v3136 = vpow.pop %v3135
    %v3137 = vadd.f32 %v3136, 1.0
    %v3138 = vrcp.pop %v3137
    %v3139 = vmul.f32 1.0, %v3138
    %v3140 = vxor.u32 %v2970, 2147483648
    %v3141 = vmul.f32 %v3140, 1.442695
    %v3142 = vpow.pop %v3141
    %v3143 = vadd.f32 %v3142, 1.0
    %v3144 = vrcp.pop %v3143
    %v3145 = vmul.f32 1.0, %v3144
    %v3146 = vtanh.pop %v2971
    %v3147 = vxor.u32 %v2972, 2147483648
    %v3148 = vmul.f32 %v3147, 1.442695
    %v3149 = vpow.pop %v3148
    %v3150 = vadd.f32 %v3149, 1.0
    %v3151 = vrcp.pop %v3150
    %v3152 = vmul.f32 1.0, %v3151
    %v3154 = vrot.slane %v2782, 6
    %v3156 = vmul.f32 %v3145, %v3154
    %v3157 = vmul.f32 %v3139, %v3146
    %v3158 = vadd.f32 %v3156, %v3157
    %v3159 = vtanh.pop %v3158
    %v3160 = vmul.f32 %v3152, %v3159
    %v3161 = vxor.u32 %v3130, 2147483648
    %v3162 = vmul.f32 %v3161, 1.442695
    %v3163 = vpow.pop %v3162
    %v3164 = vadd.f32 %v3163, 1.0
    %v3165 = vrcp.pop %v3164
    %v3166 = vmul.f32 1.0, %v3165
    %v3167 = vxor.u32 %v3131, 2147483648
    %v3168 = vmul.f32 %v3167, 1.442695
    %v3169 = vpow.pop %v3168
    %v3170 = vadd.f32 %v3169, 1.0
    %v3171 = vrcp.pop %v3170
    %v3172 = vmul.f32 1.0, %v3171
    %v3173 = vtanh.pop %v3132
    %v3174 = vxor.u32 %v3133, 2147483648
    %v3175 = vmul.f32 %v3174, 1.442695
    %v3176 = vpow.pop %v3175
    %v3177 = vadd.f32 %v3176, 1.0
    %v3178 = vrcp.pop %v3177
    %v3179 = vmul.f32 1.0, %v3178
    %v3181 = vrot.slane %v2809, 2
    %v3183 = vmul.f32 %v3172, %v3181
    %v3184 = vmul.f32 %v3166, %v3173
    %v3185 = vadd.f32 %v3183, %v3184
    %v3186 = vtanh.pop %v3185
    %v3187 = vmul.f32 %v3179, %v3186
    %v3189 = vrot.slane %v3160, 4
    %3191 = vmatprep.subr.mxu0 %v486
    %3192 = vmatpush1.msra.mxu0 %v485
    %3193 = vmatprep.subr.mxu0 %v490
    %3194 = vmatpush1.msra.mxu0 %v489
    %3195 = vmatprep.subr.mxu0 %v494
    %3196 = vmatpush1.msra.mxu0 %v493
    %3197 = vmatprep.subr.mxu0 %v498
    %3198 = vmatpush1.msra.mxu0 %v497
    %3199 = vmatprep.subr.mxu0 %v502
    %3200 = vmatpush1.msra.mxu0 %v501
    %3201 = vmatprep.subr.mxu0 %v506
    %3202 = vmatpush1.msra.mxu0 %v505
    %3203 = vmatprep.subr.mxu0 %v510
    %3204 = vmatpush1.msra.mxu0 %v509
    %3205 = vmatprep.subr.mxu0 %v514
    %3206 = vmatpush1.msra.mxu0 %v513
    %3207 = vmatprep.subr.mxu0 %v518
    %3208 = vmatpush1.msra.mxu0 %v517
    %3209 = vmatprep.subr.mxu0 %v522
    %3210 = vmatpush1.msra.mxu0 %v521
    %3211 = vmatprep.subr.mxu0 %v526
    %3212 = vmatpush1.msra.mxu0 %v525
    %3213 = vmatprep.subr.mxu0 %v530
    %3214 = vmatpush1.msra.mxu0 %v529
    %3215 = vmatprep.subr.mxu0 %v534
    %3216 = vmatpush1.msra.mxu0 %v533
    %3217 = vmatprep.subr.mxu0 %v538
    %3218 = vmatpush1.msra.mxu0 %v537
    %3219 = vmatprep.subr.mxu0 %v542
    %3220 = vmatpush1.msra.mxu0 %v541
    %3221 = vmatprep.subr.mxu0 %v546
    %3222 = vmatpush1.msra.mxu0 %v545
    %3223 = vmatprep.subr.mxu0 0.0
    %3224 = vmatpush1.msra.mxu0 0.0
    %3225 = vmatprep.subr.mxu0 0.0
    %3226 = vmatpush1.msra.mxu0 0.0
    %3227 = vmatprep.subr.mxu0 0.0
    %3228 = vmatpush1.msra.mxu0 0.0
    %3229 = vmatprep.subr.mxu0 0.0
    %3230 = vmatpush1.msra.mxu0 0.0
    %3231 = vmatprep.subr.mxu0 0.0
    %3232 = vmatpush1.msra.mxu0 0.0
    %3233 = vmatprep.subr.mxu0 0.0
    %3234 = vmatpush1.msra.mxu0 0.0
    %3235 = vmatprep.subr.mxu0 0.0
    %3236 = vmatpush1.msra.mxu0 0.0
    %3237 = vmatprep.subr.mxu0 0.0
    %3238 = vmatpush1.msra.mxu0 0.0
    %3239 = vmatprep.subr.mxu0 0.0
    %3240 = vmatpush1.msra.mxu0 0.0
    %3241 = vmatprep.subr.mxu0 0.0
    %3242 = vmatpush1.msra.mxu0 0.0
    %3243 = vmatprep.subr.mxu0 0.0
    %3244 = vmatpush1.msra.mxu0 0.0
    %3245 = vmatprep.subr.mxu0 0.0
    %3246 = vmatpush1.msra.mxu0 0.0
    %3247 = vmatprep.subr.mxu0 0.0
    %3248 = vmatpush1.msra.mxu0 0.0
    %3249 = vmatprep.subr.mxu0 0.0
    %3250 = vmatpush1.msra.mxu0 0.0
    %3251 = vmatprep.subr.mxu0 0.0
    %3252 = vmatpush1.msra.mxu0 0.0
    %3253 = vmatprep.subr.mxu0 0.0
    %3254 = vmatpush1.msra.mxu0 0.0
    %3255 = vmatprep.mubr.f32.mxu0 0.0
    %3256 = vmatmul.mubr.f32.gmra.mrb[0].mxu0 %v3189
    %v3257 = vpop.f32.mrb[0].mxu0
    %v3258 = vadd.f32 0.0, %v3257
    %v3259 = vpop.f32.mrb[0].mxu0
    %v3260 = vadd.f32 0.0, %v3259
    %3261 = vdwg.mxu0
    %3262 = vmatprep.subr.mxu0 %v488
    %3263 = vmatpush1.msra.mxu0 %v487
    %3264 = vmatprep.subr.mxu0 %v492
    %3265 = vmatpush1.msra.mxu0 %v491
    %3266 = vmatprep.subr.mxu0 %v496
    %3267 = vmatpush1.msra.mxu0 %v495
    %3268 = vmatprep.subr.mxu0 %v500
    %3269 = vmatpush1.msra.mxu0 %v499
    %3270 = vmatprep.subr.mxu0 %v504
    %3271 = vmatpush1.msra.mxu0 %v503
    %3272 = vmatprep.subr.mxu0 %v508
    %3273 = vmatpush1.msra.mxu0 %v507
    %3274 = vmatprep.subr.mxu0 %v512
    %3275 = vmatpush1.msra.mxu0 %v511
    %3276 = vmatprep.subr.mxu0 %v516
    %3277 = vmatpush1.msra.mxu0 %v515
    %3278 = vmatprep.subr.mxu0 %v520
    %3279 = vmatpush1.msra.mxu0 %v519
    %3280 = vmatprep.subr.mxu0 %v524
    %3281 = vmatpush1.msra.mxu0 %v523
    %3282 = vmatprep.subr.mxu0 %v528
    %3283 = vmatpush1.msra.mxu0 %v527
    %3284 = vmatprep.subr.mxu0 %v532
    %3285 = vmatpush1.msra.mxu0 %v531
    %3286 = vmatprep.subr.mxu0 %v536
    %3287 = vmatpush1.msra.mxu0 %v535
    %3288 = vmatprep.subr.mxu0 %v540
    %3289 = vmatpush1.msra.mxu0 %v539
    %3290 = vmatprep.subr.mxu0 %v544
    %3291 = vmatpush1.msra.mxu0 %v543
    %3292 = vmatprep.subr.mxu0 %v548
    %3293 = vmatpush1.msra.mxu0 %v547
    %3294 = vmatprep.subr.mxu0 0.0
    %3295 = vmatpush1.msra.mxu0 0.0
    %3296 = vmatprep.subr.mxu0 0.0
    %3297 = vmatpush1.msra.mxu0 0.0
    %3298 = vmatprep.subr.mxu0 0.0
    %3299 = vmatpush1.msra.mxu0 0.0
    %3300 = vmatprep.subr.mxu0 0.0
    %3301 = vmatpush1.msra.mxu0 0.0
    %3302 = vmatprep.subr.mxu0 0.0
    %3303 = vmatpush1.msra.mxu0 0.0
    %3304 = vmatprep.subr.mxu0 0.0
    %3305 = vmatpush1.msra.mxu0 0.0
    %3306 = vmatprep.subr.mxu0 0.0
    %3307 = vmatpush1.msra.mxu0 0.0
    %3308 = vmatprep.subr.mxu0 0.0
    %3309 = vmatpush1.msra.mxu0 0.0
    %3310 = vmatprep.subr.mxu0 0.0
    %3311 = vmatpush1.msra.mxu0 0.0
    %3312 = vmatprep.subr.mxu0 0.0
    %3313 = vmatpush1.msra.mxu0 0.0
    %3314 = vmatprep.subr.mxu0 0.0
    %3315 = vmatpush1.msra.mxu0 0.0
    %3316 = vmatprep.subr.mxu0 0.0
    %3317 = vmatpush1.msra.mxu0 0.0
    %3318 = vmatprep.subr.mxu0 0.0
    %3319 = vmatpush1.msra.mxu0 0.0
    %3320 = vmatprep.subr.mxu0 0.0
    %3321 = vmatpush1.msra.mxu0 0.0
    %3322 = vmatprep.subr.mxu0 0.0
    %3323 = vmatpush1.msra.mxu0 0.0
    %3324 = vmatprep.subr.mxu0 0.0
    %3325 = vmatpush1.msra.mxu0 0.0
    %3326 = vmatprep.mubr.f32.mxu0 0.0
    %3327 = vmatmul.mubr.f32.gmra.mrb[0].mxu0 %v3189
    %v3328 = vpop.f32.mrb[0].mxu0
    %v3329 = vadd.f32 0.0, %v3328
    %v3330 = vpop.f32.mrb[0].mxu0
    %v3331 = vadd.f32 0.0, %v3330
    %3332 = vdwg.mxu0
    %v3337 = vrot.slane %v3258, 2
    %v3338 = vrot.slane %v3260, 2
    %v3339 = vrot.slane %v3329, 2
    %v3340 = vrot.slane %v3331, 2
    %v3345 = vadd.f32 %v250, %v3337
    %v3346 = vadd.f32 %v252, %v3338
    %v3347 = vadd.f32 %v327, %v3339
    %v3348 = vadd.f32 %v329, %v3340
    %v3350 = vrot.slane %v3187, 2
    %3352 = vmatprep.subr.mxu0 %v550
    %3353 = vmatpush1.msra.mxu0 %v549
    %3354 = vmatprep.subr.mxu0 %v554
    %3355 = vmatpush1.msra.mxu0 %v553
    %3356 = vmatprep.subr.mxu0 %v558
    %3357 = vmatpush1.msra.mxu0 %v557
    %3358 = vmatprep.subr.mxu0 %v562
    %3359 = vmatpush1.msra.mxu0 %v561
    %3360 = vmatprep.subr.mxu0 %v566
    %3361 = vmatpush1.msra.mxu0 %v565
    %3362 = vmatprep.subr.mxu0 %v570
    %3363 = vmatpush1.msra.mxu0 %v569
    %3364 = vmatprep.subr.mxu0 %v574
    %3365 = vmatpush1.msra.mxu0 %v573
    %3366 = vmatprep.subr.mxu0 %v578
    %3367 = vmatpush1.msra.mxu0 %v577
    %3368 = vmatprep.subr.mxu0 %v582
    %3369 = vmatpush1.msra.mxu0 %v581
    %3370 = vmatprep.subr.mxu0 %v586
    %3371 = vmatpush1.msra.mxu0 %v585
    %3372 = vmatprep.subr.mxu0 %v590
    %3373 = vmatpush1.msra.mxu0 %v589
    %3374 = vmatprep.subr.mxu0 %v594
    %3375 = vmatpush1.msra.mxu0 %v593
    %3376 = vmatprep.subr.mxu0 %v598
    %3377 = vmatpush1.msra.mxu0 %v597
    %3378 = vmatprep.subr.mxu0 %v602
    %3379 = vmatpush1.msra.mxu0 %v601
    %3380 = vmatprep.subr.mxu0 %v606
    %3381 = vmatpush1.msra.mxu0 %v605
    %3382 = vmatprep.subr.mxu0 %v610
    %3383 = vmatpush1.msra.mxu0 %v609
    %3384 = vmatprep.subr.mxu0 0.0
    %3385 = vmatpush1.msra.mxu0 0.0
    %3386 = vmatprep.subr.mxu0 0.0
    %3387 = vmatpush1.msra.mxu0 0.0
    %3388 = vmatprep.subr.mxu0 0.0
    %3389 = vmatpush1.msra.mxu0 0.0
    %3390 = vmatprep.subr.mxu0 0.0
    %3391 = vmatpush1.msra.mxu0 0.0
    %3392 = vmatprep.subr.mxu0 0.0
    %3393 = vmatpush1.msra.mxu0 0.0
    %3394 = vmatprep.subr.mxu0 0.0
    %3395 = vmatpush1.msra.mxu0 0.0
    %3396 = vmatprep.subr.mxu0 0.0
    %3397 = vmatpush1.msra.mxu0 0.0
    %3398 = vmatprep.subr.mxu0 0.0
    %3399 = vmatpush1.msra.mxu0 0.0
    %3400 = vmatprep.subr.mxu0 0.0
    %3401 = vmatpush1.msra.mxu0 0.0
    %3402 = vmatprep.subr.mxu0 0.0
    %3403 = vmatpush1.msra.mxu0 0.0
    %3404 = vmatprep.subr.mxu0 0.0
    %3405 = vmatpush1.msra.mxu0 0.0
    %3406 = vmatprep.subr.mxu0 0.0
    %3407 = vmatpush1.msra.mxu0 0.0
    %3408 = vmatprep.subr.mxu0 0.0
    %3409 = vmatpush1.msra.mxu0 0.0
    %3410 = vmatprep.subr.mxu0 0.0
    %3411 = vmatpush1.msra.mxu0 0.0
    %3412 = vmatprep.subr.mxu0 0.0
    %3413 = vmatpush1.msra.mxu0 0.0
    %3414 = vmatprep.subr.mxu0 0.0
    %3415 = vmatpush1.msra.mxu0 0.0
    %3416 = vmatprep.mubr.f32.mxu0 0.0
    %3417 = vmatmul.mubr.f32.gmra.mrb[0].mxu0 %v3350
    %v3418 = vpop.f32.mrb[0].mxu0
    %v3419 = vadd.f32 0.0, %v3418
    %v3420 = vpop.f32.mrb[0].mxu0
    %v3421 = vadd.f32 0.0, %v3420
    %3422 = vdwg.mxu0
    %3423 = vmatprep.subr.mxu0 %v552
    %3424 = vmatpush1.msra.mxu0 %v551
    %3425 = vmatprep.subr.mxu0 %v556
    %3426 = vmatpush1.msra.mxu0 %v555
    %3427 = vmatprep.subr.mxu0 %v560
    %3428 = vmatpush1.msra.mxu0 %v559
    %3429 = vmatprep.subr.mxu0 %v564
    %3430 = vmatpush1.msra.mxu0 %v563
    %3431 = vmatprep.subr.mxu0 %v568
    %3432 = vmatpush1.msra.mxu0 %v567
    %3433 = vmatprep.subr.mxu0 %v572
    %3434 = vmatpush1.msra.mxu0 %v571
    %3435 = vmatprep.subr.mxu0 %v576
    %3436 = vmatpush1.msra.mxu0 %v575
    %3437 = vmatprep.subr.mxu0 %v580
    %3438 = vmatpush1.msra.mxu0 %v579
    %3439 = vmatprep.subr.mxu0 %v584
    %3440 = vmatpush1.msra.mxu0 %v583
    %3441 = vmatprep.subr.mxu0 %v588
    %3442 = vmatpush1.msra.mxu0 %v587
    %3443 = vmatprep.subr.mxu0 %v592
    %3444 = vmatpush1.msra.mxu0 %v591
    %3445 = vmatprep.subr.mxu0 %v596
    %3446 = vmatpush1.msra.mxu0 %v595
    %3447 = vmatprep.subr.mxu0 %v600
    %3448 = vmatpush1.msra.mxu0 %v599
    %3449 = vmatprep.subr.mxu0 %v604
    %3450 = vmatpush1.msra.mxu0 %v603
    %3451 = vmatprep.subr.mxu0 %v608
    %3452 = vmatpush1.msra.mxu0 %v607
    %3453 = vmatprep.subr.mxu0 %v612
    %3454 = vmatpush1.msra.mxu0 %v611
    %3455 = vmatprep.subr.mxu0 0.0
    %3456 = vmatpush1.msra.mxu0 0.0
    %3457 = vmatprep.subr.mxu0 0.0
    %3458 = vmatpush1.msra.mxu0 0.0
    %3459 = vmatprep.subr.mxu0 0.0
    %3460 = vmatpush1.msra.mxu0 0.0
    %3461 = vmatprep.subr.mxu0 0.0
    %3462 = vmatpush1.msra.mxu0 0.0
    %3463 = vmatprep.subr.mxu0 0.0
    %3464 = vmatpush1.msra.mxu0 0.0
    %3465 = vmatprep.subr.mxu0 0.0
    %3466 = vmatpush1.msra.mxu0 0.0
    %3467 = vmatprep.subr.mxu0 0.0
    %3468 = vmatpush1.msra.mxu0 0.0
    %3469 = vmatprep.subr.mxu0 0.0
    %3470 = vmatpush1.msra.mxu0 0.0
    %3471 = vmatprep.subr.mxu0 0.0
    %3472 = vmatpush1.msra.mxu0 0.0
    %3473 = vmatprep.subr.mxu0 0.0
    %3474 = vmatpush1.msra.mxu0 0.0
    %3475 = vmatprep.subr.mxu0 0.0
    %3476 = vmatpush1.msra.mxu0 0.0
    %3477 = vmatprep.subr.mxu0 0.0
    %3478 = vmatpush1.msra.mxu0 0.0
    %3479 = vmatprep.subr.mxu0 0.0
    %3480 = vmatpush1.msra.mxu0 0.0
    %3481 = vmatprep.subr.mxu0 0.0
    %3482 = vmatpush1.msra.mxu0 0.0
    %3483 = vmatprep.subr.mxu0 0.0
    %3484 = vmatpush1.msra.mxu0 0.0
    %3485 = vmatprep.subr.mxu0 0.0
    %3486 = vmatpush1.msra.mxu0 0.0
    %3487 = vmatprep.mubr.f32.mxu0 0.0
    %3488 = vmatmul.mubr.f32.gmra.mrb[0].mxu0 %v3350
    %v3489 = vpop.f32.mrb[0].mxu0
    %v3490 = vadd.f32 0.0, %v3489
    %v3491 = vpop.f32.mrb[0].mxu0
    %v3492 = vadd.f32 0.0, %v3491
    %3493 = vdwg.mxu0
    %v3494 = vadd.f32 %v398, %v3419
    %v3495 = vadd.f32 %v400, %v3421
    %v3496 = vadd.f32 %v475, %v3490
    %v3497 = vadd.f32 %v477, %v3492
    %v3498 = vxor.u32 %v3345, 2147483648
    %v3499 = vmul.f32 %v3498, 1.442695
    %v3500 = vpow.pop %v3499
    %v3501 = vadd.f32 %v3500, 1.0
    %v3502 = vrcp.pop %v3501
    %v3503 = vmul.f32 1.0, %v3502
    %v3504 = vxor.u32 %v3346, 2147483648
    %v3505 = vmul.f32 %v3504, 1.442695
    %v3506 = vpow.pop %v3505
    %v3507 = vadd.f32 %v3506, 1.0
    %v3508 = vrcp.pop %v3507
    %v3509 = vmul.f32 1.0, %v3508
    %v3510 = vtanh.pop %v3347
    %v3511 = vxor.u32 %v3348, 2147483648
    %v3512 = vmul.f32 %v3511, 1.442695
    %v3513 = vpow.pop %v3512
    %v3514 = vadd.f32 %v3513, 1.0
    %v3515 = vrcp.pop %v3514
    %v3516 = vmul.f32 1.0, %v3515
    %v3518 = vrot.slane %v3158, 6
    %v3520 = vmul.f32 %v3509, %v3518
    %v3521 = vmul.f32 %v3503, %v3510
    %v3522 = vadd.f32 %v3520, %v3521
    %v3523 = vtanh.pop %v3522
    %v3524 = vmul.f32 %v3516, %v3523
    %v3525 = vxor.u32 %v3494, 2147483648
    %v3526 = vmul.f32 %v3525, 1.442695
    %v3527 = vpow.pop %v3526
    %v3528 = vadd.f32 %v3527, 1.0
    %v3529 = vrcp.pop %v3528
    %v3530 = vmul.f32 1.0, %v3529
    %v3531 = vxor.u32 %v3495, 2147483648
    %v3532 = vmul.f32 %v3531, 1.442695
    %v3533 = vpow.pop %v3532
    %v3534 = vadd.f32 %v3533, 1.0
    %v3535 = vrcp.pop %v3534
    %v3536 = vmul.f32 1.0, %v3535
    %v3537 = vtanh.pop %v3496
    %v3538 = vxor.u32 %v3497, 2147483648
    %v3539 = vmul.f32 %v3538, 1.442695
    %v3540 = vpow.pop %v3539
    %v3541 = vadd.f32 %v3540, 1.0
    %v3542 = vrcp.pop %v3541
    %v3543 = vmul.f32 1.0, %v3542
    %v3545 = vrot.slane %v3185, 2
    %v3547 = vmul.f32 %v3536, %v3545
    %v3548 = vmul.f32 %v3530, %v3537
    %v3549 = vadd.f32 %v3547, %v3548
    %v3550 = vtanh.pop %v3549
    %v3551 = vmul.f32 %v3543, %v3550
    %v3553 = vrot.slane %v3551, 2
    %v3555 = vcombine.high %v3524, %v3553
    %v3557 = vunpack.c.l.s4 1983009808
    %v3558 = vunpack.c.0.s8 %v3557
    %v3559 = vlaneseq
    %v3560 = vshrl.u32 %v3559, 7
    %v3561 = vsub.s32 %v3558, %v3560
    %v3562 = vrot.slane %v3555, %v3561
    %v3563 = vcombine.high %v3562, %v3562
    %3565 = vst [vmem:[#allocation8] sm:$0xf] %v3563
    // Predicated region
    $region34: #{lstm_block_forward.1} parent=1 // pred_check
      _
    $region35: #{lstm_block_forward.1} parent=1 // pred_check_branch
      %3567 = sbr.rel (0) target = $region37
    $region36: #{lstm_block_forward.1} parent=1 // pred_region
      %s3569 = ssub.s32 64, 64
      %3570 = vsyncadd [#allocation4], %s3569
      %s3572 = sshll.u32 [#allocation8], 4
      %s3573 = int_to_ptr.vmem [resolvable:$true] %s3572
      %3575 = dma.vmem_to_hbm [thread:$0]  %s3573, 64, %s5, [#allocation4]
    $region37: #{lstm_block_forward.1} parent=1 // pred_fallthru
      _
    // Predicated region
    $region38: #{lstm_block_forward.1} parent=1 // pred_check
      _
    $region39: #{lstm_block_forward.1} parent=1 // pred_check_branch
      %3577 = sbr.rel (0) target = $region41
    $region40: #{lstm_block_forward.1} parent=1 // pred_region
      %3578 = dma.done [#allocation4], 64
    $region41: #{lstm_block_forward.1} parent=1 // pred_fallthru
      _
    %3579 = vsyncpa [#allocation3], 1
    %3580 = vsyncpa [#allocation6], 1
    %3581 = vsyncpa [#allocation4], 1

</llo_original>
